<compile_context>
chip_gen: v5e
topology: v5e:2x2
jax: 0.10.0
libtpu: 0.0.40
codegen_flags: <defaults>
</compile_context>

<pallas_src>
import functools

import jax
import jax.numpy as jnp
from jax import lax
from jax.experimental import pallas as pl
from jax.experimental.pallas import tpu as pltpu


# ---------------------------------------------------------------------------
# Fused Bottleneck kernel: one grid step == one image (M = H*W rows in VMEM).
# ---------------------------------------------------------------------------
def _bottleneck_kernel(x_ref, w1_ref, w2_ref, w3_ref,
                       s1_ref, b1_ref, s2_ref, b2_ref, s3_ref, b3_ref,
                       o_ref, im_ref, *, H, W):
    M = H * W
    p = w1_ref.shape[1]          # planes
    pad = W                      # one image-row of halo above / below

    # ---- conv1 (1x1) + bn1 + relu  (bf16 MXU operands, f32 accumulate) -----
    y1 = jnp.dot(x_ref[0], w1_ref[...], preferred_element_type=jnp.float32)
    y1 = jnp.maximum(y1 * s1_ref[...] + b1_ref[...], 0.0).astype(jnp.bfloat16)

    # ---- stage y1 into the kw-interleaved buffer ----------------------------
    # Halo rows (input row -1 and row H, plus the two never-written stub rows)
    # are re-zeroed every step; everything else is overwritten below.  This
    # stays correct even if the "parallel" batch axis is split across cores.
    zero_halo = jnp.zeros((W + 1, 3 * p), jnp.bfloat16)
    im_ref[0:W + 1, :] = zero_halo
    im_ref[pad + M - 1:pad + M + W, :] = zero_halo

    col = lax.broadcasted_iota(jnp.int32, (M, 1), 0) % W     # computed once
    keep_r = col <= W - 2   # kw=0 group: pixel at col W-1 is nobody's left neighbour
    keep_l = col >= 1       # kw=2 group: pixel at col 0   is nobody's right neighbour
    zero = jnp.zeros_like(y1)
    im_ref[pad + 1:pad + 1 + M, 0:p] = jnp.where(keep_r, y1, zero)
    im_ref[pad:pad + M, p:2 * p] = y1
    im_ref[pad - 1:pad - 1 + M, 2 * p:3 * p] = jnp.where(keep_l, y1, zero)

    # ---- conv2 (3x3, stride 1, pad 1): 3 matmuls with K = 3*planes ----------
    acc = jnp.dot(im_ref[0:M, :], w2_ref[0], preferred_element_type=jnp.float32)
    acc = acc + jnp.dot(im_ref[W:W + M, :], w2_ref[1],
                        preferred_element_type=jnp.float32)
    acc = acc + jnp.dot(im_ref[2 * W:2 * W + M, :], w2_ref[2],
                        preferred_element_type=jnp.float32)
    y2 = jnp.maximum(acc * s2_ref[...] + b2_ref[...], 0.0).astype(jnp.bfloat16)

    # ---- conv3 (1x1) + bn3 + residual + relu --------------------------------
    y3 = jnp.dot(y2, w3_ref[...], preferred_element_type=jnp.float32)
    # Residual is re-read here (short live range) instead of held across matmuls.
    y3 = y3 * s3_ref[...] + b3_ref[...] + x_ref[0].astype(jnp.float32)
    o_ref[0] = jnp.maximum(y3, 0.0).astype(o_ref.dtype)


# ---------------------------------------------------------------------------
# Host-side glue: BN folding, weight layout, pallas_call setup.
# ---------------------------------------------------------------------------
def _fold_bn(gamma, beta, mean, var, eps):
    scale = gamma / jnp.sqrt(var + eps)
    shift = beta - mean * scale
    return (scale.reshape(1, -1).astype(jnp.float32),
            shift.reshape(1, -1).astype(jnp.float32))


def _vmem_capacity_bytes():
    try:
        return int(getattr(pltpu.get_tpu_info(), "vmem_capacity_bytes", 64 << 20))
    except Exception:
        return 64 << 20  # conservative fallback: v7x per-TensorCore VMEM


def bottleneck_forward_nhwc(x_nhwc, params, stride=1, eps=1e-5,
                            out_dtype=jnp.bfloat16):
    """Fused Pallas Bottleneck.forward; NHWC in / NHWC out (no layout transposes)."""
    N, H, W, Cin = x_nhwc.shape
    w1, w2, w3 = params["conv1_w"], params["conv2_w"], params["conv3_w"]
    planes = w1.shape[0]
    Cout = w3.shape[0]
    M = H * W
    bpe = 2
    out_bpe = jnp.dtype(out_dtype).itemsize

    assert stride == 1, "identity residual (downsample=None) requires stride == 1"
    assert Cin == Cout, "identity residual requires inplanes == planes * expansion"
    # TODO(synk): downsample branch (conv+bn shortcut) and stride>1 not implemented.

    s1, b1 = _fold_bn(params["bn1_g"], params["bn1_b"], params["bn1_m"], params["bn1_v"], eps)
    s2, b2 = _fold_bn(params["bn2_g"], params["bn2_b"], params["bn2_m"], params["bn2_v"], eps)
    s3, b3 = _fold_bn(params["bn3_g"], params["bn3_b"], params["bn3_m"], params["bn3_v"], eps)

    # Weights as bf16 matmul operands.  conv2 is (kh, kw*planes, planes) so each
    # kh slice is one (3*planes, planes) RHS matching the interleaved buffer.
    w1m = jnp.transpose(w1.reshape(planes, Cin), (1, 0)).astype(jnp.bfloat16)
    w2m = jnp.transpose(w2, (2, 3, 1, 0)).reshape(3, 3 * planes, planes).astype(jnp.bfloat16)
    w3m = jnp.transpose(w3.reshape(Cout, planes), (1, 0)).astype(jnp.bfloat16)

    x_flat = x_nhwc.reshape(N, M, Cin).astype(jnp.bfloat16)

    kernel = functools.partial(_bottleneck_kernel, H=H, W=W)

    # ---- VMEM budget (includes in-kernel f32 temporaries), per-chip cap -----
    weight_bytes = (Cin * planes + 9 * planes * planes + planes * Cout) * bpe
    bn_bytes = (4 * planes + 2 * Cout) * 4
    scratch_bytes = (M + 2 * W) * 3 * planes * bpe
    f32_tmp_bytes = M * (2 * planes + Cin + Cout) * 4 + 3 * M * planes * bpe
    vmem_need = (2 * M * Cin * bpe                 # x, double-buffered
                 + 2 * M * Cout * out_bpe          # out, double-buffered
                 # TODO(synk): single-buffer the constant weight/BN blocks
                 # (pl.Buffered(1)) to halve their residency on v7x.
                 + 2 * (weight_bytes + bn_bytes)
                 + scratch_bytes + f32_tmp_bytes)
    vmem_cap = (_vmem_capacity_bytes() * 3) // 4
    assert vmem_need < vmem_cap, (
        f"per-image tile needs ~{vmem_need >> 20} MiB VMEM; add H-tiling with halo")
    # TODO(synk): H-tile grid axis (1-row halo, recompute conv1 on halo rows) so
    # production 56x56x256-class stages fit v7x's 64 MiB VMEM.
    vmem_limit = int(min(max(2 * vmem_need, 16 << 20), vmem_cap))

    flops = 2 * N * M * (Cin * planes + 9 * planes * planes + planes * Cout)
    bytes_accessed = int(
        N * M * Cin * bpe + N * M * Cout * out_bpe
        + (w1m.size + w2m.size + w3m.size) * bpe                  # DMA'd once
        + (s1.size + b1.size + s2.size + b2.size + s3.size + b3.size) * 4)

    out_flat = pl.pallas_call(
        kernel,
        out_shape=jax.ShapeDtypeStruct((N, M, Cout), out_dtype),
        grid=(N,),
        in_specs=[
            pl.BlockSpec((1, M, Cin), lambda n: (n, 0, 0)),            # x (per-image)
            pl.BlockSpec((Cin, planes), lambda n: (0, 0)),             # w1
            pl.BlockSpec((3, 3 * planes, planes), lambda n: (0, 0, 0)),  # w2 (per-kh)
            pl.BlockSpec((planes, Cout), lambda n: (0, 0)),            # w3
            pl.BlockSpec((1, planes), lambda n: (0, 0)),               # bn1 scale
            pl.BlockSpec((1, planes), lambda n: (0, 0)),               # bn1 shift
            pl.BlockSpec((1, planes), lambda n: (0, 0)),               # bn2 scale
            pl.BlockSpec((1, planes), lambda n: (0, 0)),               # bn2 shift
            pl.BlockSpec((1, Cout), lambda n: (0, 0)),                 # bn3 scale
            pl.BlockSpec((1, Cout), lambda n: (0, 0)),                 # bn3 shift
        ],
        out_specs=pl.BlockSpec((1, M, Cout), lambda n: (n, 0, 0)),
        scratch_shapes=[pltpu.VMEM((M + 2 * W, 3 * planes), jnp.bfloat16)],
        compiler_params=pltpu.CompilerParams(
            dimension_semantics=("parallel",),
            vmem_limit_bytes=vmem_limit),
        cost_estimate=pl.CostEstimate(flops=flops, transcendentals=0,
                                      bytes_accessed=bytes_accessed),
    )(x_flat, w1m, w2m, w3m, s1, b1, s2, b2, s3, b3)

    return out_flat.reshape(N, H, W, Cout)


def bottleneck_forward(x_nchw, params, stride=1, eps=1e-5, out_dtype=jnp.bfloat16):
    """NCHW-compat wrapper matching the PyTorch module; prefer the NHWC entry
    point end-to-end so the HBM-bound layout transposes disappear."""
    x_nhwc = jnp.transpose(x_nchw, (0, 2, 3, 1))
    out = bottleneck_forward_nhwc(x_nhwc, params, stride=stride, eps=eps,
                                  out_dtype=out_dtype)
    return jnp.transpose(out, (0, 3, 1, 2))


# ---------------------------------------------------------------------------
# Pure-JAX reference (lax convs).  Conv operands AND the inter-stage
# activations are rounded through bf16 to mirror the kernel's MXU dtype.
# ---------------------------------------------------------------------------
def bottleneck_reference(x_nchw, params, stride=1, eps=1e-5):
    def conv(x, w, s, pad):
        return lax.conv_general_dilated(
            x, w, window_strides=(s, s), padding=((pad, pad), (pad, pad)),
            dimension_numbers=("NCHW", "OIHW", "NCHW"),
            precision=lax.Precision.HIGHEST)

    def bn(x, g, b, m, v):
        return (x - m[None, :, None, None]) / jnp.sqrt(v[None, :, None, None] + eps) \
            * g[None, :, None, None] + b[None, :, None, None]

    r = lambda a: a.astype(jnp.bfloat16).astype(jnp.float32)

    x = r(x_nchw)
    out = jax.nn.relu(bn(conv(x, r(params["conv1_w"]), 1, 0),
                         params["bn1_g"], params["bn1_b"],
                         params["bn1_m"], params["bn1_v"]))
    out = r(out)
    out = jax.nn.relu(bn(conv(out, r(params["conv2_w"]), stride, 1),
                         params["bn2_g"], params["bn2_b"],
                         params["bn2_m"], params["bn2_v"]))
    out = r(out)
    out = bn(conv(out, r(params["conv3_w"]), 1, 0),
             params["bn3_g"], params["bn3_b"],
             params["bn3_m"], params["bn3_v"])
    out = out + x
    return jax.nn.relu(out)


# ---------------------------------------------------------------------------
def init_params(key, inplanes, planes):
    expansion = 4
    keys = jax.random.split(key, 16)
    k = iter(keys)

    def norm(shape, kk):
        return jax.random.normal(kk, shape, jnp.float32) * 0.1

    def pos(shape, kk):
        return jax.random.uniform(kk, shape, jnp.float32, 0.5, 1.5)

    return {
        "conv1_w": norm((planes, inplanes, 1, 1), next(k)),
        "bn1_g": pos((planes,), next(k)),
        "bn1_b": norm((planes,), next(k)),
        "bn1_m": norm((planes,), next(k)),
        "bn1_v": pos((planes,), next(k)),
        "conv2_w": norm((planes, planes, 3, 3), next(k)),
        "bn2_g": pos((planes,), next(k)),
        "bn2_b": norm((planes,), next(k)),
        "bn2_m": norm((planes,), next(k)),
        "bn2_v": pos((planes,), next(k)),
        "conv3_w": norm((planes * expansion, planes, 1, 1), next(k)),
        "bn3_g": pos((planes * expansion,), next(k)),
        "bn3_b": norm((planes * expansion,), next(k)),
        "bn3_m": norm((planes * expansion,), next(k)),
        "bn3_v": pos((planes * expansion,), next(k)),
    }


if __name__ == "__main__":
    key = jax.random.PRNGKey(0)
    k_x, k_p = jax.random.split(key)

    # Small demo, but lane/row-dense per the review: planes = 128 keeps the
    # kw-groups and all matmul operands 128-lane aligned, Cin = Cout = 512
    # keeps the identity residual valid, and M = H*W = 256 fills MXU rows.
    planes = 128
    inplanes = planes * 4
    N, H, W = 2, 16, 16
    stride = 1

    x_nhwc = jax.random.normal(k_x, (N, H, W, inplanes), jnp.float32)
    params = init_params(k_p, inplanes, planes)

    out = jax.block_until_ready(
        bottleneck_forward_nhwc(x_nhwc, params, stride=stride))

    x_nchw = jnp.transpose(x_nhwc, (0, 3, 1, 2))
    ref = jnp.transpose(bottleneck_reference(x_nchw, params, stride=stride),
                        (0, 2, 3, 1))
    ref = jax.block_until_ready(ref)

    assert out.shape == (N, H, W, planes * 4), out.shape
    out_f32 = out.astype(jnp.float32)
    max_err = float(jnp.max(jnp.abs(out_f32 - ref)))
    assert jnp.allclose(out_f32, ref, atol=5e-2, rtol=5e-2), max_err

    print("KERNEL_OK")
</pallas_src>

<mosaic_0001>
module attributes {stable_mosaic.version = 11 : i64} {
  func.func @_bottleneck_kernel(%arg0: i32, %arg1: memref<1x256x512xbf16, #tpu.memory_space<vmem>>, %arg2: memref<512x128xbf16, #tpu.memory_space<vmem>>, %arg3: memref<3x384x128xbf16, #tpu.memory_space<vmem>>, %arg4: memref<128x512xbf16, #tpu.memory_space<vmem>>, %arg5: memref<1x128xf32, #tpu.memory_space<vmem>>, %arg6: memref<1x128xf32, #tpu.memory_space<vmem>>, %arg7: memref<1x128xf32, #tpu.memory_space<vmem>>, %arg8: memref<1x128xf32, #tpu.memory_space<vmem>>, %arg9: memref<1x512xf32, #tpu.memory_space<vmem>>, %arg10: memref<1x512xf32, #tpu.memory_space<vmem>>, %arg11: memref<1x256x512xbf16, #tpu.memory_space<vmem>>, %arg12: memref<288x384xbf16, #tpu.memory_space<vmem>>) attributes {dimension_semantics = [#tpu.dimension_semantics<parallel>], iteration_bounds = array<i64: 2>, scalar_prefetch = 0 : i64, scratch_operands = 1 : i64, tpu.core_type = #tpu.core_type<tc>, window_params = [{transform_indices = @transform_0, window_bounds = array<i64: 1, 256, 512>}, {pipeline_mode = #tpu.pipeline_mode<synchronous>, transform_indices = @transform_1, window_bounds = array<i64: 512, 128>}, {pipeline_mode = #tpu.pipeline_mode<synchronous>, transform_indices = @transform_2, window_bounds = array<i64: 3, 384, 128>}, {pipeline_mode = #tpu.pipeline_mode<synchronous>, transform_indices = @transform_3, window_bounds = array<i64: 128, 512>}, {pipeline_mode = #tpu.pipeline_mode<synchronous>, transform_indices = @transform_4, window_bounds = array<i64: 1, 128>}, {pipeline_mode = #tpu.pipeline_mode<synchronous>, transform_indices = @transform_5, window_bounds = array<i64: 1, 128>}, {pipeline_mode = #tpu.pipeline_mode<synchronous>, transform_indices = @transform_6, window_bounds = array<i64: 1, 128>}, {pipeline_mode = #tpu.pipeline_mode<synchronous>, transform_indices = @transform_7, window_bounds = array<i64: 1, 128>}, {pipeline_mode = #tpu.pipeline_mode<synchronous>, transform_indices = @transform_8, window_bounds = array<i64: 1, 512>}, {pipeline_mode = #tpu.pipeline_mode<synchronous>, transform_indices = @transform_9, window_bounds = array<i64: 1, 512>}, {transform_indices = @transform_10, window_bounds = array<i64: 1, 256, 512>}]} {
    %c0 = arith.constant 0 : index
    %c0_0 = arith.constant 0 : index
    %c0_1 = arith.constant 0 : index
    %0 = vector.load %arg1[%c0, %c0_0, %c0_1] : memref<1x256x512xbf16, #tpu.memory_space<vmem>>, vector<1x256x512xbf16>
    %1 = vector.shape_cast %0 : vector<1x256x512xbf16> to vector<256x512xbf16>
    %c0_2 = arith.constant 0 : index
    %c0_3 = arith.constant 0 : index
    %2 = vector.load %arg2[%c0_2, %c0_3] : memref<512x128xbf16, #tpu.memory_space<vmem>>, vector<512x128xbf16>
    %cst = arith.constant dense<0.000000e+00> : vector<256x128xf32>
    %3 = tpu.matmul %1, %2, %cst {dimension_numbers = #tpu.dot_dimension_numbers<[1], [0], [0], [1], [0, 0, 1, 1], [], []>} : vector<256x512xbf16>, vector<512x128xbf16>, vector<256x128xf32> -> vector<256x128xf32>
    %c0_4 = arith.constant 0 : index
    %c0_5 = arith.constant 0 : index
    %4 = vector.load %arg5[%c0_4, %c0_5] : memref<1x128xf32, #tpu.memory_space<vmem>>, vector<1x128xf32>
    %5 = vector.broadcast %4 : vector<1x128xf32> to vector<256x128xf32>
    %6 = arith.mulf %3, %5 : vector<256x128xf32>
    %c0_6 = arith.constant 0 : index
    %c0_7 = arith.constant 0 : index
    %7 = vector.load %arg6[%c0_6, %c0_7] : memref<1x128xf32, #tpu.memory_space<vmem>>, vector<1x128xf32>
    %8 = vector.broadcast %7 : vector<1x128xf32> to vector<256x128xf32>
    %9 = arith.addf %6, %8 : vector<256x128xf32>
    %cst_8 = arith.constant 0.000000e+00 : f32
    %10 = vector.broadcast %cst_8 : f32 to vector<256x128xf32>
    %11 = arith.maximumf %9, %10 : vector<256x128xf32>
    %12 = arith.truncf %11 : vector<256x128xf32> to vector<256x128xbf16>
    %cst_9 = arith.constant 0.000000e+00 : bf16
    %13 = vector.broadcast %cst_9 : bf16 to vector<17x384xbf16>
    %c0_10 = arith.constant 0 : index
    %c0_11 = arith.constant 0 : index
    %14 = vector.load %arg12[%c0_10, %c0_11] : memref<288x384xbf16, #tpu.memory_space<vmem>>, vector<17x384xbf16>
    tpu.vector_store %arg12[%c0_10, %c0_11], %13 {strides = array<i32>} : memref<288x384xbf16, #tpu.memory_space<vmem>>, vector<17x384xbf16>,
    %c271 = arith.constant 271 : index
    %c0_12 = arith.constant 0 : index
    %15 = vector.load %arg12[%c271, %c0_12] : memref<288x384xbf16, #tpu.memory_space<vmem>>, vector<17x384xbf16>
    tpu.vector_store %arg12[%c271, %c0_12], %13 {strides = array<i32>} : memref<288x384xbf16, #tpu.memory_space<vmem>>, vector<17x384xbf16>,
    %16 = tpu.iota {dimensions = array<i32: 0>} : vector<256x1xi32>
    %c16_i32 = arith.constant 16 : i32
    %c0_i32 = arith.constant 0 : i32
    %17 = arith.cmpi eq, %c16_i32, %c0_i32 : i32
    %c1_i32 = arith.constant 1 : i32
    %18 = arith.select %17, %c1_i32, %c16_i32 : i32
    %19 = vector.broadcast %18 : i32 to vector<256x1xi32>
    %20 = arith.remsi %16, %19 : vector<256x1xi32>
    %c0_i32_13 = arith.constant 0 : i32
    %21 = vector.broadcast %c0_i32_13 : i32 to vector<256x1xi32>
    %22 = arith.cmpi ne, %20, %21 : vector<256x1xi32>
    %c0_i32_14 = arith.constant 0 : i32
    %23 = vector.broadcast %c0_i32_14 : i32 to vector<256x1xi32>
    %24 = arith.cmpi slt, %20, %23 : vector<256x1xi32>
    %c0_i32_15 = arith.constant 0 : i32
    %25 = arith.cmpi slt, %18, %c0_i32_15 : i32
    %26 = vector.broadcast %25 : i1 to vector<256x1xi1>
    %27 = vector.broadcast %26 : vector<256x1xi1> to vector<256x1xi1>
    %28 = arith.xori %24, %27 : vector<256x1xi1>
    %29 = arith.andi %28, %22 : vector<256x1xi1>
    %30 = vector.broadcast %18 : i32 to vector<256x1xi32>
    %31 = arith.addi %20, %30 : vector<256x1xi32>
    %32 = arith.select %29, %31, %20 : vector<256x1xi1>, vector<256x1xi32>
    %c14_i32 = arith.constant 14 : i32
    %33 = vector.broadcast %c14_i32 : i32 to vector<256x1xi32>
    %34 = arith.cmpi sle, %32, %33 : vector<256x1xi32>
    %c1_i32_16 = arith.constant 1 : i32
    %35 = vector.broadcast %c1_i32_16 : i32 to vector<256x1xi32>
    %36 = arith.cmpi sge, %32, %35 : vector<256x1xi32>
    %cst_17 = arith.constant 0.000000e+00 : bf16
    %37 = vector.broadcast %cst_17 : bf16 to vector<256x128xbf16>
    %38 = vector.shape_cast %34 : vector<256x1xi1> to vector<256x1xi1>
    %39 = vector.broadcast %38 : vector<256x1xi1> to vector<256x128xi1>
    %40 = arith.select %39, %12, %37 : vector<256x128xi1>, vector<256x128xbf16>
    %c17 = arith.constant 17 : index
    %c0_18 = arith.constant 0 : index
    %41 = vector.load %arg12[%c17, %c0_18] : memref<288x384xbf16, #tpu.memory_space<vmem>>, vector<256x128xbf16>
    tpu.vector_store %arg12[%c17, %c0_18], %40 {strides = array<i32>} : memref<288x384xbf16, #tpu.memory_space<vmem>>, vector<256x128xbf16>,
    %c16 = arith.constant 16 : index
    %c128 = arith.constant 128 : index
    %42 = vector.load %arg12[%c16, %c128] : memref<288x384xbf16, #tpu.memory_space<vmem>>, vector<256x128xbf16>
    tpu.vector_store %arg12[%c16, %c128], %12 {strides = array<i32>} : memref<288x384xbf16, #tpu.memory_space<vmem>>, vector<256x128xbf16>,
    %43 = vector.shape_cast %36 : vector<256x1xi1> to vector<256x1xi1>
    %44 = vector.broadcast %43 : vector<256x1xi1> to vector<256x128xi1>
    %45 = arith.select %44, %12, %37 : vector<256x128xi1>, vector<256x128xbf16>
    %c15 = arith.constant 15 : index
    %c256 = arith.constant 256 : index
    %46 = vector.load %arg12[%c15, %c256] : memref<288x384xbf16, #tpu.memory_space<vmem>>, vector<256x128xbf16>
    tpu.vector_store %arg12[%c15, %c256], %45 {strides = array<i32>} : memref<288x384xbf16, #tpu.memory_space<vmem>>, vector<256x128xbf16>,
    %c0_19 = arith.constant 0 : index
    %c0_20 = arith.constant 0 : index
    %47 = vector.load %arg12[%c0_19, %c0_20] : memref<288x384xbf16, #tpu.memory_space<vmem>>, vector<256x384xbf16>
    %c0_21 = arith.constant 0 : index
    %c0_22 = arith.constant 0 : index
    %c0_23 = arith.constant 0 : index
    %48 = vector.load %arg3[%c0_21, %c0_22, %c0_23] : memref<3x384x128xbf16, #tpu.memory_space<vmem>>, vector<1x384x128xbf16>
    %49 = vector.shape_cast %48 : vector<1x384x128xbf16> to vector<384x128xbf16>
    %cst_24 = arith.constant dense<0.000000e+00> : vector<256x128xf32>
    %50 = tpu.matmul %47, %49, %cst_24 {dimension_numbers = #tpu.dot_dimension_numbers<[1], [0], [0], [1], [0, 0, 1, 1], [], []>} : vector<256x384xbf16>, vector<384x128xbf16>, vector<256x128xf32> -> vector<256x128xf32>
    %c16_25 = arith.constant 16 : index
    %c0_26 = arith.constant 0 : index
    %51 = vector.load %arg12[%c16_25, %c0_26] : memref<288x384xbf16, #tpu.memory_space<vmem>>, vector<256x384xbf16>
    %c1 = arith.constant 1 : index
    %c0_27 = arith.constant 0 : index
    %c0_28 = arith.constant 0 : index
    %52 = vector.load %arg3[%c1, %c0_27, %c0_28] : memref<3x384x128xbf16, #tpu.memory_space<vmem>>, vector<1x384x128xbf16>
    %53 = vector.shape_cast %52 : vector<1x384x128xbf16> to vector<384x128xbf16>
    %cst_29 = arith.constant dense<0.000000e+00> : vector<256x128xf32>
    %54 = tpu.matmul %51, %53, %cst_29 {dimension_numbers = #tpu.dot_dimension_numbers<[1], [0], [0], [1], [0, 0, 1, 1], [], []>} : vector<256x384xbf16>, vector<384x128xbf16>, vector<256x128xf32> -> vector<256x128xf32>
    %55 = arith.addf %50, %54 : vector<256x128xf32>
    %c32 = arith.constant 32 : index
    %c0_30 = arith.constant 0 : index
    %56 = vector.load %arg12[%c32, %c0_30] : memref<288x384xbf16, #tpu.memory_space<vmem>>, vector<256x384xbf16>
    %c2 = arith.constant 2 : index
    %c0_31 = arith.constant 0 : index
    %c0_32 = arith.constant 0 : index
    %57 = vector.load %arg3[%c2, %c0_31, %c0_32] : memref<3x384x128xbf16, #tpu.memory_space<vmem>>, vector<1x384x128xbf16>
    %58 = vector.shape_cast %57 : vector<1x384x128xbf16> to vector<384x128xbf16>
    %cst_33 = arith.constant dense<0.000000e+00> : vector<256x128xf32>
    %59 = tpu.matmul %56, %58, %cst_33 {dimension_numbers = #tpu.dot_dimension_numbers<[1], [0], [0], [1], [0, 0, 1, 1], [], []>} : vector<256x384xbf16>, vector<384x128xbf16>, vector<256x128xf32> -> vector<256x128xf32>
    %60 = arith.addf %55, %59 : vector<256x128xf32>
    %c0_34 = arith.constant 0 : index
    %c0_35 = arith.constant 0 : index
    %61 = vector.load %arg7[%c0_34, %c0_35] : memref<1x128xf32, #tpu.memory_space<vmem>>, vector<1x128xf32>
    %62 = vector.broadcast %61 : vector<1x128xf32> to vector<256x128xf32>
    %63 = arith.mulf %60, %62 : vector<256x128xf32>
    %c0_36 = arith.constant 0 : index
    %c0_37 = arith.constant 0 : index
    %64 = vector.load %arg8[%c0_36, %c0_37] : memref<1x128xf32, #tpu.memory_space<vmem>>, vector<1x128xf32>
    %65 = vector.broadcast %64 : vector<1x128xf32> to vector<256x128xf32>
    %66 = arith.addf %63, %65 : vector<256x128xf32>
    %cst_38 = arith.constant 0.000000e+00 : f32
    %67 = vector.broadcast %cst_38 : f32 to vector<256x128xf32>
    %68 = arith.maximumf %66, %67 : vector<256x128xf32>
    %69 = arith.truncf %68 : vector<256x128xf32> to vector<256x128xbf16>
    %c0_39 = arith.constant 0 : index
    %c0_40 = arith.constant 0 : index
    %70 = vector.load %arg4[%c0_39, %c0_40] : memref<128x512xbf16, #tpu.memory_space<vmem>>, vector<128x512xbf16>
    %cst_41 = arith.constant dense<0.000000e+00> : vector<256x512xf32>
    %71 = tpu.matmul %69, %70, %cst_41 {dimension_numbers = #tpu.dot_dimension_numbers<[1], [0], [0], [1], [0, 0, 1, 1], [], []>} : vector<256x128xbf16>, vector<128x512xbf16>, vector<256x512xf32> -> vector<256x512xf32>
    %c0_42 = arith.constant 0 : index
    %c0_43 = arith.constant 0 : index
    %72 = vector.load %arg9[%c0_42, %c0_43] : memref<1x512xf32, #tpu.memory_space<vmem>>, vector<1x512xf32>
    %73 = vector.broadcast %72 : vector<1x512xf32> to vector<256x512xf32>
    %74 = arith.mulf %71, %73 : vector<256x512xf32>
    %c0_44 = arith.constant 0 : index
    %c0_45 = arith.constant 0 : index
    %75 = vector.load %arg10[%c0_44, %c0_45] : memref<1x512xf32, #tpu.memory_space<vmem>>, vector<1x512xf32>
    %76 = vector.broadcast %75 : vector<1x512xf32> to vector<256x512xf32>
    %77 = arith.addf %74, %76 : vector<256x512xf32>
    %c0_46 = arith.constant 0 : index
    %c0_47 = arith.constant 0 : index
    %c0_48 = arith.constant 0 : index
    %78 = vector.load %arg1[%c0_46, %c0_47, %c0_48] : memref<1x256x512xbf16, #tpu.memory_space<vmem>>, vector<1x256x512xbf16>
    %79 = vector.shape_cast %78 : vector<1x256x512xbf16> to vector<256x512xbf16>
    %80 = arith.extf %79 : vector<256x512xbf16> to vector<256x512xf32>
    %81 = arith.addf %77, %80 : vector<256x512xf32>
    %cst_49 = arith.constant 0.000000e+00 : f32
    %82 = vector.broadcast %cst_49 : f32 to vector<256x512xf32>
    %83 = arith.maximumf %81, %82 : vector<256x512xf32>
    %84 = arith.truncf %83 : vector<256x512xf32> to vector<256x512xbf16>
    %c0_50 = arith.constant 0 : index
    %c0_51 = arith.constant 0 : index
    %c0_52 = arith.constant 0 : index
    %85 = vector.load %arg11[%c0_50, %c0_51, %c0_52] : memref<1x256x512xbf16, #tpu.memory_space<vmem>>, vector<1x256x512xbf16>
    %86 = vector.shape_cast %85 : vector<1x256x512xbf16> to vector<256x512xbf16>
    %87 = vector.shape_cast %84 : vector<256x512xbf16> to vector<1x256x512xbf16>
    tpu.vector_store %arg11[%c0_50, %c0_51, %c0_52], %87 {strides = array<i32>} : memref<1x256x512xbf16, #tpu.memory_space<vmem>>, vector<1x256x512xbf16>,
    return
  }
  func.func @transform_0(%arg0: i32) -> (i32, i32, i32) {
    %c0_i32 = arith.constant 0 : i32
    %c0_i32_0 = arith.constant 0 : i32
    %c0_i32_1 = arith.constant 0 : i32
    return %arg0, %c0_i32, %c0_i32_0 : i32, i32, i32
  }
  func.func @transform_1(%arg0: i32) -> (i32, i32) {
    %c0_i32 = arith.constant 0 : i32
    %c0_i32_0 = arith.constant 0 : i32
    %c0_i32_1 = arith.constant 0 : i32
    return %c0_i32, %c0_i32_0 : i32, i32
  }
  func.func @transform_2(%arg0: i32) -> (i32, i32, i32) {
    %c0_i32 = arith.constant 0 : i32
    %c0_i32_0 = arith.constant 0 : i32
    %c0_i32_1 = arith.constant 0 : i32
    %c0_i32_2 = arith.constant 0 : i32
    return %c0_i32, %c0_i32_0, %c0_i32_1 : i32, i32, i32
  }
  func.func @transform_3(%arg0: i32) -> (i32, i32) {
    %c0_i32 = arith.constant 0 : i32
    %c0_i32_0 = arith.constant 0 : i32
    %c0_i32_1 = arith.constant 0 : i32
    return %c0_i32, %c0_i32_0 : i32, i32
  }
  func.func @transform_4(%arg0: i32) -> (i32, i32) {
    %c0_i32 = arith.constant 0 : i32
    %c0_i32_0 = arith.constant 0 : i32
    %c0_i32_1 = arith.constant 0 : i32
    return %c0_i32, %c0_i32_0 : i32, i32
  }
  func.func @transform_5(%arg0: i32) -> (i32, i32) {
    %c0_i32 = arith.constant 0 : i32
    %c0_i32_0 = arith.constant 0 : i32
    %c0_i32_1 = arith.constant 0 : i32
    return %c0_i32, %c0_i32_0 : i32, i32
  }
  func.func @transform_6(%arg0: i32) -> (i32, i32) {
    %c0_i32 = arith.constant 0 : i32
    %c0_i32_0 = arith.constant 0 : i32
    %c0_i32_1 = arith.constant 0 : i32
    return %c0_i32, %c0_i32_0 : i32, i32
  }
  func.func @transform_7(%arg0: i32) -> (i32, i32) {
    %c0_i32 = arith.constant 0 : i32
    %c0_i32_0 = arith.constant 0 : i32
    %c0_i32_1 = arith.constant 0 : i32
    return %c0_i32, %c0_i32_0 : i32, i32
  }
  func.func @transform_8(%arg0: i32) -> (i32, i32) {
    %c0_i32 = arith.constant 0 : i32
    %c0_i32_0 = arith.constant 0 : i32
    %c0_i32_1 = arith.constant 0 : i32
    return %c0_i32, %c0_i32_0 : i32, i32
  }
  func.func @transform_9(%arg0: i32) -> (i32, i32) {
    %c0_i32 = arith.constant 0 : i32
    %c0_i32_0 = arith.constant 0 : i32
    %c0_i32_1 = arith.constant 0 : i32
    return %c0_i32, %c0_i32_0 : i32, i32
  }
  func.func @transform_10(%arg0: i32) -> (i32, i32, i32) {
    %c0_i32 = arith.constant 0 : i32
    %c0_i32_0 = arith.constant 0 : i32
    %c0_i32_1 = arith.constant 0 : i32
    return %arg0, %c0_i32, %c0_i32_0 : i32, i32, i32
  }
}

</mosaic_0001>

<llo_original>
// kernel: tpu_custom_call.1
$region0: #{tpu_custom_call.1}
  #allocation0 [shape = 'u32[]', space=smem, size = 0x4, offset = 0x4, fixed_abs, tag = 'smem constant byte address 0x4 - core index']
  #allocation1 [shape = 'u32[72,128]{1,0:T(1,128)}', space=vmem, size = 0x9000, scoped, tag = 'internal scratch']
  #allocation2 [shape = 'bf16[288,384]{1,0:T(8,128)(2,1)}', space=vmem, size = 0x36000, scoped, tag = 'scratch operand']
  %s0 = inlined_call_operand.hbm [shape: bf16[2,256,512], index: 0, kind: input, shape index: {}]
  %s1 = inlined_call_operand.hbm [shape: bf16[512,128], index: 1, kind: input, shape index: {}]
  %s2 = inlined_call_operand.hbm [shape: bf16[3,384,128], index: 2, kind: input, shape index: {}]
  %s3 = inlined_call_operand.hbm [shape: bf16[128,512], index: 3, kind: input, shape index: {}]
  %s4 = inlined_call_operand.hbm [shape: f32[1,128], index: 4, kind: input, shape index: {}]
  %s5 = inlined_call_operand.hbm [shape: f32[1,128], index: 5, kind: input, shape index: {}]
  %s6 = inlined_call_operand.hbm [shape: f32[1,128], index: 6, kind: input, shape index: {}]
  %s7 = inlined_call_operand.hbm [shape: f32[1,128], index: 7, kind: input, shape index: {}]
  %s8 = inlined_call_operand.vmem [shape: f32[1,512], index: 8, kind: input, shape index: {}]
  %s9 = inlined_call_operand.vmem [shape: f32[1,512], index: 9, kind: input, shape index: {}]
  %s10 = inlined_call_operand.hbm [shape: bf16[2,256,512], index: 10, kind: output, shape index: {}]
  %s11 = sld [smem:[#allocation0]]
  $region105: #{tpu_custom_call.1} parent=0
    _
  %s13 = ssub.s32 1, %s11
  %s14 = scalar_select 0, %s13, %s11
  $region1: #{tpu_custom_call.1} parent=0
    #allocation3 [shape = 'u8[524288]{0}', space=vmem, size = 0x80000, scoped, tag = 'input window, operand 0']
    #allocation4 [shape = 's32[2]{0}', space=sflag, size = 0x8, scoped, tag = 'scoped memory for tpu_custom_call.1']
    #allocation5 [shape = 's32[2]{0}', space=sflag, size = 0x8, scoped, tag = 'scoped memory for tpu_custom_call.1']
    #allocation6 [shape = 'u8[131072]{0}', space=vmem, size = 0x20000, scoped, tag = 'input window, operand 1, single buffered']
    #allocation7 [shape = 's32[1]{0}', space=sflag, size = 0x4, scoped, tag = 'scoped memory for tpu_custom_call.1']
    #allocation8 [shape = 'u8[294912]{0}', space=vmem, size = 0x48000, scoped, tag = 'input window, operand 2, single buffered']
    #allocation9 [shape = 'u8[131072]{0}', space=vmem, size = 0x20000, scoped, tag = 'input window, operand 3, single buffered']
    #allocation10 [shape = 's32[1]{0}', space=sflag, size = 0x4, scoped, tag = 'scoped memory for tpu_custom_call.1']
    #allocation11 [shape = 'u8[512]{0}', space=vmem, size = 0x400, scoped, tag = 'input window, operand 4, single buffered']
    #allocation12 [shape = 'u8[512]{0}', space=vmem, size = 0x400, scoped, tag = 'input window, operand 5, single buffered']
    #allocation13 [shape = 's32[1]{0}', space=sflag, size = 0x4, scoped, tag = 'scoped memory for tpu_custom_call.1']
    #allocation14 [shape = 'u8[512]{0}', space=vmem, size = 0x400, scoped, tag = 'input window, operand 6, single buffered']
    #allocation15 [shape = 'u8[512]{0}', space=vmem, size = 0x400, scoped, tag = 'input window, operand 7, single buffered']
    #allocation16 [shape = 's32[1]{0}', space=sflag, size = 0x4, scoped, tag = 'scoped memory for tpu_custom_call.1']
    #allocation17 [shape = 'u8[524288]{0}', space=vmem, size = 0x80000, scoped, tag = 'output window, operand 0']
    %15 = vsyncpa [#allocation4], 0
    %s16 = scalar_lea.sflag [#allocation4], 1
    %17 = vsyncpa %s16, 0
    %18 = vsyncpa [#allocation7], 0
    %19 = vsyncpa [#allocation10], 0
    %20 = vsyncpa [#allocation13], 0
    %21 = vsyncpa [#allocation16], 0
    %22 = vsyncpa [#allocation5], 0
    %s23 = scalar_lea.sflag [#allocation5], 1
    %24 = vsyncpa %s23, 0
    loop: start=0, step=1, limit=4
    $region2: #{tpu_custom_call.1} parent=1 // loop_pre_header
      _
    $region3: #{tpu_custom_call.1} parent=1 // loop_header
      %s26 = sphi 0, %s30
      %p27 = scmp.ge.s32.totalorder %s26, 4
      %s36 = sphi 0, %s38
      %s39 = sphi 0, %s36
      %s40 = sphi 0, %s39
      %s56 = sphi 0, %s40
      %s60 = sphi 0, %s60
      %s62 = sphi 0, %s60
      %s63 = sphi 0, %s62
      %s77 = sphi 0, %s63
      %s81 = sphi 0, %s81
      %s83 = sphi 0, %s81
      %s84 = sphi 0, %s83
      %s98 = sphi 0, %s84
      %s102 = sphi 0, %s102
      %s104 = sphi 0, %s102
      %s105 = sphi 0, %s104
      %s119 = sphi 0, %s105
      %s123 = sphi 0, %s123
      %s125 = sphi 0, %s123
      %s126 = sphi 0, %s125
      %s140 = sphi 0, %s126
      %s144 = sphi 0, %s144
      %s146 = sphi 0, %s144
      %s147 = sphi 0, %s146
      %s161 = sphi 0, %s147
      %s165 = sphi 0, %s165
      %s167 = sphi 0, %s165
      %s168 = sphi 0, %s167
      %s182 = sphi 0, %s168
      %s186 = sphi 0, %s186
      %s188 = sphi 0, %s186
      %s189 = sphi 0, %s188
      %s203 = sphi 0, %s189
      %s207 = sphi 0, %s207
      %s209 = sphi 0, %s207
      %s210 = sphi 0, %s209
      %s224 = sphi 0, %s210
      %s228 = sphi 0, %s228
      %s230 = sphi 0, %s228
      %s231 = sphi 0, %s230
      %s245 = sphi 0, %s231
      %s251 = sphi 0, %s253
      %s254 = sphi 0, %s251
      %s255 = sphi 0, %s254
      %s271 = sphi 0, %s255
    $region4: #{tpu_custom_call.1} parent=1 // loop_header_branch
      %29 = sbr.rel (%p27) target = $region8
    $region5: #{tpu_custom_call.1} parent=1 // loop_body
      %s31 = ssub.s32 %s26, 1
      %s32 = ssub.s32 %s26, 2
      %s33 = sadd.s32 %s26, 1
      %s34 = ssub.s32 %s26, %s33
      %p35 = scmp.eq.s32.totalorder %s34, 0
      %s37 = sadd.s32 %s36, 1
      %s38 = scalar_select %p35, %s36, %s37
      %p41 = pneg %p35
      %p42 = scmp.eq.s32.totalorder %s26, 1
      %p43 = por %p41, %p42
      %p44 = scmp.ne.s32.totalorder %s36, %s39
      %p45 = scmp.eq.s32.totalorder %s26, 0
      %p46 = por %p44, %p45
      %p47 = scmp.ne.s32.totalorder %s36, %s39
      %p48 = scmp.eq.s32.totalorder %s31, 1
      %p49 = por %p47, %p48
      %p50 = scmp.ne.s32.totalorder %s39, %s40
      %p51 = scmp.eq.s32.totalorder %s31, 0
      %p52 = por %p50, %p51
      %p53 = scmp.ne.s32.totalorder %s39, %s40
      %p54 = scmp.eq.s32.totalorder %s32, 1
      %p55 = por %p53, %p54
      %p57 = scmp.ne.s32.totalorder %s40, %s56
      %p58 = scmp.eq.s32.totalorder %s32, 0
      %p59 = por %p57, %p58
      %s61 = sadd.s32 %s60, 1
      %p64 = scmp.eq.s32.totalorder %s26, 1
      %p65 = scmp.ne.s32.totalorder %s60, %s62
      %p66 = scmp.eq.s32.totalorder %s26, 0
      %p67 = por %p65, %p66
      %p68 = scmp.ne.s32.totalorder %s60, %s62
      %p69 = scmp.eq.s32.totalorder %s31, 1
      %p70 = por %p68, %p69
      %p71 = scmp.ne.s32.totalorder %s62, %s63
      %p72 = scmp.eq.s32.totalorder %s31, 0
      %p73 = por %p71, %p72
      %p74 = scmp.ne.s32.totalorder %s62, %s63
      %p75 = scmp.eq.s32.totalorder %s32, 1
      %p76 = por %p74, %p75
      %p78 = scmp.ne.s32.totalorder %s63, %s77
      %p79 = scmp.eq.s32.totalorder %s32, 0
      %p80 = por %p78, %p79
      %s82 = sadd.s32 %s81, 1
      %p85 = scmp.eq.s32.totalorder %s26, 1
      %p86 = scmp.ne.s32.totalorder %s81, %s83
      %p87 = scmp.eq.s32.totalorder %s26, 0
      %p88 = por %p86, %p87
      %p89 = scmp.ne.s32.totalorder %s81, %s83
      %p90 = scmp.eq.s32.totalorder %s31, 1
      %p91 = por %p89, %p90
      %p92 = scmp.ne.s32.totalorder %s83, %s84
      %p93 = scmp.eq.s32.totalorder %s31, 0
      %p94 = por %p92, %p93
      %p95 = scmp.ne.s32.totalorder %s83, %s84
      %p96 = scmp.eq.s32.totalorder %s32, 1
      %p97 = por %p95, %p96
      %p99 = scmp.ne.s32.totalorder %s84, %s98
      %p100 = scmp.eq.s32.totalorder %s32, 0
      %p101 = por %p99, %p100
      %s103 = sadd.s32 %s102, 1
      %p106 = scmp.eq.s32.totalorder %s26, 1
      %p107 = scmp.ne.s32.totalorder %s102, %s104
      %p108 = scmp.eq.s32.totalorder %s26, 0
      %p109 = por %p107, %p108
      %p110 = scmp.ne.s32.totalorder %s102, %s104
      %p111 = scmp.eq.s32.totalorder %s31, 1
      %p112 = por %p110, %p111
      %p113 = scmp.ne.s32.totalorder %s104, %s105
      %p114 = scmp.eq.s32.totalorder %s31, 0
      %p115 = por %p113, %p114
      %p116 = scmp.ne.s32.totalorder %s104, %s105
      %p117 = scmp.eq.s32.totalorder %s32, 1
      %p118 = por %p116, %p117
      %p120 = scmp.ne.s32.totalorder %s105, %s119
      %p121 = scmp.eq.s32.totalorder %s32, 0
      %p122 = por %p120, %p121
      %s124 = sadd.s32 %s123, 1
      %p127 = scmp.eq.s32.totalorder %s26, 1
      %p128 = scmp.ne.s32.totalorder %s123, %s125
      %p129 = scmp.eq.s32.totalorder %s26, 0
      %p130 = por %p128, %p129
      %p131 = scmp.ne.s32.totalorder %s123, %s125
      %p132 = scmp.eq.s32.totalorder %s31, 1
      %p133 = por %p131, %p132
      %p134 = scmp.ne.s32.totalorder %s125, %s126
      %p135 = scmp.eq.s32.totalorder %s31, 0
      %p136 = por %p134, %p135
      %p137 = scmp.ne.s32.totalorder %s125, %s126
      %p138 = scmp.eq.s32.totalorder %s32, 1
      %p139 = por %p137, %p138
      %p141 = scmp.ne.s32.totalorder %s126, %s140
      %p142 = scmp.eq.s32.totalorder %s32, 0
      %p143 = por %p141, %p142
      %s145 = sadd.s32 %s144, 1
      %p148 = scmp.eq.s32.totalorder %s26, 1
      %p149 = scmp.ne.s32.totalorder %s144, %s146
      %p150 = scmp.eq.s32.totalorder %s26, 0
      %p151 = por %p149, %p150
      %p152 = scmp.ne.s32.totalorder %s144, %s146
      %p153 = scmp.eq.s32.totalorder %s31, 1
      %p154 = por %p152, %p153
      %p155 = scmp.ne.s32.totalorder %s146, %s147
      %p156 = scmp.eq.s32.totalorder %s31, 0
      %p157 = por %p155, %p156
      %p158 = scmp.ne.s32.totalorder %s146, %s147
      %p159 = scmp.eq.s32.totalorder %s32, 1
      %p160 = por %p158, %p159
      %p162 = scmp.ne.s32.totalorder %s147, %s161
      %p163 = scmp.eq.s32.totalorder %s32, 0
      %p164 = por %p162, %p163
      %s166 = sadd.s32 %s165, 1
      %p169 = scmp.eq.s32.totalorder %s26, 1
      %p170 = scmp.ne.s32.totalorder %s165, %s167
      %p171 = scmp.eq.s32.totalorder %s26, 0
      %p172 = por %p170, %p171
      %p173 = scmp.ne.s32.totalorder %s165, %s167
      %p174 = scmp.eq.s32.totalorder %s31, 1
      %p175 = por %p173, %p174
      %p176 = scmp.ne.s32.totalorder %s167, %s168
      %p177 = scmp.eq.s32.totalorder %s31, 0
      %p178 = por %p176, %p177
      %p179 = scmp.ne.s32.totalorder %s167, %s168
      %p180 = scmp.eq.s32.totalorder %s32, 1
      %p181 = por %p179, %p180
      %p183 = scmp.ne.s32.totalorder %s168, %s182
      %p184 = scmp.eq.s32.totalorder %s32, 0
      %p185 = por %p183, %p184
      %s187 = sadd.s32 %s186, 1
      %p190 = scmp.eq.s32.totalorder %s26, 1
      %p191 = scmp.ne.s32.totalorder %s186, %s188
      %p192 = scmp.eq.s32.totalorder %s26, 0
      %p193 = por %p191, %p192
      %p194 = scmp.ne.s32.totalorder %s186, %s188
      %p195 = scmp.eq.s32.totalorder %s31, 1
      %p196 = por %p194, %p195
      %p197 = scmp.ne.s32.totalorder %s188, %s189
      %p198 = scmp.eq.s32.totalorder %s31, 0
      %p199 = por %p197, %p198
      %p200 = scmp.ne.s32.totalorder %s188, %s189
      %p201 = scmp.eq.s32.totalorder %s32, 1
      %p202 = por %p200, %p201
      %p204 = scmp.ne.s32.totalorder %s189, %s203
      %p205 = scmp.eq.s32.totalorder %s32, 0
      %p206 = por %p204, %p205
      %s208 = sadd.s32 %s207, 1
      %p211 = scmp.eq.s32.totalorder %s26, 1
      %p212 = scmp.ne.s32.totalorder %s207, %s209
      %p213 = scmp.eq.s32.totalorder %s26, 0
      %p214 = por %p212, %p213
      %p215 = scmp.ne.s32.totalorder %s207, %s209
      %p216 = scmp.eq.s32.totalorder %s31, 1
      %p217 = por %p215, %p216
      %p218 = scmp.ne.s32.totalorder %s209, %s210
      %p219 = scmp.eq.s32.totalorder %s31, 0
      %p220 = por %p218, %p219
      %p221 = scmp.ne.s32.totalorder %s209, %s210
      %p222 = scmp.eq.s32.totalorder %s32, 1
      %p223 = por %p221, %p222
      %p225 = scmp.ne.s32.totalorder %s210, %s224
      %p226 = scmp.eq.s32.totalorder %s32, 0
      %p227 = por %p225, %p226
      %s229 = sadd.s32 %s228, 1
      %p232 = scmp.eq.s32.totalorder %s26, 1
      %p233 = scmp.ne.s32.totalorder %s228, %s230
      %p234 = scmp.eq.s32.totalorder %s26, 0
      %p235 = por %p233, %p234
      %p236 = scmp.ne.s32.totalorder %s228, %s230
      %p237 = scmp.eq.s32.totalorder %s31, 1
      %p238 = por %p236, %p237
      %p239 = scmp.ne.s32.totalorder %s230, %s231
      %p240 = scmp.eq.s32.totalorder %s31, 0
      %p241 = por %p239, %p240
      %p242 = scmp.ne.s32.totalorder %s230, %s231
      %p243 = scmp.eq.s32.totalorder %s32, 1
      %p244 = por %p242, %p243
      %p246 = scmp.ne.s32.totalorder %s231, %s245
      %p247 = scmp.eq.s32.totalorder %s32, 0
      %p248 = por %p246, %p247
      %s249 = ssub.s32 %s26, %s33
      %p250 = scmp.eq.s32.totalorder %s249, 0
      %s252 = sadd.s32 %s251, 1
      %s253 = scalar_select %p250, %s251, %s252
      %p256 = pneg %p250
      %p257 = scmp.eq.s32.totalorder %s26, 1
      %p258 = por %p256, %p257
      %p259 = scmp.ne.s32.totalorder %s251, %s254
      %p260 = scmp.eq.s32.totalorder %s26, 0
      %p261 = por %p259, %p260
      %p262 = scmp.ne.s32.totalorder %s251, %s254
      %p263 = scmp.eq.s32.totalorder %s31, 1
      %p264 = por %p262, %p263
      %p265 = scmp.ne.s32.totalorder %s254, %s255
      %p266 = scmp.eq.s32.totalorder %s31, 0
      %p267 = por %p265, %p266
      %p268 = scmp.ne.s32.totalorder %s254, %s255
      %p269 = scmp.eq.s32.totalorder %s32, 1
      %p270 = por %p268, %p269
      %p272 = scmp.ne.s32.totalorder %s255, %s271
      %p273 = scmp.eq.s32.totalorder %s32, 0
      %p274 = por %p272, %p273
      %p275 = scmp.le.s32.totalorder 1, %s26
      %p276 = scmp.lt.s32.totalorder %s26, 3
      %p277 = pnand %p275, %p276
      %p278 = pneg %p277
      // Predicated region
      $region9: #{tpu_custom_call.1} parent=5 // pred_check
        _
      $region10: #{tpu_custom_call.1} parent=5 // pred_check_branch
        %280 = sbr.rel (%p277) target = $region12
      $region11: #{tpu_custom_call.1} parent=5 // pred_region
        %s281 = ssub.s32 %s26, 1
        // Predicated region
        $region13: #{tpu_custom_call.1} parent=11 // pred_check
          %p282 = pneg %p73
        $region14: #{tpu_custom_call.1} parent=11 // pred_check_branch
          %284 = sbr.rel (%p282) target = $region16
        $region15: #{tpu_custom_call.1} parent=11 // pred_region
          %286 = vsyncadd [#allocation7], 0
          %s287 = sshll.u32 %s1, 4
          %s288 = int_to_ptr.hbm [resolvable:$true] %s287
          %s289 = sshll.u32 [#allocation6], 4
          %s290 = int_to_ptr.vmem [resolvable:$true] %s289
          %295 = dma.hbm_to_vmem [thread:$0]  %s288, 4096, %s290, [#allocation7], 64, 64, 4
        $region16: #{tpu_custom_call.1} parent=11 // pred_fallthru
          _
        // Predicated region
        $region17: #{tpu_custom_call.1} parent=11 // pred_check
          %p296 = pneg %p94
        $region18: #{tpu_custom_call.1} parent=11 // pred_check_branch
          %298 = sbr.rel (%p296) target = $region20
        $region19: #{tpu_custom_call.1} parent=11 // pred_region
          %300 = vsyncadd [#allocation7], 0
          %s301 = sshll.u32 %s2, 4
          %s302 = int_to_ptr.hbm [resolvable:$true] %s301
          %s303 = sshll.u32 [#allocation8], 4
          %s304 = int_to_ptr.vmem [resolvable:$true] %s303
          %309 = dma.hbm_to_vmem [thread:$0]  %s302, 9216, %s304, [#allocation7], 64, 64, 4
        $region20: #{tpu_custom_call.1} parent=11 // pred_fallthru
          _
        // Predicated region
        $region21: #{tpu_custom_call.1} parent=11 // pred_check
          %p310 = pneg %p115
        $region22: #{tpu_custom_call.1} parent=11 // pred_check_branch
          %312 = sbr.rel (%p310) target = $region24
        $region23: #{tpu_custom_call.1} parent=11 // pred_region
          %314 = vsyncadd [#allocation10], 0
          %s315 = sshll.u32 %s3, 4
          %s316 = int_to_ptr.hbm [resolvable:$true] %s315
          %s317 = sshll.u32 [#allocation9], 4
          %s318 = int_to_ptr.vmem [resolvable:$true] %s317
          %323 = dma.hbm_to_vmem [thread:$0]  %s316, 4096, %s318, [#allocation10], 256, 256, 16
        $region24: #{tpu_custom_call.1} parent=11 // pred_fallthru
          _
        // Predicated region
        $region25: #{tpu_custom_call.1} parent=11 // pred_check
          %p324 = pneg %p136
        $region26: #{tpu_custom_call.1} parent=11 // pred_check_branch
          %326 = sbr.rel (%p324) target = $region28
        $region27: #{tpu_custom_call.1} parent=11 // pred_region
          %328 = vsyncadd [#allocation10], 0
          %s330 = sshll.u32 %s4, 4
          %s331 = int_to_ptr.hbm [resolvable:$true] %s330
          %s332 = sshll.u32 [#allocation11], 4
          %s333 = int_to_ptr.vmem [resolvable:$true] %s332
          %335 = dma.hbm_to_vmem [thread:$0]  %s331, 16, %s333, [#allocation10]
        $region28: #{tpu_custom_call.1} parent=11 // pred_fallthru
          _
        // Predicated region
        $region29: #{tpu_custom_call.1} parent=11 // pred_check
          %p336 = pneg %p157
        $region30: #{tpu_custom_call.1} parent=11 // pred_check_branch
          %338 = sbr.rel (%p336) target = $region32
        $region31: #{tpu_custom_call.1} parent=11 // pred_region
          %340 = vsyncadd [#allocation13], 0
          %s342 = sshll.u32 %s5, 4
          %s343 = int_to_ptr.hbm [resolvable:$true] %s342
          %s344 = sshll.u32 [#allocation12], 4
          %s345 = int_to_ptr.vmem [resolvable:$true] %s344
          %347 = dma.hbm_to_vmem [thread:$0]  %s343, 16, %s345, [#allocation13]
        $region32: #{tpu_custom_call.1} parent=11 // pred_fallthru
          _
        // Predicated region
        $region33: #{tpu_custom_call.1} parent=11 // pred_check
          %p348 = pneg %p178
        $region34: #{tpu_custom_call.1} parent=11 // pred_check_branch
          %350 = sbr.rel (%p348) target = $region36
        $region35: #{tpu_custom_call.1} parent=11 // pred_region
          %352 = vsyncadd [#allocation13], 0
          %s354 = sshll.u32 %s6, 4
          %s355 = int_to_ptr.hbm [resolvable:$true] %s354
          %s356 = sshll.u32 [#allocation14], 4
          %s357 = int_to_ptr.vmem [resolvable:$true] %s356
          %359 = dma.hbm_to_vmem [thread:$0]  %s355, 16, %s357, [#allocation13]
        $region36: #{tpu_custom_call.1} parent=11 // pred_fallthru
          _
        // Predicated region
        $region37: #{tpu_custom_call.1} parent=11 // pred_check
          %p360 = pneg %p199
        $region38: #{tpu_custom_call.1} parent=11 // pred_check_branch
          %362 = sbr.rel (%p360) target = $region40
        $region39: #{tpu_custom_call.1} parent=11 // pred_region
          %364 = vsyncadd [#allocation16], 0
          %s366 = sshll.u32 %s7, 4
          %s367 = int_to_ptr.hbm [resolvable:$true] %s366
          %s368 = sshll.u32 [#allocation15], 4
          %s369 = int_to_ptr.vmem [resolvable:$true] %s368
          %371 = dma.hbm_to_vmem [thread:$0]  %s367, 16, %s369, [#allocation16]
        $region40: #{tpu_custom_call.1} parent=11 // pred_fallthru
          _
        // Predicated region
        $region41: #{tpu_custom_call.1} parent=11 // pred_check
          %p372 = pneg %p220
        $region42: #{tpu_custom_call.1} parent=11 // pred_check_branch
          %374 = sbr.rel (%p372) target = $region44
        $region43: #{tpu_custom_call.1} parent=11 // pred_region
          _
        $region44: #{tpu_custom_call.1} parent=11 // pred_fallthru
          _
        // Predicated region
        $region45: #{tpu_custom_call.1} parent=11 // pred_check
          %p375 = pneg %p241
        $region46: #{tpu_custom_call.1} parent=11 // pred_check_branch
          %377 = sbr.rel (%p375) target = $region48
        $region47: #{tpu_custom_call.1} parent=11 // pred_region
          _
        $region48: #{tpu_custom_call.1} parent=11 // pred_fallthru
          _
      $region12: #{tpu_custom_call.1} parent=5 // pred_fallthru
        _
      %p378 = scmp.lt.s32.totalorder %s26, 2
      // Predicated region
      $region49: #{tpu_custom_call.1} parent=5 // pred_check
        %p379 = pneg %p378
      $region50: #{tpu_custom_call.1} parent=5 // pred_check_branch
        %381 = sbr.rel (%p379) target = $region52
      $region51: #{tpu_custom_call.1} parent=5 // pred_region
        // Predicated region
        $region53: #{tpu_custom_call.1} parent=51 // pred_check
          %p382 = pneg %p46
        $region54: #{tpu_custom_call.1} parent=51 // pred_check_branch
          %384 = sbr.rel (%p382) target = $region56
        $region55: #{tpu_custom_call.1} parent=51 // pred_region
          %s385 = sand.u32 %s36, 1
          %s386 = scalar_lea.sflag [#allocation4], %s385
          %s387 = sand.u32 %s36, 1
          %s388 = smul.addr %s387, 512
          %s389 = scalar_lea.vmem [#allocation3], %s388
          %391 = vsyncadd %s386, 0
          %s392 = smul.addr %s26, 128
          %s393 = smul.addr %s392, 4
          %s394 = scalar_lea.hbm %s0, %s393
          %s395 = sshll.u32 %s394, 4
          %s396 = int_to_ptr.hbm [resolvable:$true] %s395
          %s397 = sshll.u32 %s389, 4
          %s398 = int_to_ptr.vmem [resolvable:$true] %s397
          %403 = dma.hbm_to_vmem [thread:$0]  %s396, 8192, %s398, %s386, 256, 256, 16
        $region56: #{tpu_custom_call.1} parent=51 // pred_fallthru
          _
      $region52: #{tpu_custom_call.1} parent=5 // pred_fallthru
        _
      %p404 = scmp.le.s32.totalorder 1, %s26
      %p405 = scmp.lt.s32.totalorder %s26, 3
      %p406 = pnand %p404, %p405
      %p407 = pneg %p406
      // Predicated region
      $region57: #{tpu_custom_call.1} parent=5 // pred_check
        _
      $region58: #{tpu_custom_call.1} parent=5 // pred_check_branch
        %409 = sbr.rel (%p406) target = $region60
      $region59: #{tpu_custom_call.1} parent=5 // pred_region
        %s410 = ssub.s32 %s26, 1
        %s411 = sand.u32 %s39, 1
        %s412 = scalar_lea.sflag [#allocation4], %s411
        %s413 = sand.u32 %s39, 1
        %s414 = smul.addr %s413, 512
        %s415 = scalar_lea.vmem [#allocation3], %s414
        // Predicated region
        $region61: #{tpu_custom_call.1} parent=59 // pred_check
          %p416 = pneg %p52
        $region62: #{tpu_custom_call.1} parent=59 // pred_check_branch
          %418 = sbr.rel (%p416) target = $region64
        $region63: #{tpu_custom_call.1} parent=59 // pred_region
          %420 = dma.done %s412, 8192
        $region64: #{tpu_custom_call.1} parent=59 // pred_fallthru
          _
        // Predicated region
        $region65: #{tpu_custom_call.1} parent=59 // pred_check
          %p421 = pneg %p73
        $region66: #{tpu_custom_call.1} parent=59 // pred_check_branch
          %423 = sbr.rel (%p421) target = $region68
        $region67: #{tpu_custom_call.1} parent=59 // pred_region
          %425 = dma.done [#allocation7], 4096
        $region68: #{tpu_custom_call.1} parent=59 // pred_fallthru
          _
        // Predicated region
        $region69: #{tpu_custom_call.1} parent=59 // pred_check
          %p426 = pneg %p94
        $region70: #{tpu_custom_call.1} parent=59 // pred_check_branch
          %428 = sbr.rel (%p426) target = $region72
        $region71: #{tpu_custom_call.1} parent=59 // pred_region
          %430 = dma.done [#allocation7], 9216
        $region72: #{tpu_custom_call.1} parent=59 // pred_fallthru
          _
        // Predicated region
        $region73: #{tpu_custom_call.1} parent=59 // pred_check
          %p431 = pneg %p115
        $region74: #{tpu_custom_call.1} parent=59 // pred_check_branch
          %433 = sbr.rel (%p431) target = $region76
        $region75: #{tpu_custom_call.1} parent=59 // pred_region
          %435 = dma.done [#allocation10], 4096
        $region76: #{tpu_custom_call.1} parent=59 // pred_fallthru
          _
        // Predicated region
        $region77: #{tpu_custom_call.1} parent=59 // pred_check
          %p436 = pneg %p136
        $region78: #{tpu_custom_call.1} parent=59 // pred_check_branch
          %438 = sbr.rel (%p436) target = $region80
        $region79: #{tpu_custom_call.1} parent=59 // pred_region
          %440 = dma.done [#allocation10], 16
        $region80: #{tpu_custom_call.1} parent=59 // pred_fallthru
          _
        // Predicated region
        $region81: #{tpu_custom_call.1} parent=59 // pred_check
          %p441 = pneg %p157
        $region82: #{tpu_custom_call.1} parent=59 // pred_check_branch
          %443 = sbr.rel (%p441) target = $region84
        $region83: #{tpu_custom_call.1} parent=59 // pred_region
          %445 = dma.done [#allocation13], 16
        $region84: #{tpu_custom_call.1} parent=59 // pred_fallthru
          _
        // Predicated region
        $region85: #{tpu_custom_call.1} parent=59 // pred_check
          %p446 = pneg %p178
        $region86: #{tpu_custom_call.1} parent=59 // pred_check_branch
          %448 = sbr.rel (%p446) target = $region88
        $region87: #{tpu_custom_call.1} parent=59 // pred_region
          %450 = dma.done [#allocation13], 16
        $region88: #{tpu_custom_call.1} parent=59 // pred_fallthru
          _
        // Predicated region
        $region89: #{tpu_custom_call.1} parent=59 // pred_check
          %p451 = pneg %p199
        $region90: #{tpu_custom_call.1} parent=59 // pred_check_branch
          %453 = sbr.rel (%p451) target = $region92
        $region91: #{tpu_custom_call.1} parent=59 // pred_region
          %455 = dma.done [#allocation16], 16
        $region92: #{tpu_custom_call.1} parent=59 // pred_fallthru
          _
        %s456 = sand.u32 %s39, 1
        %s457 = scalar_lea.sflag [#allocation4], %s456
        %s458 = sand.u32 %s39, 1
        %s459 = smul.addr %s458, 512
        %s460 = scalar_lea.vmem [#allocation3], %s459
        %p461 = pneg %p52
        %p462 = pneg %p49
        %p463 = pneg %p73
        %p464 = pneg %p70
        %p465 = pneg %p94
        %p466 = pneg %p91
        %p467 = pneg %p115
        %p468 = pneg %p112
        %p469 = pneg %p136
        %p470 = pneg %p133
        %p471 = pneg %p157
        %p472 = pneg %p154
        %p473 = pneg %p178
        %p474 = pneg %p175
        %p475 = pneg %p199
        %p476 = pneg %p196
        %p477 = pneg %p220
        %p478 = pneg %p217
        %p479 = pneg %p241
        %p480 = pneg %p238
        %p481 = pneg %p267
        %p482 = pneg %p264
        %s483 = sand.u32 %s254, 1
        %s484 = scalar_lea.sflag [#allocation5], %s483
        %s485 = sand.u32 %s254, 1
        %s486 = smul.addr %s485, 512
        %s487 = scalar_lea.vmem [#allocation17], %s486
        %v489 = vld [vmem:[%s415] sm:$0xff]
        %v490 = vld [vmem:[%s415 + $0x8] sm:$0xff]
        %v491 = vld [vmem:[%s415 + $0x10] sm:$0xff]
        %v492 = vld [vmem:[%s415 + $0x18] sm:$0xff]
        %v493 = vld [vmem:[%s415 + $0x20] sm:$0xff]
        %v494 = vld [vmem:[%s415 + $0x28] sm:$0xff]
        %v495 = vld [vmem:[%s415 + $0x30] sm:$0xff]
        %v496 = vld [vmem:[%s415 + $0x38] sm:$0xff]
        %v497 = vld [vmem:[%s415 + $0x40] sm:$0xff]
        %v498 = vld [vmem:[%s415 + $0x48] sm:$0xff]
        %v499 = vld [vmem:[%s415 + $0x50] sm:$0xff]
        %v500 = vld [vmem:[%s415 + $0x58] sm:$0xff]
        %v501 = vld [vmem:[%s415 + $0x60] sm:$0xff]
        %v502 = vld [vmem:[%s415 + $0x68] sm:$0xff]
        %v503 = vld [vmem:[%s415 + $0x70] sm:$0xff]
        %v504 = vld [vmem:[%s415 + $0x78] sm:$0xff]
        %v505 = vld [vmem:[%s415 + $0x80] sm:$0xff]
        %v506 = vld [vmem:[%s415 + $0x88] sm:$0xff]
        %v507 = vld [vmem:[%s415 + $0x90] sm:$0xff]
        %v508 = vld [vmem:[%s415 + $0x98] sm:$0xff]
        %v509 = vld [vmem:[%s415 + $0xa0] sm:$0xff]
        %v510 = vld [vmem:[%s415 + $0xa8] sm:$0xff]
        %v511 = vld [vmem:[%s415 + $0xb0] sm:$0xff]
        %v512 = vld [vmem:[%s415 + $0xb8] sm:$0xff]
        %v513 = vld [vmem:[%s415 + $0xc0] sm:$0xff]
        %v514 = vld [vmem:[%s415 + $0xc8] sm:$0xff]
        %v515 = vld [vmem:[%s415 + $0xd0] sm:$0xff]
        %v516 = vld [vmem:[%s415 + $0xd8] sm:$0xff]
        %v517 = vld [vmem:[%s415 + $0xe0] sm:$0xff]
        %v518 = vld [vmem:[%s415 + $0xe8] sm:$0xff]
        %v519 = vld [vmem:[%s415 + $0xf0] sm:$0xff]
        %v520 = vld [vmem:[%s415 + $0xf8] sm:$0xff]
        %v521 = vld [vmem:[%s415 + $0x100] sm:$0xff]
        %v522 = vld [vmem:[%s415 + $0x108] sm:$0xff]
        %v523 = vld [vmem:[%s415 + $0x110] sm:$0xff]
        %v524 = vld [vmem:[%s415 + $0x118] sm:$0xff]
        %v525 = vld [vmem:[%s415 + $0x120] sm:$0xff]
        %v526 = vld [vmem:[%s415 + $0x128] sm:$0xff]
        %v527 = vld [vmem:[%s415 + $0x130] sm:$0xff]
        %v528 = vld [vmem:[%s415 + $0x138] sm:$0xff]
        %v529 = vld [vmem:[%s415 + $0x140] sm:$0xff]
        %v530 = vld [vmem:[%s415 + $0x148] sm:$0xff]
        %v531 = vld [vmem:[%s415 + $0x150] sm:$0xff]
        %v532 = vld [vmem:[%s415 + $0x158] sm:$0xff]
        %v533 = vld [vmem:[%s415 + $0x160] sm:$0xff]
        %v534 = vld [vmem:[%s415 + $0x168] sm:$0xff]
        %v535 = vld [vmem:[%s415 + $0x170] sm:$0xff]
        %v536 = vld [vmem:[%s415 + $0x178] sm:$0xff]
        %v537 = vld [vmem:[%s415 + $0x180] sm:$0xff]
        %v538 = vld [vmem:[%s415 + $0x188] sm:$0xff]
        %v539 = vld [vmem:[%s415 + $0x190] sm:$0xff]
        %v540 = vld [vmem:[%s415 + $0x198] sm:$0xff]
        %v541 = vld [vmem:[%s415 + $0x1a0] sm:$0xff]
        %v542 = vld [vmem:[%s415 + $0x1a8] sm:$0xff]
        %v543 = vld [vmem:[%s415 + $0x1b0] sm:$0xff]
        %v544 = vld [vmem:[%s415 + $0x1b8] sm:$0xff]
        %v545 = vld [vmem:[%s415 + $0x1c0] sm:$0xff]
        %v546 = vld [vmem:[%s415 + $0x1c8] sm:$0xff]
        %v547 = vld [vmem:[%s415 + $0x1d0] sm:$0xff]
        %v548 = vld [vmem:[%s415 + $0x1d8] sm:$0xff]
        %v549 = vld [vmem:[%s415 + $0x1e0] sm:$0xff]
        %v550 = vld [vmem:[%s415 + $0x1e8] sm:$0xff]
        %v551 = vld [vmem:[%s415 + $0x1f0] sm:$0xff]
        %v552 = vld [vmem:[%s415 + $0x1f8] sm:$0xff]
        %v553 = vld [vmem:[#allocation6] sm:$0xf]
        %v554 = vld [vmem:[#allocation6 + $0x4] sm:$0xf]
        %v555 = vld [vmem:[#allocation6 + $0x8] sm:$0xf]
        %v556 = vld [vmem:[#allocation6 + $0xc] sm:$0xf]
        %v557 = vld [vmem:[#allocation6 + $0x10] sm:$0xf]
        %v558 = vld [vmem:[#allocation6 + $0x14] sm:$0xf]
        %v559 = vld [vmem:[#allocation6 + $0x18] sm:$0xf]
        %v560 = vld [vmem:[#allocation6 + $0x1c] sm:$0xf]
        %v561 = vld [vmem:[#allocation6 + $0x20] sm:$0xf]
        %v562 = vld [vmem:[#allocation6 + $0x24] sm:$0xf]
        %v563 = vld [vmem:[#allocation6 + $0x28] sm:$0xf]
        %v564 = vld [vmem:[#allocation6 + $0x2c] sm:$0xf]
        %v565 = vld [vmem:[#allocation6 + $0x30] sm:$0xf]
        %v566 = vld [vmem:[#allocation6 + $0x34] sm:$0xf]
        %v567 = vld [vmem:[#allocation6 + $0x38] sm:$0xf]
        %v568 = vld [vmem:[#allocation6 + $0x3c] sm:$0xf]
        %v569 = vld [vmem:[#allocation6 + $0x40] sm:$0xf]
        %v570 = vld [vmem:[#allocation6 + $0x44] sm:$0xf]
        %v571 = vld [vmem:[#allocation6 + $0x48] sm:$0xf]
        %v572 = vld [vmem:[#allocation6 + $0x4c] sm:$0xf]
        %v573 = vld [vmem:[#allocation6 + $0x50] sm:$0xf]
        %v574 = vld [vmem:[#allocation6 + $0x54] sm:$0xf]
        %v575 = vld [vmem:[#allocation6 + $0x58] sm:$0xf]
        %v576 = vld [vmem:[#allocation6 + $0x5c] sm:$0xf]
        %v577 = vld [vmem:[#allocation6 + $0x60] sm:$0xf]
        %v578 = vld [vmem:[#allocation6 + $0x64] sm:$0xf]
        %v579 = vld [vmem:[#allocation6 + $0x68] sm:$0xf]
        %v580 = vld [vmem:[#allocation6 + $0x6c] sm:$0xf]
        %v581 = vld [vmem:[#allocation6 + $0x70] sm:$0xf]
        %v582 = vld [vmem:[#allocation6 + $0x74] sm:$0xf]
        %v583 = vld [vmem:[#allocation6 + $0x78] sm:$0xf]
        %v584 = vld [vmem:[#allocation6 + $0x7c] sm:$0xf]
        %v585 = vld [vmem:[#allocation6 + $0x80] sm:$0xf]
        %v586 = vld [vmem:[#allocation6 + $0x84] sm:$0xf]
        %v587 = vld [vmem:[#allocation6 + $0x88] sm:$0xf]
        %v588 = vld [vmem:[#allocation6 + $0x8c] sm:$0xf]
        %v589 = vld [vmem:[#allocation6 + $0x90] sm:$0xf]
        %v590 = vld [vmem:[#allocation6 + $0x94] sm:$0xf]
        %v591 = vld [vmem:[#allocation6 + $0x98] sm:$0xf]
        %v592 = vld [vmem:[#allocation6 + $0x9c] sm:$0xf]
        %v593 = vld [vmem:[#allocation6 + $0xa0] sm:$0xf]
        %v594 = vld [vmem:[#allocation6 + $0xa4] sm:$0xf]
        %v595 = vld [vmem:[#allocation6 + $0xa8] sm:$0xf]
        %v596 = vld [vmem:[#allocation6 + $0xac] sm:$0xf]
        %v597 = vld [vmem:[#allocation6 + $0xb0] sm:$0xf]
        %v598 = vld [vmem:[#allocation6 + $0xb4] sm:$0xf]
        %v599 = vld [vmem:[#allocation6 + $0xb8] sm:$0xf]
        %v600 = vld [vmem:[#allocation6 + $0xbc] sm:$0xf]
        %v601 = vld [vmem:[#allocation6 + $0xc0] sm:$0xf]
        %v602 = vld [vmem:[#allocation6 + $0xc4] sm:$0xf]
        %v603 = vld [vmem:[#allocation6 + $0xc8] sm:$0xf]
        %v604 = vld [vmem:[#allocation6 + $0xcc] sm:$0xf]
        %v605 = vld [vmem:[#allocation6 + $0xd0] sm:$0xf]
        %v606 = vld [vmem:[#allocation6 + $0xd4] sm:$0xf]
        %v607 = vld [vmem:[#allocation6 + $0xd8] sm:$0xf]
        %v608 = vld [vmem:[#allocation6 + $0xdc] sm:$0xf]
        %v609 = vld [vmem:[#allocation6 + $0xe0] sm:$0xf]
        %v610 = vld [vmem:[#allocation6 + $0xe4] sm:$0xf]
        %v611 = vld [vmem:[#allocation6 + $0xe8] sm:$0xf]
        %v612 = vld [vmem:[#allocation6 + $0xec] sm:$0xf]
        %v613 = vld [vmem:[#allocation6 + $0xf0] sm:$0xf]
        %v614 = vld [vmem:[#allocation6 + $0xf4] sm:$0xf]
        %v615 = vld [vmem:[#allocation6 + $0xf8] sm:$0xf]
        %v616 = vld [vmem:[#allocation6 + $0xfc] sm:$0xf]
        %v681 = vunpack.c.l.b16 %v489
        %v682 = vunpack.c.h.b16 %v489
        %v683 = vunpack.c.l.b16 %v490
        %v684 = vunpack.c.h.b16 %v490
        %v685 = vunpack.c.l.b16 %v491
        %v686 = vunpack.c.h.b16 %v491
        %v687 = vunpack.c.l.b16 %v492
        %v688 = vunpack.c.h.b16 %v492
        %v689 = vunpack.c.l.b16 %v493
        %v690 = vunpack.c.h.b16 %v493
        %v691 = vunpack.c.l.b16 %v494
        %v692 = vunpack.c.h.b16 %v494
        %v693 = vunpack.c.l.b16 %v495
        %v694 = vunpack.c.h.b16 %v495
        %v695 = vunpack.c.l.b16 %v496
        %v696 = vunpack.c.h.b16 %v496
        %v697 = vunpack.c.l.b16 %v497
        %v698 = vunpack.c.h.b16 %v497
        %v699 = vunpack.c.l.b16 %v498
        %v700 = vunpack.c.h.b16 %v498
        %v701 = vunpack.c.l.b16 %v499
        %v702 = vunpack.c.h.b16 %v499
        %v703 = vunpack.c.l.b16 %v500
        %v704 = vunpack.c.h.b16 %v500
        %v705 = vunpack.c.l.b16 %v501
        %v706 = vunpack.c.h.b16 %v501
        %v707 = vunpack.c.l.b16 %v502
        %v708 = vunpack.c.h.b16 %v502
        %v709 = vunpack.c.l.b16 %v503
        %v710 = vunpack.c.h.b16 %v503
        %v711 = vunpack.c.l.b16 %v504
        %v712 = vunpack.c.h.b16 %v504
        %v713 = vunpack.c.l.b16 %v505
        %v714 = vunpack.c.h.b16 %v505
        %v715 = vunpack.c.l.b16 %v506
        %v716 = vunpack.c.h.b16 %v506
        %v717 = vunpack.c.l.b16 %v507
        %v718 = vunpack.c.h.b16 %v507
        %v719 = vunpack.c.l.b16 %v508
        %v720 = vunpack.c.h.b16 %v508
        %v721 = vunpack.c.l.b16 %v509
        %v722 = vunpack.c.h.b16 %v509
        %v723 = vunpack.c.l.b16 %v510
        %v724 = vunpack.c.h.b16 %v510
        %v725 = vunpack.c.l.b16 %v511
        %v726 = vunpack.c.h.b16 %v511
        %v727 = vunpack.c.l.b16 %v512
        %v728 = vunpack.c.h.b16 %v512
        %v729 = vunpack.c.l.b16 %v513
        %v730 = vunpack.c.h.b16 %v513
        %v731 = vunpack.c.l.b16 %v514
        %v732 = vunpack.c.h.b16 %v514
        %v733 = vunpack.c.l.b16 %v515
        %v734 = vunpack.c.h.b16 %v515
        %v735 = vunpack.c.l.b16 %v516
        %v736 = vunpack.c.h.b16 %v516
        %v737 = vunpack.c.l.b16 %v517
        %v738 = vunpack.c.h.b16 %v517
        %v739 = vunpack.c.l.b16 %v518
        %v740 = vunpack.c.h.b16 %v518
        %v741 = vunpack.c.l.b16 %v519
        %v742 = vunpack.c.h.b16 %v519
        %v743 = vunpack.c.l.b16 %v520
        %v744 = vunpack.c.h.b16 %v520
        %v745 = vunpack.c.l.b16 %v521
        %v746 = vunpack.c.h.b16 %v521
        %v747 = vunpack.c.l.b16 %v522
        %v748 = vunpack.c.h.b16 %v522
        %v749 = vunpack.c.l.b16 %v523
        %v750 = vunpack.c.h.b16 %v523
        %v751 = vunpack.c.l.b16 %v524
        %v752 = vunpack.c.h.b16 %v524
        %v753 = vunpack.c.l.b16 %v525
        %v754 = vunpack.c.h.b16 %v525
        %v755 = vunpack.c.l.b16 %v526
        %v756 = vunpack.c.h.b16 %v526
        %v757 = vunpack.c.l.b16 %v527
        %v758 = vunpack.c.h.b16 %v527
        %v759 = vunpack.c.l.b16 %v528
        %v760 = vunpack.c.h.b16 %v528
        %v761 = vunpack.c.l.b16 %v529
        %v762 = vunpack.c.h.b16 %v529
        %v763 = vunpack.c.l.b16 %v530
        %v764 = vunpack.c.h.b16 %v530
        %v765 = vunpack.c.l.b16 %v531
        %v766 = vunpack.c.h.b16 %v531
        %v767 = vunpack.c.l.b16 %v532
        %v768 = vunpack.c.h.b16 %v532
        %v769 = vunpack.c.l.b16 %v533
        %v770 = vunpack.c.h.b16 %v533
        %v771 = vunpack.c.l.b16 %v534
        %v772 = vunpack.c.h.b16 %v534
        %v773 = vunpack.c.l.b16 %v535
        %v774 = vunpack.c.h.b16 %v535
        %v775 = vunpack.c.l.b16 %v536
        %v776 = vunpack.c.h.b16 %v536
        %v777 = vunpack.c.l.b16 %v537
        %v778 = vunpack.c.h.b16 %v537
        %v779 = vunpack.c.l.b16 %v538
        %v780 = vunpack.c.h.b16 %v538
        %v781 = vunpack.c.l.b16 %v539
        %v782 = vunpack.c.h.b16 %v539
        %v783 = vunpack.c.l.b16 %v540
        %v784 = vunpack.c.h.b16 %v540
        %v785 = vunpack.c.l.b16 %v541
        %v786 = vunpack.c.h.b16 %v541
        %v787 = vunpack.c.l.b16 %v542
        %v788 = vunpack.c.h.b16 %v542
        %v789 = vunpack.c.l.b16 %v543
        %v790 = vunpack.c.h.b16 %v543
        %v791 = vunpack.c.l.b16 %v544
        %v792 = vunpack.c.h.b16 %v544
        %v793 = vunpack.c.l.b16 %v545
        %v794 = vunpack.c.h.b16 %v545
        %v795 = vunpack.c.l.b16 %v546
        %v796 = vunpack.c.h.b16 %v546
        %v797 = vunpack.c.l.b16 %v547
        %v798 = vunpack.c.h.b16 %v547
        %v799 = vunpack.c.l.b16 %v548
        %v800 = vunpack.c.h.b16 %v548
        %v801 = vunpack.c.l.b16 %v549
        %v802 = vunpack.c.h.b16 %v549
        %v803 = vunpack.c.l.b16 %v550
        %v804 = vunpack.c.h.b16 %v550
        %v805 = vunpack.c.l.b16 %v551
        %v806 = vunpack.c.h.b16 %v551
        %v807 = vunpack.c.l.b16 %v552
        %v808 = vunpack.c.h.b16 %v552
        %v809 = vpack.c.b16 %v685, %v681
        %v810 = vpack.c.b16 %v686, %v682
        %v811 = vpack.c.b16 %v687, %v683
        %v812 = vpack.c.b16 %v688, %v684
        %v813 = vpack.c.b16 %v693, %v689
        %v814 = vpack.c.b16 %v694, %v690
        %v815 = vpack.c.b16 %v695, %v691
        %v816 = vpack.c.b16 %v696, %v692
        %v817 = vpack.c.b16 %v701, %v697
        %v818 = vpack.c.b16 %v702, %v698
        %v819 = vpack.c.b16 %v703, %v699
        %v820 = vpack.c.b16 %v704, %v700
        %v821 = vpack.c.b16 %v709, %v705
        %v822 = vpack.c.b16 %v710, %v706
        %v823 = vpack.c.b16 %v711, %v707
        %v824 = vpack.c.b16 %v712, %v708
        %v825 = vpack.c.b16 %v717, %v713
        %v826 = vpack.c.b16 %v718, %v714
        %v827 = vpack.c.b16 %v719, %v715
        %v828 = vpack.c.b16 %v720, %v716
        %v829 = vpack.c.b16 %v725, %v721
        %v830 = vpack.c.b16 %v726, %v722
        %v831 = vpack.c.b16 %v727, %v723
        %v832 = vpack.c.b16 %v728, %v724
        %v833 = vpack.c.b16 %v733, %v729
        %v834 = vpack.c.b16 %v734, %v730
        %v835 = vpack.c.b16 %v735, %v731
        %v836 = vpack.c.b16 %v736, %v732
        %v837 = vpack.c.b16 %v741, %v737
        %v838 = vpack.c.b16 %v742, %v738
        %v839 = vpack.c.b16 %v743, %v739
        %v840 = vpack.c.b16 %v744, %v740
        %v841 = vpack.c.b16 %v749, %v745
        %v842 = vpack.c.b16 %v750, %v746
        %v843 = vpack.c.b16 %v751, %v747
        %v844 = vpack.c.b16 %v752, %v748
        %v845 = vpack.c.b16 %v757, %v753
        %v846 = vpack.c.b16 %v758, %v754
        %v847 = vpack.c.b16 %v759, %v755
        %v848 = vpack.c.b16 %v760, %v756
        %v849 = vpack.c.b16 %v765, %v761
        %v850 = vpack.c.b16 %v766, %v762
        %v851 = vpack.c.b16 %v767, %v763
        %v852 = vpack.c.b16 %v768, %v764
        %v853 = vpack.c.b16 %v773, %v769
        %v854 = vpack.c.b16 %v774, %v770
        %v855 = vpack.c.b16 %v775, %v771
        %v856 = vpack.c.b16 %v776, %v772
        %v857 = vpack.c.b16 %v781, %v777
        %v858 = vpack.c.b16 %v782, %v778
        %v859 = vpack.c.b16 %v783, %v779
        %v860 = vpack.c.b16 %v784, %v780
        %v861 = vpack.c.b16 %v789, %v785
        %v862 = vpack.c.b16 %v790, %v786
        %v863 = vpack.c.b16 %v791, %v787
        %v864 = vpack.c.b16 %v792, %v788
        %v865 = vpack.c.b16 %v797, %v793
        %v866 = vpack.c.b16 %v798, %v794
        %v867 = vpack.c.b16 %v799, %v795
        %v868 = vpack.c.b16 %v800, %v796
        %v869 = vpack.c.b16 %v805, %v801
        %v870 = vpack.c.b16 %v806, %v802
        %v871 = vpack.c.b16 %v807, %v803
        %v872 = vpack.c.b16 %v808, %v804
        %v1001 = vunpack.c.l.b16 %v553
        %v1002 = vunpack.c.l.b16 %v554
        %v1003 = vunpack.c.l.b16 %v555
        %v1004 = vunpack.c.l.b16 %v556
        %v1005 = vunpack.c.l.b16 %v557
        %v1006 = vunpack.c.l.b16 %v558
        %v1007 = vunpack.c.l.b16 %v559
        %v1008 = vunpack.c.l.b16 %v560
        %v1009 = vunpack.c.l.b16 %v561
        %v1010 = vunpack.c.l.b16 %v562
        %v1011 = vunpack.c.l.b16 %v563
        %v1012 = vunpack.c.l.b16 %v564
        %v1013 = vunpack.c.l.b16 %v565
        %v1014 = vunpack.c.l.b16 %v566
        %v1015 = vunpack.c.l.b16 %v567
        %v1016 = vunpack.c.l.b16 %v568
        %v1017 = vunpack.c.l.b16 %v569
        %v1018 = vunpack.c.l.b16 %v570
        %v1019 = vunpack.c.l.b16 %v571
        %v1020 = vunpack.c.l.b16 %v572
        %v1021 = vunpack.c.l.b16 %v573
        %v1022 = vunpack.c.l.b16 %v574
        %v1023 = vunpack.c.l.b16 %v575
        %v1024 = vunpack.c.l.b16 %v576
        %v1025 = vunpack.c.l.b16 %v577
        %v1026 = vunpack.c.l.b16 %v578
        %v1027 = vunpack.c.l.b16 %v579
        %v1028 = vunpack.c.l.b16 %v580
        %v1029 = vunpack.c.l.b16 %v581
        %v1030 = vunpack.c.l.b16 %v582
        %v1031 = vunpack.c.l.b16 %v583
        %v1032 = vunpack.c.l.b16 %v584
        %v1033 = vunpack.c.l.b16 %v585
        %v1034 = vunpack.c.l.b16 %v586
        %v1035 = vunpack.c.l.b16 %v587
        %v1036 = vunpack.c.l.b16 %v588
        %v1037 = vunpack.c.l.b16 %v589
        %v1038 = vunpack.c.l.b16 %v590
        %v1039 = vunpack.c.l.b16 %v591
        %v1040 = vunpack.c.l.b16 %v592
        %v1041 = vunpack.c.l.b16 %v593
        %v1042 = vunpack.c.l.b16 %v594
        %v1043 = vunpack.c.l.b16 %v595
        %v1044 = vunpack.c.l.b16 %v596
        %v1045 = vunpack.c.l.b16 %v597
        %v1046 = vunpack.c.l.b16 %v598
        %v1047 = vunpack.c.l.b16 %v599
        %v1048 = vunpack.c.l.b16 %v600
        %v1049 = vunpack.c.l.b16 %v601
        %v1050 = vunpack.c.l.b16 %v602
        %v1051 = vunpack.c.l.b16 %v603
        %v1052 = vunpack.c.l.b16 %v604
        %v1053 = vunpack.c.l.b16 %v605
        %v1054 = vunpack.c.l.b16 %v606
        %v1055 = vunpack.c.l.b16 %v607
        %v1056 = vunpack.c.l.b16 %v608
        %v1057 = vunpack.c.l.b16 %v609
        %v1058 = vunpack.c.l.b16 %v610
        %v1059 = vunpack.c.l.b16 %v611
        %v1060 = vunpack.c.l.b16 %v612
        %v1061 = vunpack.c.l.b16 %v613
        %v1062 = vunpack.c.l.b16 %v614
        %v1063 = vunpack.c.l.b16 %v615
        %v1064 = vunpack.c.l.b16 %v616
        %v1065 = vpack.c.b16 %v1002, %v1001
        %v1066 = vpack.c.b16 %v1004, %v1003
        %v1067 = vpack.c.b16 %v1006, %v1005
        %v1068 = vpack.c.b16 %v1008, %v1007
        %v1069 = vpack.c.b16 %v1010, %v1009
        %v1070 = vpack.c.b16 %v1012, %v1011
        %v1071 = vpack.c.b16 %v1014, %v1013
        %v1072 = vpack.c.b16 %v1016, %v1015
        %v1073 = vpack.c.b16 %v1018, %v1017
        %v1074 = vpack.c.b16 %v1020, %v1019
        %v1075 = vpack.c.b16 %v1022, %v1021
        %v1076 = vpack.c.b16 %v1024, %v1023
        %v1077 = vpack.c.b16 %v1026, %v1025
        %v1078 = vpack.c.b16 %v1028, %v1027
        %v1079 = vpack.c.b16 %v1030, %v1029
        %v1080 = vpack.c.b16 %v1032, %v1031
        %v1081 = vpack.c.b16 %v1034, %v1033
        %v1082 = vpack.c.b16 %v1036, %v1035
        %v1083 = vpack.c.b16 %v1038, %v1037
        %v1084 = vpack.c.b16 %v1040, %v1039
        %v1085 = vpack.c.b16 %v1042, %v1041
        %v1086 = vpack.c.b16 %v1044, %v1043
        %v1087 = vpack.c.b16 %v1046, %v1045
        %v1088 = vpack.c.b16 %v1048, %v1047
        %v1089 = vpack.c.b16 %v1050, %v1049
        %v1090 = vpack.c.b16 %v1052, %v1051
        %v1091 = vpack.c.b16 %v1054, %v1053
        %v1092 = vpack.c.b16 %v1056, %v1055
        %v1093 = vpack.c.b16 %v1058, %v1057
        %v1094 = vpack.c.b16 %v1060, %v1059
        %v1095 = vpack.c.b16 %v1062, %v1061
        %v1096 = vpack.c.b16 %v1064, %v1063
        %1129 = vmatpush.bf16.msra.mxu0 %v1072
        %1130 = vmatpush.bf16.msra.mxu0 %v1071
        %1131 = vmatpush.bf16.msra.mxu0 %v1070
        %1132 = vmatpush.bf16.msra.mxu0 %v1069
        %1133 = vmatpush.bf16.msra.mxu0 %v1068
        %1134 = vmatpush.bf16.msra.mxu0 %v1067
        %1135 = vmatpush.bf16.msra.mxu0 %v1066
        %1136 = vmatpush.bf16.msra.mxu0 %v1065
        %1137 = vmatmul.bf16.gmra.mxu0 %v809
        %v1138 = vpop.f32.mrf.mxu0
        %v1139 = vadd.f32 0.0, %v1138
        %v1140 = vpop.f32.mrf.mxu0
        %v1141 = vadd.f32 0.0, %v1140
        %1142 = vmatmul.bf16.gmra.mxu0 %v813
        %v1143 = vpop.f32.mrf.mxu0
        %v1144 = vadd.f32 0.0, %v1143
        %v1145 = vpop.f32.mrf.mxu0
        %v1146 = vadd.f32 0.0, %v1145
        %1147 = vmatmul.bf16.gmra.mxu0 %v817
        %v1148 = vpop.f32.mrf.mxu0
        %v1149 = vadd.f32 0.0, %v1148
        %v1150 = vpop.f32.mrf.mxu0
        %v1151 = vadd.f32 0.0, %v1150
        %1152 = vmatmul.bf16.gmra.mxu0 %v821
        %v1153 = vpop.f32.mrf.mxu0
        %v1154 = vadd.f32 0.0, %v1153
        %v1155 = vpop.f32.mrf.mxu0
        %v1156 = vadd.f32 0.0, %v1155
        %1157 = vmatmul.bf16.gmra.mxu0 %v825
        %v1158 = vpop.f32.mrf.mxu0
        %v1159 = vadd.f32 0.0, %v1158
        %v1160 = vpop.f32.mrf.mxu0
        %v1161 = vadd.f32 0.0, %v1160
        %1162 = vmatmul.bf16.gmra.mxu0 %v829
        %v1163 = vpop.f32.mrf.mxu0
        %v1164 = vadd.f32 0.0, %v1163
        %v1165 = vpop.f32.mrf.mxu0
        %v1166 = vadd.f32 0.0, %v1165
        %1167 = vmatmul.bf16.gmra.mxu0 %v833
        %v1168 = vpop.f32.mrf.mxu0
        %v1169 = vadd.f32 0.0, %v1168
        %v1170 = vpop.f32.mrf.mxu0
        %v1171 = vadd.f32 0.0, %v1170
        %1172 = vmatmul.bf16.gmra.mxu0 %v837
        %v1173 = vpop.f32.mrf.mxu0
        %v1174 = vadd.f32 0.0, %v1173
        %v1175 = vpop.f32.mrf.mxu0
        %v1176 = vadd.f32 0.0, %v1175
        %1177 = vmatmul.bf16.gmra.mxu0 %v841
        %v1178 = vpop.f32.mrf.mxu0
        %v1179 = vadd.f32 0.0, %v1178
        %v1180 = vpop.f32.mrf.mxu0
        %v1181 = vadd.f32 0.0, %v1180
        %1182 = vmatmul.bf16.gmra.mxu0 %v845
        %v1183 = vpop.f32.mrf.mxu0
        %v1184 = vadd.f32 0.0, %v1183
        %v1185 = vpop.f32.mrf.mxu0
        %v1186 = vadd.f32 0.0, %v1185
        %1187 = vmatmul.bf16.gmra.mxu0 %v849
        %v1188 = vpop.f32.mrf.mxu0
        %v1189 = vadd.f32 0.0, %v1188
        %v1190 = vpop.f32.mrf.mxu0
        %v1191 = vadd.f32 0.0, %v1190
        %1192 = vmatmul.bf16.gmra.mxu0 %v853
        %v1193 = vpop.f32.mrf.mxu0
        %v1194 = vadd.f32 0.0, %v1193
        %v1195 = vpop.f32.mrf.mxu0
        %v1196 = vadd.f32 0.0, %v1195
        %1197 = vmatmul.bf16.gmra.mxu0 %v857
        %v1198 = vpop.f32.mrf.mxu0
        %v1199 = vadd.f32 0.0, %v1198
        %v1200 = vpop.f32.mrf.mxu0
        %v1201 = vadd.f32 0.0, %v1200
        %1202 = vmatmul.bf16.gmra.mxu0 %v861
        %v1203 = vpop.f32.mrf.mxu0
        %v1204 = vadd.f32 0.0, %v1203
        %v1205 = vpop.f32.mrf.mxu0
        %v1206 = vadd.f32 0.0, %v1205
        %1207 = vmatmul.bf16.gmra.mxu0 %v865
        %v1208 = vpop.f32.mrf.mxu0
        %v1209 = vadd.f32 0.0, %v1208
        %v1210 = vpop.f32.mrf.mxu0
        %v1211 = vadd.f32 0.0, %v1210
        %1212 = vmatmul.bf16.gmra.mxu0 %v869
        %v1213 = vpop.f32.mrf.mxu0
        %v1214 = vadd.f32 0.0, %v1213
        %v1215 = vpop.f32.mrf.mxu0
        %v1216 = vadd.f32 0.0, %v1215
        %1217 = vdwg.mxu0
        %1218 = vmatpush.bf16.msra.mxu0 %v1080
        %1219 = vmatpush.bf16.msra.mxu0 %v1079
        %1220 = vmatpush.bf16.msra.mxu0 %v1078
        %1221 = vmatpush.bf16.msra.mxu0 %v1077
        %1222 = vmatpush.bf16.msra.mxu0 %v1076
        %1223 = vmatpush.bf16.msra.mxu0 %v1075
        %1224 = vmatpush.bf16.msra.mxu0 %v1074
        %1225 = vmatpush.bf16.msra.mxu0 %v1073
        %1226 = vmatmul.bf16.gmra.mxu0 %v810
        %v1227 = vpop.f32.mrf.mxu0
        %v1228 = vadd.f32 %v1139, %v1227
        %v1229 = vpop.f32.mrf.mxu0
        %v1230 = vadd.f32 %v1141, %v1229
        %1231 = vmatmul.bf16.gmra.mxu0 %v814
        %v1232 = vpop.f32.mrf.mxu0
        %v1233 = vadd.f32 %v1144, %v1232
        %v1234 = vpop.f32.mrf.mxu0
        %v1235 = vadd.f32 %v1146, %v1234
        %1236 = vmatmul.bf16.gmra.mxu0 %v818
        %v1237 = vpop.f32.mrf.mxu0
        %v1238 = vadd.f32 %v1149, %v1237
        %v1239 = vpop.f32.mrf.mxu0
        %v1240 = vadd.f32 %v1151, %v1239
        %1241 = vmatmul.bf16.gmra.mxu0 %v822
        %v1242 = vpop.f32.mrf.mxu0
        %v1243 = vadd.f32 %v1154, %v1242
        %v1244 = vpop.f32.mrf.mxu0
        %v1245 = vadd.f32 %v1156, %v1244
        %1246 = vmatmul.bf16.gmra.mxu0 %v826
        %v1247 = vpop.f32.mrf.mxu0
        %v1248 = vadd.f32 %v1159, %v1247
        %v1249 = vpop.f32.mrf.mxu0
        %v1250 = vadd.f32 %v1161, %v1249
        %1251 = vmatmul.bf16.gmra.mxu0 %v830
        %v1252 = vpop.f32.mrf.mxu0
        %v1253 = vadd.f32 %v1164, %v1252
        %v1254 = vpop.f32.mrf.mxu0
        %v1255 = vadd.f32 %v1166, %v1254
        %1256 = vmatmul.bf16.gmra.mxu0 %v834
        %v1257 = vpop.f32.mrf.mxu0
        %v1258 = vadd.f32 %v1169, %v1257
        %v1259 = vpop.f32.mrf.mxu0
        %v1260 = vadd.f32 %v1171, %v1259
        %1261 = vmatmul.bf16.gmra.mxu0 %v838
        %v1262 = vpop.f32.mrf.mxu0
        %v1263 = vadd.f32 %v1174, %v1262
        %v1264 = vpop.f32.mrf.mxu0
        %v1265 = vadd.f32 %v1176, %v1264
        %1266 = vmatmul.bf16.gmra.mxu0 %v842
        %v1267 = vpop.f32.mrf.mxu0
        %v1268 = vadd.f32 %v1179, %v1267
        %v1269 = vpop.f32.mrf.mxu0
        %v1270 = vadd.f32 %v1181, %v1269
        %1271 = vmatmul.bf16.gmra.mxu0 %v846
        %v1272 = vpop.f32.mrf.mxu0
        %v1273 = vadd.f32 %v1184, %v1272
        %v1274 = vpop.f32.mrf.mxu0
        %v1275 = vadd.f32 %v1186, %v1274
        %1276 = vmatmul.bf16.gmra.mxu0 %v850
        %v1277 = vpop.f32.mrf.mxu0
        %v1278 = vadd.f32 %v1189, %v1277
        %v1279 = vpop.f32.mrf.mxu0
        %v1280 = vadd.f32 %v1191, %v1279
        %1281 = vmatmul.bf16.gmra.mxu0 %v854
        %v1282 = vpop.f32.mrf.mxu0
        %v1283 = vadd.f32 %v1194, %v1282
        %v1284 = vpop.f32.mrf.mxu0
        %v1285 = vadd.f32 %v1196, %v1284
        %1286 = vmatmul.bf16.gmra.mxu0 %v858
        %v1287 = vpop.f32.mrf.mxu0
        %v1288 = vadd.f32 %v1199, %v1287
        %v1289 = vpop.f32.mrf.mxu0
        %v1290 = vadd.f32 %v1201, %v1289
        %1291 = vmatmul.bf16.gmra.mxu0 %v862
        %v1292 = vpop.f32.mrf.mxu0
        %v1293 = vadd.f32 %v1204, %v1292
        %v1294 = vpop.f32.mrf.mxu0
        %v1295 = vadd.f32 %v1206, %v1294
        %1296 = vmatmul.bf16.gmra.mxu0 %v866
        %v1297 = vpop.f32.mrf.mxu0
        %v1298 = vadd.f32 %v1209, %v1297
        %v1299 = vpop.f32.mrf.mxu0
        %v1300 = vadd.f32 %v1211, %v1299
        %1301 = vmatmul.bf16.gmra.mxu0 %v870
        %v1302 = vpop.f32.mrf.mxu0
        %v1303 = vadd.f32 %v1214, %v1302
        %v1304 = vpop.f32.mrf.mxu0
        %v1305 = vadd.f32 %v1216, %v1304
        %1306 = vdwg.mxu0
        %1307 = vmatpush.bf16.msra.mxu0 %v1088
        %1308 = vmatpush.bf16.msra.mxu0 %v1087
        %1309 = vmatpush.bf16.msra.mxu0 %v1086
        %1310 = vmatpush.bf16.msra.mxu0 %v1085
        %1311 = vmatpush.bf16.msra.mxu0 %v1084
        %1312 = vmatpush.bf16.msra.mxu0 %v1083
        %1313 = vmatpush.bf16.msra.mxu0 %v1082
        %1314 = vmatpush.bf16.msra.mxu0 %v1081
        %1315 = vmatmul.bf16.gmra.mxu0 %v811
        %v1316 = vpop.f32.mrf.mxu0
        %v1317 = vadd.f32 %v1228, %v1316
        %v1318 = vpop.f32.mrf.mxu0
        %v1319 = vadd.f32 %v1230, %v1318
        %1320 = vmatmul.bf16.gmra.mxu0 %v815
        %v1321 = vpop.f32.mrf.mxu0
        %v1322 = vadd.f32 %v1233, %v1321
        %v1323 = vpop.f32.mrf.mxu0
        %v1324 = vadd.f32 %v1235, %v1323
        %1325 = vmatmul.bf16.gmra.mxu0 %v819
        %v1326 = vpop.f32.mrf.mxu0
        %v1327 = vadd.f32 %v1238, %v1326
        %v1328 = vpop.f32.mrf.mxu0
        %v1329 = vadd.f32 %v1240, %v1328
        %1330 = vmatmul.bf16.gmra.mxu0 %v823
        %v1331 = vpop.f32.mrf.mxu0
        %v1332 = vadd.f32 %v1243, %v1331
        %v1333 = vpop.f32.mrf.mxu0
        %v1334 = vadd.f32 %v1245, %v1333
        %1335 = vmatmul.bf16.gmra.mxu0 %v827
        %v1336 = vpop.f32.mrf.mxu0
        %v1337 = vadd.f32 %v1248, %v1336
        %v1338 = vpop.f32.mrf.mxu0
        %v1339 = vadd.f32 %v1250, %v1338
        %1340 = vmatmul.bf16.gmra.mxu0 %v831
        %v1341 = vpop.f32.mrf.mxu0
        %v1342 = vadd.f32 %v1253, %v1341
        %v1343 = vpop.f32.mrf.mxu0
        %v1344 = vadd.f32 %v1255, %v1343
        %1345 = vmatmul.bf16.gmra.mxu0 %v835
        %v1346 = vpop.f32.mrf.mxu0
        %v1347 = vadd.f32 %v1258, %v1346
        %v1348 = vpop.f32.mrf.mxu0
        %v1349 = vadd.f32 %v1260, %v1348
        %1350 = vmatmul.bf16.gmra.mxu0 %v839
        %v1351 = vpop.f32.mrf.mxu0
        %v1352 = vadd.f32 %v1263, %v1351
        %v1353 = vpop.f32.mrf.mxu0
        %v1354 = vadd.f32 %v1265, %v1353
        %1355 = vmatmul.bf16.gmra.mxu0 %v843
        %v1356 = vpop.f32.mrf.mxu0
        %v1357 = vadd.f32 %v1268, %v1356
        %v1358 = vpop.f32.mrf.mxu0
        %v1359 = vadd.f32 %v1270, %v1358
        %1360 = vmatmul.bf16.gmra.mxu0 %v847
        %v1361 = vpop.f32.mrf.mxu0
        %v1362 = vadd.f32 %v1273, %v1361
        %v1363 = vpop.f32.mrf.mxu0
        %v1364 = vadd.f32 %v1275, %v1363
        %1365 = vmatmul.bf16.gmra.mxu0 %v851
        %v1366 = vpop.f32.mrf.mxu0
        %v1367 = vadd.f32 %v1278, %v1366
        %v1368 = vpop.f32.mrf.mxu0
        %v1369 = vadd.f32 %v1280, %v1368
        %1370 = vmatmul.bf16.gmra.mxu0 %v855
        %v1371 = vpop.f32.mrf.mxu0
        %v1372 = vadd.f32 %v1283, %v1371
        %v1373 = vpop.f32.mrf.mxu0
        %v1374 = vadd.f32 %v1285, %v1373
        %1375 = vmatmul.bf16.gmra.mxu0 %v859
        %v1376 = vpop.f32.mrf.mxu0
        %v1377 = vadd.f32 %v1288, %v1376
        %v1378 = vpop.f32.mrf.mxu0
        %v1379 = vadd.f32 %v1290, %v1378
        %1380 = vmatmul.bf16.gmra.mxu0 %v863
        %v1381 = vpop.f32.mrf.mxu0
        %v1382 = vadd.f32 %v1293, %v1381
        %v1383 = vpop.f32.mrf.mxu0
        %v1384 = vadd.f32 %v1295, %v1383
        %1385 = vmatmul.bf16.gmra.mxu0 %v867
        %v1386 = vpop.f32.mrf.mxu0
        %v1387 = vadd.f32 %v1298, %v1386
        %v1388 = vpop.f32.mrf.mxu0
        %v1389 = vadd.f32 %v1300, %v1388
        %1390 = vmatmul.bf16.gmra.mxu0 %v871
        %v1391 = vpop.f32.mrf.mxu0
        %v1392 = vadd.f32 %v1303, %v1391
        %v1393 = vpop.f32.mrf.mxu0
        %v1394 = vadd.f32 %v1305, %v1393
        %1395 = vdwg.mxu0
        %1396 = vmatpush.bf16.msra.mxu0 %v1096
        %1397 = vmatpush.bf16.msra.mxu0 %v1095
        %1398 = vmatpush.bf16.msra.mxu0 %v1094
        %1399 = vmatpush.bf16.msra.mxu0 %v1093
        %1400 = vmatpush.bf16.msra.mxu0 %v1092
        %1401 = vmatpush.bf16.msra.mxu0 %v1091
        %1402 = vmatpush.bf16.msra.mxu0 %v1090
        %1403 = vmatpush.bf16.msra.mxu0 %v1089
        %1404 = vmatmul.bf16.gmra.mxu0 %v812
        %v1405 = vpop.f32.mrf.mxu0
        %v1406 = vadd.f32 %v1317, %v1405
        %v1407 = vpop.f32.mrf.mxu0
        %v1408 = vadd.f32 %v1319, %v1407
        %1409 = vmatmul.bf16.gmra.mxu0 %v816
        %v1410 = vpop.f32.mrf.mxu0
        %v1411 = vadd.f32 %v1322, %v1410
        %v1412 = vpop.f32.mrf.mxu0
        %v1413 = vadd.f32 %v1324, %v1412
        %1414 = vmatmul.bf16.gmra.mxu0 %v820
        %v1415 = vpop.f32.mrf.mxu0
        %v1416 = vadd.f32 %v1327, %v1415
        %v1417 = vpop.f32.mrf.mxu0
        %v1418 = vadd.f32 %v1329, %v1417
        %1419 = vmatmul.bf16.gmra.mxu0 %v824
        %v1420 = vpop.f32.mrf.mxu0
        %v1421 = vadd.f32 %v1332, %v1420
        %v1422 = vpop.f32.mrf.mxu0
        %v1423 = vadd.f32 %v1334, %v1422
        %1424 = vmatmul.bf16.gmra.mxu0 %v828
        %v1425 = vpop.f32.mrf.mxu0
        %v1426 = vadd.f32 %v1337, %v1425
        %v1427 = vpop.f32.mrf.mxu0
        %v1428 = vadd.f32 %v1339, %v1427
        %1429 = vmatmul.bf16.gmra.mxu0 %v832
        %v1430 = vpop.f32.mrf.mxu0
        %v1431 = vadd.f32 %v1342, %v1430
        %v1432 = vpop.f32.mrf.mxu0
        %v1433 = vadd.f32 %v1344, %v1432
        %1434 = vmatmul.bf16.gmra.mxu0 %v836
        %v1435 = vpop.f32.mrf.mxu0
        %v1436 = vadd.f32 %v1347, %v1435
        %v1437 = vpop.f32.mrf.mxu0
        %v1438 = vadd.f32 %v1349, %v1437
        %1439 = vmatmul.bf16.gmra.mxu0 %v840
        %v1440 = vpop.f32.mrf.mxu0
        %v1441 = vadd.f32 %v1352, %v1440
        %v1442 = vpop.f32.mrf.mxu0
        %v1443 = vadd.f32 %v1354, %v1442
        %1444 = vmatmul.bf16.gmra.mxu0 %v844
        %v1445 = vpop.f32.mrf.mxu0
        %v1446 = vadd.f32 %v1357, %v1445
        %v1447 = vpop.f32.mrf.mxu0
        %v1448 = vadd.f32 %v1359, %v1447
        %1449 = vmatmul.bf16.gmra.mxu0 %v848
        %v1450 = vpop.f32.mrf.mxu0
        %v1451 = vadd.f32 %v1362, %v1450
        %v1452 = vpop.f32.mrf.mxu0
        %v1453 = vadd.f32 %v1364, %v1452
        %1454 = vmatmul.bf16.gmra.mxu0 %v852
        %v1455 = vpop.f32.mrf.mxu0
        %v1456 = vadd.f32 %v1367, %v1455
        %v1457 = vpop.f32.mrf.mxu0
        %v1458 = vadd.f32 %v1369, %v1457
        %1459 = vmatmul.bf16.gmra.mxu0 %v856
        %v1460 = vpop.f32.mrf.mxu0
        %v1461 = vadd.f32 %v1372, %v1460
        %v1462 = vpop.f32.mrf.mxu0
        %v1463 = vadd.f32 %v1374, %v1462
        %1464 = vmatmul.bf16.gmra.mxu0 %v860
        %v1465 = vpop.f32.mrf.mxu0
        %v1466 = vadd.f32 %v1377, %v1465
        %v1467 = vpop.f32.mrf.mxu0
        %v1468 = vadd.f32 %v1379, %v1467
        %1469 = vmatmul.bf16.gmra.mxu0 %v864
        %v1470 = vpop.f32.mrf.mxu0
        %v1471 = vadd.f32 %v1382, %v1470
        %v1472 = vpop.f32.mrf.mxu0
        %v1473 = vadd.f32 %v1384, %v1472
        %1474 = vmatmul.bf16.gmra.mxu0 %v868
        %v1475 = vpop.f32.mrf.mxu0
        %v1476 = vadd.f32 %v1387, %v1475
        %v1477 = vpop.f32.mrf.mxu0
        %v1478 = vadd.f32 %v1389, %v1477
        %1479 = vmatmul.bf16.gmra.mxu0 %v872
        %v1480 = vpop.f32.mrf.mxu0
        %v1481 = vadd.f32 %v1392, %v1480
        %v1482 = vpop.f32.mrf.mxu0
        %v1483 = vadd.f32 %v1394, %v1482
        %1484 = vdwg.mxu0
        %v1485 = vld [vmem:[#allocation11] sm:$0x1]
        %v1487 = vperm.slane %v1485, 0
        %v1489 = vmul.f32 %v1406, %v1487
        %v1490 = vmul.f32 %v1408, %v1487
        %v1491 = vmul.f32 %v1411, %v1487
        %v1492 = vmul.f32 %v1413, %v1487
        %v1493 = vmul.f32 %v1416, %v1487
        %v1494 = vmul.f32 %v1418, %v1487
        %v1495 = vmul.f32 %v1421, %v1487
        %v1496 = vmul.f32 %v1423, %v1487
        %v1497 = vmul.f32 %v1426, %v1487
        %v1498 = vmul.f32 %v1428, %v1487
        %v1499 = vmul.f32 %v1431, %v1487
        %v1500 = vmul.f32 %v1433, %v1487
        %v1501 = vmul.f32 %v1436, %v1487
        %v1502 = vmul.f32 %v1438, %v1487
        %v1503 = vmul.f32 %v1441, %v1487
        %v1504 = vmul.f32 %v1443, %v1487
        %v1505 = vmul.f32 %v1446, %v1487
        %v1506 = vmul.f32 %v1448, %v1487
        %v1507 = vmul.f32 %v1451, %v1487
        %v1508 = vmul.f32 %v1453, %v1487
        %v1509 = vmul.f32 %v1456, %v1487
        %v1510 = vmul.f32 %v1458, %v1487
        %v1511 = vmul.f32 %v1461, %v1487
        %v1512 = vmul.f32 %v1463, %v1487
        %v1513 = vmul.f32 %v1466, %v1487
        %v1514 = vmul.f32 %v1468, %v1487
        %v1515 = vmul.f32 %v1471, %v1487
        %v1516 = vmul.f32 %v1473, %v1487
        %v1517 = vmul.f32 %v1476, %v1487
        %v1518 = vmul.f32 %v1478, %v1487
        %v1519 = vmul.f32 %v1481, %v1487
        %v1520 = vmul.f32 %v1483, %v1487
        %v1521 = vld [vmem:[#allocation12] sm:$0x1]
        %v1523 = vperm.slane %v1521, 0
        %v1525 = vadd.f32 %v1489, %v1523
        %v1526 = vadd.f32 %v1490, %v1523
        %v1527 = vadd.f32 %v1491, %v1523
        %v1528 = vadd.f32 %v1492, %v1523
        %v1529 = vadd.f32 %v1493, %v1523
        %v1530 = vadd.f32 %v1494, %v1523
        %v1531 = vadd.f32 %v1495, %v1523
        %v1532 = vadd.f32 %v1496, %v1523
        %v1533 = vadd.f32 %v1497, %v1523
        %v1534 = vadd.f32 %v1498, %v1523
        %v1535 = vadd.f32 %v1499, %v1523
        %v1536 = vadd.f32 %v1500, %v1523
        %v1537 = vadd.f32 %v1501, %v1523
        %v1538 = vadd.f32 %v1502, %v1523
        %v1539 = vadd.f32 %v1503, %v1523
        %v1540 = vadd.f32 %v1504, %v1523
        %v1541 = vadd.f32 %v1505, %v1523
        %v1542 = vadd.f32 %v1506, %v1523
        %v1543 = vadd.f32 %v1507, %v1523
        %v1544 = vadd.f32 %v1508, %v1523
        %v1545 = vadd.f32 %v1509, %v1523
        %v1546 = vadd.f32 %v1510, %v1523
        %v1547 = vadd.f32 %v1511, %v1523
        %v1548 = vadd.f32 %v1512, %v1523
        %v1549 = vadd.f32 %v1513, %v1523
        %v1550 = vadd.f32 %v1514, %v1523
        %v1551 = vadd.f32 %v1515, %v1523
        %v1552 = vadd.f32 %v1516, %v1523
        %v1553 = vadd.f32 %v1517, %v1523
        %v1554 = vadd.f32 %v1518, %v1523
        %v1555 = vadd.f32 %v1519, %v1523
        %v1556 = vadd.f32 %v1520, %v1523
        %v1557 = vmax.f32 %v1525, 0.0
        %v1558 = vmax.f32 %v1526, 0.0
        %v1559 = vmax.f32 %v1527, 0.0
        %v1560 = vmax.f32 %v1528, 0.0
        %v1561 = vmax.f32 %v1529, 0.0
        %v1562 = vmax.f32 %v1530, 0.0
        %v1563 = vmax.f32 %v1531, 0.0
        %v1564 = vmax.f32 %v1532, 0.0
        %v1565 = vmax.f32 %v1533, 0.0
        %v1566 = vmax.f32 %v1534, 0.0
        %v1567 = vmax.f32 %v1535, 0.0
        %v1568 = vmax.f32 %v1536, 0.0
        %v1569 = vmax.f32 %v1537, 0.0
        %v1570 = vmax.f32 %v1538, 0.0
        %v1571 = vmax.f32 %v1539, 0.0
        %v1572 = vmax.f32 %v1540, 0.0
        %v1573 = vmax.f32 %v1541, 0.0
        %v1574 = vmax.f32 %v1542, 0.0
        %v1575 = vmax.f32 %v1543, 0.0
        %v1576 = vmax.f32 %v1544, 0.0
        %v1577 = vmax.f32 %v1545, 0.0
        %v1578 = vmax.f32 %v1546, 0.0
        %v1579 = vmax.f32 %v1547, 0.0
        %v1580 = vmax.f32 %v1548, 0.0
        %v1581 = vmax.f32 %v1549, 0.0
        %v1582 = vmax.f32 %v1550, 0.0
        %v1583 = vmax.f32 %v1551, 0.0
        %v1584 = vmax.f32 %v1552, 0.0
        %v1585 = vmax.f32 %v1553, 0.0
        %v1586 = vmax.f32 %v1554, 0.0
        %v1587 = vmax.f32 %v1555, 0.0
        %v1588 = vmax.f32 %v1556, 0.0
        %v1589 = vpack.c.bf16 %v1557, %v1557
        %v1590 = vpack.c.bf16 %v1558, %v1558
        %v1591 = vpack.c.bf16 %v1559, %v1559
        %v1592 = vpack.c.bf16 %v1560, %v1560
        %v1593 = vpack.c.bf16 %v1561, %v1561
        %v1594 = vpack.c.bf16 %v1562, %v1562
        %v1595 = vpack.c.bf16 %v1563, %v1563
        %v1596 = vpack.c.bf16 %v1564, %v1564
        %v1597 = vpack.c.bf16 %v1565, %v1565
        %v1598 = vpack.c.bf16 %v1566, %v1566
        %v1599 = vpack.c.bf16 %v1567, %v1567
        %v1600 = vpack.c.bf16 %v1568, %v1568
        %v1601 = vpack.c.bf16 %v1569, %v1569
        %v1602 = vpack.c.bf16 %v1570, %v1570
        %v1603 = vpack.c.bf16 %v1571, %v1571
        %v1604 = vpack.c.bf16 %v1572, %v1572
        %v1605 = vpack.c.bf16 %v1573, %v1573
        %v1606 = vpack.c.bf16 %v1574, %v1574
        %v1607 = vpack.c.bf16 %v1575, %v1575
        %v1608 = vpack.c.bf16 %v1576, %v1576
        %v1609 = vpack.c.bf16 %v1577, %v1577
        %v1610 = vpack.c.bf16 %v1578, %v1578
        %v1611 = vpack.c.bf16 %v1579, %v1579
        %v1612 = vpack.c.bf16 %v1580, %v1580
        %v1613 = vpack.c.bf16 %v1581, %v1581
        %v1614 = vpack.c.bf16 %v1582, %v1582
        %v1615 = vpack.c.bf16 %v1583, %v1583
        %v1616 = vpack.c.bf16 %v1584, %v1584
        %v1617 = vpack.c.bf16 %v1585, %v1585
        %v1618 = vpack.c.bf16 %v1586, %v1586
        %v1619 = vpack.c.bf16 %v1587, %v1587
        %v1620 = vpack.c.bf16 %v1588, %v1588
        %1621 = vst [vmem:[#allocation2] sm:$0xff] 0
        %1622 = vst [vmem:[#allocation2 + $0x8] sm:$0xf] 0
        %1623 = vst [vmem:[#allocation2 + $0xc] sm:$0xff] 0
        %1624 = vst [vmem:[#allocation2 + $0x14] sm:$0xf] 0
        %vm1625 = vcmask 1040384
        %vm1626 = vsmask.f32 256
        %vm1627 = vmand %vm1625, %vm1626
        %vm1628 = vcmask 1044484
        %vm1629 = vsmask.f32 4352
        %vm1630 = vmand %vm1628, %vm1629
        %vm1631 = vmor %vm1630, %vm1627
        %v1632 = vld [vmem:[#allocation2 + $0x18] sm:$0x11]
        %v1633 = vsel %vm1631, 0, %v1632
        %1634 = vst [vmem:[#allocation2 + $0x18] sm:$0x11] %v1633
        %v1635 = vld [vmem:[#allocation2 + $0x20] sm:$0x1]
        %v1636 = vsel %vm1627, 0, %v1635
        %1637 = vst [vmem:[#allocation2 + $0x20] sm:$0x1] %v1636
        %vm1638 = vcmask 1043459
        %vm1639 = vsmask.f32 7950
        %vm1640 = vmand %vm1638, %vm1639
        %vm1641 = vcmask 1047559
        %vm1642 = vsmask.f32 7966
        %vm1643 = vmand %vm1641, %vm1642
        %vm1644 = vmor %vm1643, %vm1640
        %v1645 = vld [vmem:[#allocation2 + $0x18c] sm:$0x88]
        %v1646 = vsel %vm1644, 0, %v1645
        %1647 = vst [vmem:[#allocation2 + $0x18c] sm:$0x88] %v1646
        %v1648 = vld [vmem:[#allocation2 + $0x194] sm:$0x8]
        %v1649 = vsel %vm1640, 0, %v1648
        %1650 = vst [vmem:[#allocation2 + $0x194] sm:$0x8] %v1649
        %1651 = vst [vmem:[#allocation2 + $0x198] sm:$0xff] 0
        %1652 = vst [vmem:[#allocation2 + $0x1a0] sm:$0xf] 0
        %1653 = vst [vmem:[#allocation2 + $0x1a4] sm:$0xff] 0
        %1654 = vst [vmem:[#allocation2 + $0x1ac] sm:$0xf] 0
        %v1655 = vlaneseq
        %v1656 = vshrl.u32 %v1655, 7
        %v1657 = vadd.s32 %v1656, 8
        %v1658 = vadd.s32 %v1656, 16
        %v1659 = vadd.s32 %v1656, 24
        %v1660 = vadd.s32 %v1656, 32
        %v1661 = vadd.s32 %v1656, 40
        %v1662 = vadd.s32 %v1656, 48
        %v1663 = vadd.s32 %v1656, 56
        %v1664 = vadd.s32 %v1656, 64
        %v1665 = vadd.s32 %v1656, 72
        %v1666 = vadd.s32 %v1656, 80
        %v1667 = vadd.s32 %v1656, 88
        %v1668 = vadd.s32 %v1656, 96
        %v1669 = vadd.s32 %v1656, 104
        %v1670 = vadd.s32 %v1656, 112
        %v1671 = vadd.s32 %v1656, 120
        %v1672 = vadd.s32 %v1656, 128
        %v1673 = vadd.s32 %v1656, 136
        %v1674 = vadd.s32 %v1656, 144
        %v1675 = vadd.s32 %v1656, 152
        %v1676 = vadd.s32 %v1656, 160
        %v1677 = vadd.s32 %v1656, 168
        %v1678 = vadd.s32 %v1656, 176
        %v1679 = vadd.s32 %v1656, 184
        %v1680 = vadd.s32 %v1656, 192
        %v1681 = vadd.s32 %v1656, 200
        %v1682 = vadd.s32 %v1656, 208
        %v1683 = vadd.s32 %v1656, 216
        %v1684 = vadd.s32 %v1656, 224
        %v1685 = vadd.s32 %v1656, 232
        %v1686 = vadd.s32 %v1656, 240
        %v1687 = vadd.s32 %v1656, 248
        %vm1688 = vcmp.lt.s32.totalorder %v1656, 0
        %v1689 = vsub.s32 0, %v1656
        %v1690 = vsel %vm1688, %v1689, %v1656
        %v1691 = vshrl.u32 %v1690, 4
        %v1692 = vand.u32 %v1690, 15
        %v1693 = vsub.s32 0, %v1692
        %v1694 = vsel %vm1688, %v1693, %v1692
        %vm1695 = vcmp.lt.s32.totalorder %v1657, 0
        %v1696 = vsub.s32 0, %v1657
        %v1697 = vsel %vm1695, %v1696, %v1657
        %v1698 = vshrl.u32 %v1697, 4
        %v1699 = vand.u32 %v1697, 15
        %v1700 = vsub.s32 0, %v1699
        %v1701 = vsel %vm1695, %v1700, %v1699
        %vm1702 = vcmp.lt.s32.totalorder %v1658, 0
        %v1703 = vsub.s32 0, %v1658
        %v1704 = vsel %vm1702, %v1703, %v1658
        %v1705 = vshrl.u32 %v1704, 4
        %v1706 = vand.u32 %v1704, 15
        %v1707 = vsub.s32 0, %v1706
        %v1708 = vsel %vm1702, %v1707, %v1706
        %vm1709 = vcmp.lt.s32.totalorder %v1659, 0
        %v1710 = vsub.s32 0, %v1659
        %v1711 = vsel %vm1709, %v1710, %v1659
        %v1712 = vshrl.u32 %v1711, 4
        %v1713 = vand.u32 %v1711, 15
        %v1714 = vsub.s32 0, %v1713
        %v1715 = vsel %vm1709, %v1714, %v1713
        %vm1716 = vcmp.lt.s32.totalorder %v1660, 0
        %v1717 = vsub.s32 0, %v1660
        %v1718 = vsel %vm1716, %v1717, %v1660
        %v1719 = vshrl.u32 %v1718, 4
        %v1720 = vand.u32 %v1718, 15
        %v1721 = vsub.s32 0, %v1720
        %v1722 = vsel %vm1716, %v1721, %v1720
        %vm1723 = vcmp.lt.s32.totalorder %v1661, 0
        %v1724 = vsub.s32 0, %v1661
        %v1725 = vsel %vm1723, %v1724, %v1661
        %v1726 = vshrl.u32 %v1725, 4
        %v1727 = vand.u32 %v1725, 15
        %v1728 = vsub.s32 0, %v1727
        %v1729 = vsel %vm1723, %v1728, %v1727
        %vm1730 = vcmp.lt.s32.totalorder %v1662, 0
        %v1731 = vsub.s32 0, %v1662
        %v1732 = vsel %vm1730, %v1731, %v1662
        %v1733 = vshrl.u32 %v1732, 4
        %v1734 = vand.u32 %v1732, 15
        %v1735 = vsub.s32 0, %v1734
        %v1736 = vsel %vm1730, %v1735, %v1734
        %vm1737 = vcmp.lt.s32.totalorder %v1663, 0
        %v1738 = vsub.s32 0, %v1663
        %v1739 = vsel %vm1737, %v1738, %v1663
        %v1740 = vshrl.u32 %v1739, 4
        %v1741 = vand.u32 %v1739, 15
        %v1742 = vsub.s32 0, %v1741
        %v1743 = vsel %vm1737, %v1742, %v1741
        %vm1744 = vcmp.lt.s32.totalorder %v1664, 0
        %v1745 = vsub.s32 0, %v1664
        %v1746 = vsel %vm1744, %v1745, %v1664
        %v1747 = vshrl.u32 %v1746, 4
        %v1748 = vand.u32 %v1746, 15
        %v1749 = vsub.s32 0, %v1748
        %v1750 = vsel %vm1744, %v1749, %v1748
        %vm1751 = vcmp.lt.s32.totalorder %v1665, 0
        %v1752 = vsub.s32 0, %v1665
        %v1753 = vsel %vm1751, %v1752, %v1665
        %v1754 = vshrl.u32 %v1753, 4
        %v1755 = vand.u32 %v1753, 15
        %v1756 = vsub.s32 0, %v1755
        %v1757 = vsel %vm1751, %v1756, %v1755
        %vm1758 = vcmp.lt.s32.totalorder %v1666, 0
        %v1759 = vsub.s32 0, %v1666
        %v1760 = vsel %vm1758, %v1759, %v1666
        %v1761 = vshrl.u32 %v1760, 4
        %v1762 = vand.u32 %v1760, 15
        %v1763 = vsub.s32 0, %v1762
        %v1764 = vsel %vm1758, %v1763, %v1762
        %vm1765 = vcmp.lt.s32.totalorder %v1667, 0
        %v1766 = vsub.s32 0, %v1667
        %v1767 = vsel %vm1765, %v1766, %v1667
        %v1768 = vshrl.u32 %v1767, 4
        %v1769 = vand.u32 %v1767, 15
        %v1770 = vsub.s32 0, %v1769
        %v1771 = vsel %vm1765, %v1770, %v1769
        %vm1772 = vcmp.lt.s32.totalorder %v1668, 0
        %v1773 = vsub.s32 0, %v1668
        %v1774 = vsel %vm1772, %v1773, %v1668
        %v1775 = vshrl.u32 %v1774, 4
        %v1776 = vand.u32 %v1774, 15
        %v1777 = vsub.s32 0, %v1776
        %v1778 = vsel %vm1772, %v1777, %v1776
        %vm1779 = vcmp.lt.s32.totalorder %v1669, 0
        %v1780 = vsub.s32 0, %v1669
        %v1781 = vsel %vm1779, %v1780, %v1669
        %v1782 = vshrl.u32 %v1781, 4
        %v1783 = vand.u32 %v1781, 15
        %v1784 = vsub.s32 0, %v1783
        %v1785 = vsel %vm1779, %v1784, %v1783
        %vm1786 = vcmp.lt.s32.totalorder %v1670, 0
        %v1787 = vsub.s32 0, %v1670
        %v1788 = vsel %vm1786, %v1787, %v1670
        %v1789 = vshrl.u32 %v1788, 4
        %v1790 = vand.u32 %v1788, 15
        %v1791 = vsub.s32 0, %v1790
        %v1792 = vsel %vm1786, %v1791, %v1790
        %vm1793 = vcmp.lt.s32.totalorder %v1671, 0
        %v1794 = vsub.s32 0, %v1671
        %v1795 = vsel %vm1793, %v1794, %v1671
        %v1796 = vshrl.u32 %v1795, 4
        %v1797 = vand.u32 %v1795, 15
        %v1798 = vsub.s32 0, %v1797
        %v1799 = vsel %vm1793, %v1798, %v1797
        %vm1800 = vcmp.lt.s32.totalorder %v1672, 0
        %v1801 = vsub.s32 0, %v1672
        %v1802 = vsel %vm1800, %v1801, %v1672
        %v1803 = vshrl.u32 %v1802, 4
        %v1804 = vand.u32 %v1802, 15
        %v1805 = vsub.s32 0, %v1804
        %v1806 = vsel %vm1800, %v1805, %v1804
        %vm1807 = vcmp.lt.s32.totalorder %v1673, 0
        %v1808 = vsub.s32 0, %v1673
        %v1809 = vsel %vm1807, %v1808, %v1673
        %v1810 = vshrl.u32 %v1809, 4
        %v1811 = vand.u32 %v1809, 15
        %v1812 = vsub.s32 0, %v1811
        %v1813 = vsel %vm1807, %v1812, %v1811
        %vm1814 = vcmp.lt.s32.totalorder %v1674, 0
        %v1815 = vsub.s32 0, %v1674
        %v1816 = vsel %vm1814, %v1815, %v1674
        %v1817 = vshrl.u32 %v1816, 4
        %v1818 = vand.u32 %v1816, 15
        %v1819 = vsub.s32 0, %v1818
        %v1820 = vsel %vm1814, %v1819, %v1818
        %vm1821 = vcmp.lt.s32.totalorder %v1675, 0
        %v1822 = vsub.s32 0, %v1675
        %v1823 = vsel %vm1821, %v1822, %v1675
        %v1824 = vshrl.u32 %v1823, 4
        %v1825 = vand.u32 %v1823, 15
        %v1826 = vsub.s32 0, %v1825
        %v1827 = vsel %vm1821, %v1826, %v1825
        %vm1828 = vcmp.lt.s32.totalorder %v1676, 0
        %v1829 = vsub.s32 0, %v1676
        %v1830 = vsel %vm1828, %v1829, %v1676
        %v1831 = vshrl.u32 %v1830, 4
        %v1832 = vand.u32 %v1830, 15
        %v1833 = vsub.s32 0, %v1832
        %v1834 = vsel %vm1828, %v1833, %v1832
        %vm1835 = vcmp.lt.s32.totalorder %v1677, 0
        %v1836 = vsub.s32 0, %v1677
        %v1837 = vsel %vm1835, %v1836, %v1677
        %v1838 = vshrl.u32 %v1837, 4
        %v1839 = vand.u32 %v1837, 15
        %v1840 = vsub.s32 0, %v1839
        %v1841 = vsel %vm1835, %v1840, %v1839
        %vm1842 = vcmp.lt.s32.totalorder %v1678, 0
        %v1843 = vsub.s32 0, %v1678
        %v1844 = vsel %vm1842, %v1843, %v1678
        %v1845 = vshrl.u32 %v1844, 4
        %v1846 = vand.u32 %v1844, 15
        %v1847 = vsub.s32 0, %v1846
        %v1848 = vsel %vm1842, %v1847, %v1846
        %vm1849 = vcmp.lt.s32.totalorder %v1679, 0
        %v1850 = vsub.s32 0, %v1679
        %v1851 = vsel %vm1849, %v1850, %v1679
        %v1852 = vshrl.u32 %v1851, 4
        %v1853 = vand.u32 %v1851, 15
        %v1854 = vsub.s32 0, %v1853
        %v1855 = vsel %vm1849, %v1854, %v1853
        %vm1856 = vcmp.lt.s32.totalorder %v1680, 0
        %v1857 = vsub.s32 0, %v1680
        %v1858 = vsel %vm1856, %v1857, %v1680
        %v1859 = vshrl.u32 %v1858, 4
        %v1860 = vand.u32 %v1858, 15
        %v1861 = vsub.s32 0, %v1860
        %v1862 = vsel %vm1856, %v1861, %v1860
        %vm1863 = vcmp.lt.s32.totalorder %v1681, 0
        %v1864 = vsub.s32 0, %v1681
        %v1865 = vsel %vm1863, %v1864, %v1681
        %v1866 = vshrl.u32 %v1865, 4
        %v1867 = vand.u32 %v1865, 15
        %v1868 = vsub.s32 0, %v1867
        %v1869 = vsel %vm1863, %v1868, %v1867
        %vm1870 = vcmp.lt.s32.totalorder %v1682, 0
        %v1871 = vsub.s32 0, %v1682
        %v1872 = vsel %vm1870, %v1871, %v1682
        %v1873 = vshrl.u32 %v1872, 4
        %v1874 = vand.u32 %v1872, 15
        %v1875 = vsub.s32 0, %v1874
        %v1876 = vsel %vm1870, %v1875, %v1874
        %vm1877 = vcmp.lt.s32.totalorder %v1683, 0
        %v1878 = vsub.s32 0, %v1683
        %v1879 = vsel %vm1877, %v1878, %v1683
        %v1880 = vshrl.u32 %v1879, 4
        %v1881 = vand.u32 %v1879, 15
        %v1882 = vsub.s32 0, %v1881
        %v1883 = vsel %vm1877, %v1882, %v1881
        %vm1884 = vcmp.lt.s32.totalorder %v1684, 0
        %v1885 = vsub.s32 0, %v1684
        %v1886 = vsel %vm1884, %v1885, %v1684
        %v1887 = vshrl.u32 %v1886, 4
        %v1888 = vand.u32 %v1886, 15
        %v1889 = vsub.s32 0, %v1888
        %v1890 = vsel %vm1884, %v1889, %v1888
        %vm1891 = vcmp.lt.s32.totalorder %v1685, 0
        %v1892 = vsub.s32 0, %v1685
        %v1893 = vsel %vm1891, %v1892, %v1685
        %v1894 = vshrl.u32 %v1893, 4
        %v1895 = vand.u32 %v1893, 15
        %v1896 = vsub.s32 0, %v1895
        %v1897 = vsel %vm1891, %v1896, %v1895
        %vm1898 = vcmp.lt.s32.totalorder %v1686, 0
        %v1899 = vsub.s32 0, %v1686
        %v1900 = vsel %vm1898, %v1899, %v1686
        %v1901 = vshrl.u32 %v1900, 4
        %v1902 = vand.u32 %v1900, 15
        %v1903 = vsub.s32 0, %v1902
        %v1904 = vsel %vm1898, %v1903, %v1902
        %vm1905 = vcmp.lt.s32.totalorder %v1687, 0
        %v1906 = vsub.s32 0, %v1687
        %v1907 = vsel %vm1905, %v1906, %v1687
        %v1908 = vshrl.u32 %v1907, 4
        %v1909 = vand.u32 %v1907, 15
        %v1910 = vsub.s32 0, %v1909
        %v1911 = vsel %vm1905, %v1910, %v1909
        %vm1912 = vcmp.ne.s32.totalorder %v1694, 0
        %vm1913 = vcmp.ne.s32.totalorder %v1701, 0
        %vm1914 = vcmp.ne.s32.totalorder %v1708, 0
        %vm1915 = vcmp.ne.s32.totalorder %v1715, 0
        %vm1916 = vcmp.ne.s32.totalorder %v1722, 0
        %vm1917 = vcmp.ne.s32.totalorder %v1729, 0
        %vm1918 = vcmp.ne.s32.totalorder %v1736, 0
        %vm1919 = vcmp.ne.s32.totalorder %v1743, 0
        %vm1920 = vcmp.ne.s32.totalorder %v1750, 0
        %vm1921 = vcmp.ne.s32.totalorder %v1757, 0
        %vm1922 = vcmp.ne.s32.totalorder %v1764, 0
        %vm1923 = vcmp.ne.s32.totalorder %v1771, 0
        %vm1924 = vcmp.ne.s32.totalorder %v1778, 0
        %vm1925 = vcmp.ne.s32.totalorder %v1785, 0
        %vm1926 = vcmp.ne.s32.totalorder %v1792, 0
        %vm1927 = vcmp.ne.s32.totalorder %v1799, 0
        %vm1928 = vcmp.ne.s32.totalorder %v1806, 0
        %vm1929 = vcmp.ne.s32.totalorder %v1813, 0
        %vm1930 = vcmp.ne.s32.totalorder %v1820, 0
        %vm1931 = vcmp.ne.s32.totalorder %v1827, 0
        %vm1932 = vcmp.ne.s32.totalorder %v1834, 0
        %vm1933 = vcmp.ne.s32.totalorder %v1841, 0
        %vm1934 = vcmp.ne.s32.totalorder %v1848, 0
        %vm1935 = vcmp.ne.s32.totalorder %v1855, 0
        %vm1936 = vcmp.ne.s32.totalorder %v1862, 0
        %vm1937 = vcmp.ne.s32.totalorder %v1869, 0
        %vm1938 = vcmp.ne.s32.totalorder %v1876, 0
        %vm1939 = vcmp.ne.s32.totalorder %v1883, 0
        %vm1940 = vcmp.ne.s32.totalorder %v1890, 0
        %vm1941 = vcmp.ne.s32.totalorder %v1897, 0
        %vm1942 = vcmp.ne.s32.totalorder %v1904, 0
        %vm1943 = vcmp.ne.s32.totalorder %v1911, 0
        %vm1944 = vcmp.lt.s32.totalorder %v1694, 0
        %vm1945 = vcmp.lt.s32.totalorder %v1701, 0
        %vm1946 = vcmp.lt.s32.totalorder %v1708, 0
        %vm1947 = vcmp.lt.s32.totalorder %v1715, 0
        %vm1948 = vcmp.lt.s32.totalorder %v1722, 0
        %vm1949 = vcmp.lt.s32.totalorder %v1729, 0
        %vm1950 = vcmp.lt.s32.totalorder %v1736, 0
        %vm1951 = vcmp.lt.s32.totalorder %v1743, 0
        %vm1952 = vcmp.lt.s32.totalorder %v1750, 0
        %vm1953 = vcmp.lt.s32.totalorder %v1757, 0
        %vm1954 = vcmp.lt.s32.totalorder %v1764, 0
        %vm1955 = vcmp.lt.s32.totalorder %v1771, 0
        %vm1956 = vcmp.lt.s32.totalorder %v1778, 0
        %vm1957 = vcmp.lt.s32.totalorder %v1785, 0
        %vm1958 = vcmp.lt.s32.totalorder %v1792, 0
        %vm1959 = vcmp.lt.s32.totalorder %v1799, 0
        %vm1960 = vcmp.lt.s32.totalorder %v1806, 0
        %vm1961 = vcmp.lt.s32.totalorder %v1813, 0
        %vm1962 = vcmp.lt.s32.totalorder %v1820, 0
        %vm1963 = vcmp.lt.s32.totalorder %v1827, 0
        %vm1964 = vcmp.lt.s32.totalorder %v1834, 0
        %vm1965 = vcmp.lt.s32.totalorder %v1841, 0
        %vm1966 = vcmp.lt.s32.totalorder %v1848, 0
        %vm1967 = vcmp.lt.s32.totalorder %v1855, 0
        %vm1968 = vcmp.lt.s32.totalorder %v1862, 0
        %vm1969 = vcmp.lt.s32.totalorder %v1869, 0
        %vm1970 = vcmp.lt.s32.totalorder %v1876, 0
        %vm1971 = vcmp.lt.s32.totalorder %v1883, 0
        %vm1972 = vcmp.lt.s32.totalorder %v1890, 0
        %vm1973 = vcmp.lt.s32.totalorder %v1897, 0
        %vm1974 = vcmp.lt.s32.totalorder %v1904, 0
        %vm1975 = vcmp.lt.s32.totalorder %v1911, 0
        %vm1976 = vmand %vm1944, %vm1912
        %vm1977 = vmand %vm1945, %vm1913
        %vm1978 = vmand %vm1946, %vm1914
        %vm1979 = vmand %vm1947, %vm1915
        %vm1980 = vmand %vm1948, %vm1916
        %vm1981 = vmand %vm1949, %vm1917
        %vm1982 = vmand %vm1950, %vm1918
        %vm1983 = vmand %vm1951, %vm1919
        %vm1984 = vmand %vm1952, %vm1920
        %vm1985 = vmand %vm1953, %vm1921
        %vm1986 = vmand %vm1954, %vm1922
        %vm1987 = vmand %vm1955, %vm1923
        %vm1988 = vmand %vm1956, %vm1924
        %vm1989 = vmand %vm1957, %vm1925
        %vm1990 = vmand %vm1958, %vm1926
        %vm1991 = vmand %vm1959, %vm1927
        %vm1992 = vmand %vm1960, %vm1928
        %vm1993 = vmand %vm1961, %vm1929
        %vm1994 = vmand %vm1962, %vm1930
        %vm1995 = vmand %vm1963, %vm1931
        %vm1996 = vmand %vm1964, %vm1932
        %vm1997 = vmand %vm1965, %vm1933
        %vm1998 = vmand %vm1966, %vm1934
        %vm1999 = vmand %vm1967, %vm1935
        %vm2000 = vmand %vm1968, %vm1936
        %vm2001 = vmand %vm1969, %vm1937
        %vm2002 = vmand %vm1970, %vm1938
        %vm2003 = vmand %vm1971, %vm1939
        %vm2004 = vmand %vm1972, %vm1940
        %vm2005 = vmand %vm1973, %vm1941
        %vm2006 = vmand %vm1974, %vm1942
        %vm2007 = vmand %vm1975, %vm1943
        %v2008 = vadd.s32 %v1694, 16
        %v2009 = vadd.s32 %v1701, 16
        %v2010 = vadd.s32 %v1708, 16
        %v2011 = vadd.s32 %v1715, 16
        %v2012 = vadd.s32 %v1722, 16
        %v2013 = vadd.s32 %v1729, 16
        %v2014 = vadd.s32 %v1736, 16
        %v2015 = vadd.s32 %v1743, 16
        %v2016 = vadd.s32 %v1750, 16
        %v2017 = vadd.s32 %v1757, 16
        %v2018 = vadd.s32 %v1764, 16
        %v2019 = vadd.s32 %v1771, 16
        %v2020 = vadd.s32 %v1778, 16
        %v2021 = vadd.s32 %v1785, 16
        %v2022 = vadd.s32 %v1792, 16
        %v2023 = vadd.s32 %v1799, 16
        %v2024 = vadd.s32 %v1806, 16
        %v2025 = vadd.s32 %v1813, 16
        %v2026 = vadd.s32 %v1820, 16
        %v2027 = vadd.s32 %v1827, 16
        %v2028 = vadd.s32 %v1834, 16
        %v2029 = vadd.s32 %v1841, 16
        %v2030 = vadd.s32 %v1848, 16
        %v2031 = vadd.s32 %v1855, 16
        %v2032 = vadd.s32 %v1862, 16
        %v2033 = vadd.s32 %v1869, 16
        %v2034 = vadd.s32 %v1876, 16
        %v2035 = vadd.s32 %v1883, 16
        %v2036 = vadd.s32 %v1890, 16
        %v2037 = vadd.s32 %v1897, 16
        %v2038 = vadd.s32 %v1904, 16
        %v2039 = vadd.s32 %v1911, 16
        %v2040 = vsel %vm1976, %v2008, %v1694
        %v2041 = vsel %vm1977, %v2009, %v1701
        %v2042 = vsel %vm1978, %v2010, %v1708
        %v2043 = vsel %vm1979, %v2011, %v1715
        %v2044 = vsel %vm1980, %v2012, %v1722
        %v2045 = vsel %vm1981, %v2013, %v1729
        %v2046 = vsel %vm1982, %v2014, %v1736
        %v2047 = vsel %vm1983, %v2015, %v1743
        %v2048 = vsel %vm1984, %v2016, %v1750
        %v2049 = vsel %vm1985, %v2017, %v1757
        %v2050 = vsel %vm1986, %v2018, %v1764
        %v2051 = vsel %vm1987, %v2019, %v1771
        %v2052 = vsel %vm1988, %v2020, %v1778
        %v2053 = vsel %vm1989, %v2021, %v1785
        %v2054 = vsel %vm1990, %v2022, %v1792
        %v2055 = vsel %vm1991, %v2023, %v1799
        %v2056 = vsel %vm1992, %v2024, %v1806
        %v2057 = vsel %vm1993, %v2025, %v1813
        %v2058 = vsel %vm1994, %v2026, %v1820
        %v2059 = vsel %vm1995, %v2027, %v1827
        %v2060 = vsel %vm1996, %v2028, %v1834
        %v2061 = vsel %vm1997, %v2029, %v1841
        %v2062 = vsel %vm1998, %v2030, %v1848
        %v2063 = vsel %vm1999, %v2031, %v1855
        %v2064 = vsel %vm2000, %v2032, %v1862
        %v2065 = vsel %vm2001, %v2033, %v1869
        %v2066 = vsel %vm2002, %v2034, %v1876
        %v2067 = vsel %vm2003, %v2035, %v1883
        %v2068 = vsel %vm2004, %v2036, %v1890
        %v2069 = vsel %vm2005, %v2037, %v1897
        %v2070 = vsel %vm2006, %v2038, %v1904
        %v2071 = vsel %vm2007, %v2039, %v1911
        %vm2072 = vcmp.le.s32.totalorder %v2040, 14
        %vm2073 = vcmp.le.s32.totalorder %v2041, 14
        %vm2074 = vcmp.le.s32.totalorder %v2042, 14
        %vm2075 = vcmp.le.s32.totalorder %v2043, 14
        %vm2076 = vcmp.le.s32.totalorder %v2044, 14
        %vm2077 = vcmp.le.s32.totalorder %v2045, 14
        %vm2078 = vcmp.le.s32.totalorder %v2046, 14
        %vm2079 = vcmp.le.s32.totalorder %v2047, 14
        %vm2080 = vcmp.le.s32.totalorder %v2048, 14
        %vm2081 = vcmp.le.s32.totalorder %v2049, 14
        %vm2082 = vcmp.le.s32.totalorder %v2050, 14
        %vm2083 = vcmp.le.s32.totalorder %v2051, 14
        %vm2084 = vcmp.le.s32.totalorder %v2052, 14
        %vm2085 = vcmp.le.s32.totalorder %v2053, 14
        %vm2086 = vcmp.le.s32.totalorder %v2054, 14
        %vm2087 = vcmp.le.s32.totalorder %v2055, 14
        %vm2088 = vcmp.le.s32.totalorder %v2056, 14
        %vm2089 = vcmp.le.s32.totalorder %v2057, 14
        %vm2090 = vcmp.le.s32.totalorder %v2058, 14
        %vm2091 = vcmp.le.s32.totalorder %v2059, 14
        %vm2092 = vcmp.le.s32.totalorder %v2060, 14
        %vm2093 = vcmp.le.s32.totalorder %v2061, 14
        %vm2094 = vcmp.le.s32.totalorder %v2062, 14
        %vm2095 = vcmp.le.s32.totalorder %v2063, 14
        %vm2096 = vcmp.le.s32.totalorder %v2064, 14
        %vm2097 = vcmp.le.s32.totalorder %v2065, 14
        %vm2098 = vcmp.le.s32.totalorder %v2066, 14
        %vm2099 = vcmp.le.s32.totalorder %v2067, 14
        %vm2100 = vcmp.le.s32.totalorder %v2068, 14
        %vm2101 = vcmp.le.s32.totalorder %v2069, 14
        %vm2102 = vcmp.le.s32.totalorder %v2070, 14
        %vm2103 = vcmp.le.s32.totalorder %v2071, 14
        %vm2104 = vcmp.ge.s32.totalorder %v2040, 1
        %vm2105 = vcmp.ge.s32.totalorder %v2041, 1
        %vm2106 = vcmp.ge.s32.totalorder %v2042, 1
        %vm2107 = vcmp.ge.s32.totalorder %v2043, 1
        %vm2108 = vcmp.ge.s32.totalorder %v2044, 1
        %vm2109 = vcmp.ge.s32.totalorder %v2045, 1
        %vm2110 = vcmp.ge.s32.totalorder %v2046, 1
        %vm2111 = vcmp.ge.s32.totalorder %v2047, 1
        %vm2112 = vcmp.ge.s32.totalorder %v2048, 1
        %vm2113 = vcmp.ge.s32.totalorder %v2049, 1
        %vm2114 = vcmp.ge.s32.totalorder %v2050, 1
        %vm2115 = vcmp.ge.s32.totalorder %v2051, 1
        %vm2116 = vcmp.ge.s32.totalorder %v2052, 1
        %vm2117 = vcmp.ge.s32.totalorder %v2053, 1
        %vm2118 = vcmp.ge.s32.totalorder %v2054, 1
        %vm2119 = vcmp.ge.s32.totalorder %v2055, 1
        %vm2120 = vcmp.ge.s32.totalorder %v2056, 1
        %vm2121 = vcmp.ge.s32.totalorder %v2057, 1
        %vm2122 = vcmp.ge.s32.totalorder %v2058, 1
        %vm2123 = vcmp.ge.s32.totalorder %v2059, 1
        %vm2124 = vcmp.ge.s32.totalorder %v2060, 1
        %vm2125 = vcmp.ge.s32.totalorder %v2061, 1
        %vm2126 = vcmp.ge.s32.totalorder %v2062, 1
        %vm2127 = vcmp.ge.s32.totalorder %v2063, 1
        %vm2128 = vcmp.ge.s32.totalorder %v2064, 1
        %vm2129 = vcmp.ge.s32.totalorder %v2065, 1
        %vm2130 = vcmp.ge.s32.totalorder %v2066, 1
        %vm2131 = vcmp.ge.s32.totalorder %v2067, 1
        %vm2132 = vcmp.ge.s32.totalorder %v2068, 1
        %vm2133 = vcmp.ge.s32.totalorder %v2069, 1
        %vm2134 = vcmp.ge.s32.totalorder %v2070, 1
        %vm2135 = vcmp.ge.s32.totalorder %v2071, 1
        %v2136 = vsel %vm2072, 1, 0
        %v2137 = vsel %vm2073, 1, 0
        %v2138 = vsel %vm2074, 1, 0
        %v2139 = vsel %vm2075, 1, 0
        %v2140 = vsel %vm2076, 1, 0
        %v2141 = vsel %vm2077, 1, 0
        %v2142 = vsel %vm2078, 1, 0
        %v2143 = vsel %vm2079, 1, 0
        %v2144 = vsel %vm2080, 1, 0
        %v2145 = vsel %vm2081, 1, 0
        %v2146 = vsel %vm2082, 1, 0
        %v2147 = vsel %vm2083, 1, 0
        %v2148 = vsel %vm2084, 1, 0
        %v2149 = vsel %vm2085, 1, 0
        %v2150 = vsel %vm2086, 1, 0
        %v2151 = vsel %vm2087, 1, 0
        %v2152 = vsel %vm2088, 1, 0
        %v2153 = vsel %vm2089, 1, 0
        %v2154 = vsel %vm2090, 1, 0
        %v2155 = vsel %vm2091, 1, 0
        %v2156 = vsel %vm2092, 1, 0
        %v2157 = vsel %vm2093, 1, 0
        %v2158 = vsel %vm2094, 1, 0
        %v2159 = vsel %vm2095, 1, 0
        %v2160 = vsel %vm2096, 1, 0
        %v2161 = vsel %vm2097, 1, 0
        %v2162 = vsel %vm2098, 1, 0
        %v2163 = vsel %vm2099, 1, 0
        %v2164 = vsel %vm2100, 1, 0
        %v2165 = vsel %vm2101, 1, 0
        %v2166 = vsel %vm2102, 1, 0
        %v2167 = vsel %vm2103, 1, 0
        %vm2168 = vcmp.eq.s32.totalorder %v2136, 1
        %vm2169 = vcmp.eq.s32.totalorder %v2137, 1
        %vm2170 = vcmp.eq.s32.totalorder %v2138, 1
        %vm2171 = vcmp.eq.s32.totalorder %v2139, 1
        %vm2172 = vcmp.eq.s32.totalorder %v2140, 1
        %vm2173 = vcmp.eq.s32.totalorder %v2141, 1
        %vm2174 = vcmp.eq.s32.totalorder %v2142, 1
        %vm2175 = vcmp.eq.s32.totalorder %v2143, 1
        %vm2176 = vcmp.eq.s32.totalorder %v2144, 1
        %vm2177 = vcmp.eq.s32.totalorder %v2145, 1
        %vm2178 = vcmp.eq.s32.totalorder %v2146, 1
        %vm2179 = vcmp.eq.s32.totalorder %v2147, 1
        %vm2180 = vcmp.eq.s32.totalorder %v2148, 1
        %vm2181 = vcmp.eq.s32.totalorder %v2149, 1
        %vm2182 = vcmp.eq.s32.totalorder %v2150, 1
        %vm2183 = vcmp.eq.s32.totalorder %v2151, 1
        %vm2184 = vcmp.eq.s32.totalorder %v2152, 1
        %vm2185 = vcmp.eq.s32.totalorder %v2153, 1
        %vm2186 = vcmp.eq.s32.totalorder %v2154, 1
        %vm2187 = vcmp.eq.s32.totalorder %v2155, 1
        %vm2188 = vcmp.eq.s32.totalorder %v2156, 1
        %vm2189 = vcmp.eq.s32.totalorder %v2157, 1
        %vm2190 = vcmp.eq.s32.totalorder %v2158, 1
        %vm2191 = vcmp.eq.s32.totalorder %v2159, 1
        %vm2192 = vcmp.eq.s32.totalorder %v2160, 1
        %vm2193 = vcmp.eq.s32.totalorder %v2161, 1
        %vm2194 = vcmp.eq.s32.totalorder %v2162, 1
        %vm2195 = vcmp.eq.s32.totalorder %v2163, 1
        %vm2196 = vcmp.eq.s32.totalorder %v2164, 1
        %vm2197 = vcmp.eq.s32.totalorder %v2165, 1
        %vm2198 = vcmp.eq.s32.totalorder %v2166, 1
        %vm2199 = vcmp.eq.s32.totalorder %v2167, 1
        %vm2200 = vmpackc.low %vm2168, %vm2168
        %vm2201 = vmpackc.low %vm2169, %vm2169
        %vm2202 = vmpackc.low %vm2170, %vm2170
        %vm2203 = vmpackc.low %vm2171, %vm2171
        %vm2204 = vmpackc.low %vm2172, %vm2172
        %vm2205 = vmpackc.low %vm2173, %vm2173
        %vm2206 = vmpackc.low %vm2174, %vm2174
        %vm2207 = vmpackc.low %vm2175, %vm2175
        %vm2208 = vmpackc.low %vm2176, %vm2176
        %vm2209 = vmpackc.low %vm2177, %vm2177
        %vm2210 = vmpackc.low %vm2178, %vm2178
        %vm2211 = vmpackc.low %vm2179, %vm2179
        %vm2212 = vmpackc.low %vm2180, %vm2180
        %vm2213 = vmpackc.low %vm2181, %vm2181
        %vm2214 = vmpackc.low %vm2182, %vm2182
        %vm2215 = vmpackc.low %vm2183, %vm2183
        %vm2216 = vmpackc.low %vm2184, %vm2184
        %vm2217 = vmpackc.low %vm2185, %vm2185
        %vm2218 = vmpackc.low %vm2186, %vm2186
        %vm2219 = vmpackc.low %vm2187, %vm2187
        %vm2220 = vmpackc.low %vm2188, %vm2188
        %vm2221 = vmpackc.low %vm2189, %vm2189
        %vm2222 = vmpackc.low %vm2190, %vm2190
        %vm2223 = vmpackc.low %vm2191, %vm2191
        %vm2224 = vmpackc.low %vm2192, %vm2192
        %vm2225 = vmpackc.low %vm2193, %vm2193
        %vm2226 = vmpackc.low %vm2194, %vm2194
        %vm2227 = vmpackc.low %vm2195, %vm2195
        %vm2228 = vmpackc.low %vm2196, %vm2196
        %vm2229 = vmpackc.low %vm2197, %vm2197
        %vm2230 = vmpackc.low %vm2198, %vm2198
        %vm2231 = vmpackc.low %vm2199, %vm2199
        %v2232 = vsel %vm2200, %v1589, 0
        %v2233 = vsel %vm2201, %v1590, 0
        %v2234 = vsel %vm2202, %v1591, 0
        %v2235 = vsel %vm2203, %v1592, 0
        %v2236 = vsel %vm2204, %v1593, 0
        %v2237 = vsel %vm2205, %v1594, 0
        %v2238 = vsel %vm2206, %v1595, 0
        %v2239 = vsel %vm2207, %v1596, 0
        %v2240 = vsel %vm2208, %v1597, 0
        %v2241 = vsel %vm2209, %v1598, 0
        %v2242 = vsel %vm2210, %v1599, 0
        %v2243 = vsel %vm2211, %v1600, 0
        %v2244 = vsel %vm2212, %v1601, 0
        %v2245 = vsel %vm2213, %v1602, 0
        %v2246 = vsel %vm2214, %v1603, 0
        %v2247 = vsel %vm2215, %v1604, 0
        %v2248 = vsel %vm2216, %v1605, 0
        %v2249 = vsel %vm2217, %v1606, 0
        %v2250 = vsel %vm2218, %v1607, 0
        %v2251 = vsel %vm2219, %v1608, 0
        %v2252 = vsel %vm2220, %v1609, 0
        %v2253 = vsel %vm2221, %v1610, 0
        %v2254 = vsel %vm2222, %v1611, 0
        %v2255 = vsel %vm2223, %v1612, 0
        %v2256 = vsel %vm2224, %v1613, 0
        %v2257 = vsel %vm2225, %v1614, 0
        %v2258 = vsel %vm2226, %v1615, 0
        %v2259 = vsel %vm2227, %v1616, 0
        %v2260 = vsel %vm2228, %v1617, 0
        %v2261 = vsel %vm2229, %v1618, 0
        %v2262 = vsel %vm2230, %v1619, 0
        %v2263 = vsel %vm2231, %v1620, 0
        %vm2264 = vsmask.f32 4368
        %vm2265 = vmor %vm1626, %vm2264
        %v2267 = vshrl.u32 %v2232, 16
        %v2269 = vrot.slane %v2267, 7
        %v2270 = vshll.u32 %v2232, 16
        %v2272 = vor.u32 %v2269, %v2270
        %v2273 = vrot.slane %v2269, 4
        %v2275 = vshrl.u32 %v2233, 16
        %v2277 = vrot.slane %v2275, 7
        %v2278 = vshll.u32 %v2233, 16
        %v2280 = vor.u32 %v2277, %v2278
        %v2281 = vsel %vm2265, %v2273, %v2280
        %v2282 = vrot.slane %v2277, 4
        %v2284 = vshrl.u32 %v2234, 16
        %v2286 = vrot.slane %v2284, 7
        %v2287 = vshll.u32 %v2234, 16
        %v2289 = vor.u32 %v2286, %v2287
        %v2290 = vsel %vm2265, %v2282, %v2289
        %v2291 = vrot.slane %v2286, 4
        %v2293 = vshrl.u32 %v2235, 16
        %v2295 = vrot.slane %v2293, 7
        %v2296 = vshll.u32 %v2235, 16
        %v2298 = vor.u32 %v2295, %v2296
        %v2299 = vsel %vm2265, %v2291, %v2298
        %v2300 = vrot.slane %v2295, 4
        %v2302 = vshrl.u32 %v2236, 16
        %v2304 = vrot.slane %v2302, 7
        %v2305 = vshll.u32 %v2236, 16
        %v2307 = vor.u32 %v2304, %v2305
        %v2308 = vsel %vm2265, %v2300, %v2307
        %v2309 = vrot.slane %v2304, 4
        %v2311 = vshrl.u32 %v2237, 16
        %v2313 = vrot.slane %v2311, 7
        %v2314 = vshll.u32 %v2237, 16
        %v2316 = vor.u32 %v2313, %v2314
        %v2317 = vsel %vm2265, %v2309, %v2316
        %v2318 = vrot.slane %v2313, 4
        %v2320 = vshrl.u32 %v2238, 16
        %v2322 = vrot.slane %v2320, 7
        %v2323 = vshll.u32 %v2238, 16
        %v2325 = vor.u32 %v2322, %v2323
        %v2326 = vsel %vm2265, %v2318, %v2325
        %v2327 = vrot.slane %v2322, 4
        %v2329 = vshrl.u32 %v2239, 16
        %v2331 = vrot.slane %v2329, 7
        %v2332 = vshll.u32 %v2239, 16
        %v2334 = vor.u32 %v2331, %v2332
        %v2335 = vsel %vm2265, %v2327, %v2334
        %v2336 = vrot.slane %v2331, 4
        %v2338 = vshrl.u32 %v2240, 16
        %v2340 = vrot.slane %v2338, 7
        %v2341 = vshll.u32 %v2240, 16
        %v2343 = vor.u32 %v2340, %v2341
        %v2344 = vsel %vm2265, %v2336, %v2343
        %v2345 = vrot.slane %v2340, 4
        %v2347 = vshrl.u32 %v2241, 16
        %v2349 = vrot.slane %v2347, 7
        %v2350 = vshll.u32 %v2241, 16
        %v2352 = vor.u32 %v2349, %v2350
        %v2353 = vsel %vm2265, %v2345, %v2352
        %v2354 = vrot.slane %v2349, 4
        %v2356 = vshrl.u32 %v2242, 16
        %v2358 = vrot.slane %v2356, 7
        %v2359 = vshll.u32 %v2242, 16
        %v2361 = vor.u32 %v2358, %v2359
        %v2362 = vsel %vm2265, %v2354, %v2361
        %v2363 = vrot.slane %v2358, 4
        %v2365 = vshrl.u32 %v2243, 16
        %v2367 = vrot.slane %v2365, 7
        %v2368 = vshll.u32 %v2243, 16
        %v2370 = vor.u32 %v2367, %v2368
        %v2371 = vsel %vm2265, %v2363, %v2370
        %v2372 = vrot.slane %v2367, 4
        %v2374 = vshrl.u32 %v2244, 16
        %v2376 = vrot.slane %v2374, 7
        %v2377 = vshll.u32 %v2244, 16
        %v2379 = vor.u32 %v2376, %v2377
        %v2380 = vsel %vm2265, %v2372, %v2379
        %v2381 = vrot.slane %v2376, 4
        %v2383 = vshrl.u32 %v2245, 16
        %v2385 = vrot.slane %v2383, 7
        %v2386 = vshll.u32 %v2245, 16
        %v2388 = vor.u32 %v2385, %v2386
        %v2389 = vsel %vm2265, %v2381, %v2388
        %v2390 = vrot.slane %v2385, 4
        %v2392 = vshrl.u32 %v2246, 16
        %v2394 = vrot.slane %v2392, 7
        %v2395 = vshll.u32 %v2246, 16
        %v2397 = vor.u32 %v2394, %v2395
        %v2398 = vsel %vm2265, %v2390, %v2397
        %v2399 = vrot.slane %v2394, 4
        %v2401 = vshrl.u32 %v2247, 16
        %v2403 = vrot.slane %v2401, 7
        %v2404 = vshll.u32 %v2247, 16
        %v2406 = vor.u32 %v2403, %v2404
        %v2407 = vsel %vm2265, %v2399, %v2406
        %v2408 = vrot.slane %v2403, 4
        %v2410 = vshrl.u32 %v2248, 16
        %v2412 = vrot.slane %v2410, 7
        %v2413 = vshll.u32 %v2248, 16
        %v2415 = vor.u32 %v2412, %v2413
        %v2416 = vsel %vm2265, %v2408, %v2415
        %v2417 = vrot.slane %v2412, 4
        %v2419 = vshrl.u32 %v2249, 16
        %v2421 = vrot.slane %v2419, 7
        %v2422 = vshll.u32 %v2249, 16
        %v2424 = vor.u32 %v2421, %v2422
        %v2425 = vsel %vm2265, %v2417, %v2424
        %v2426 = vrot.slane %v2421, 4
        %v2428 = vshrl.u32 %v2250, 16
        %v2430 = vrot.slane %v2428, 7
        %v2431 = vshll.u32 %v2250, 16
        %v2433 = vor.u32 %v2430, %v2431
        %v2434 = vsel %vm2265, %v2426, %v2433
        %v2435 = vrot.slane %v2430, 4
        %v2437 = vshrl.u32 %v2251, 16
        %v2439 = vrot.slane %v2437, 7
        %v2440 = vshll.u32 %v2251, 16
        %v2442 = vor.u32 %v2439, %v2440
        %v2443 = vsel %vm2265, %v2435, %v2442
        %v2444 = vrot.slane %v2439, 4
        %v2446 = vshrl.u32 %v2252, 16
        %v2448 = vrot.slane %v2446, 7
        %v2449 = vshll.u32 %v2252, 16
        %v2451 = vor.u32 %v2448, %v2449
        %v2452 = vsel %vm2265, %v2444, %v2451
        %v2453 = vrot.slane %v2448, 4
        %v2455 = vshrl.u32 %v2253, 16
        %v2457 = vrot.slane %v2455, 7
        %v2458 = vshll.u32 %v2253, 16
        %v2460 = vor.u32 %v2457, %v2458
        %v2461 = vsel %vm2265, %v2453, %v2460
        %v2462 = vrot.slane %v2457, 4
        %v2464 = vshrl.u32 %v2254, 16
        %v2466 = vrot.slane %v2464, 7
        %v2467 = vshll.u32 %v2254, 16
        %v2469 = vor.u32 %v2466, %v2467
        %v2470 = vsel %vm2265, %v2462, %v2469
        %v2471 = vrot.slane %v2466, 4
        %v2473 = vshrl.u32 %v2255, 16
        %v2475 = vrot.slane %v2473, 7
        %v2476 = vshll.u32 %v2255, 16
        %v2478 = vor.u32 %v2475, %v2476
        %v2479 = vsel %vm2265, %v2471, %v2478
        %v2480 = vrot.slane %v2475, 4
        %v2482 = vshrl.u32 %v2256, 16
        %v2484 = vrot.slane %v2482, 7
        %v2485 = vshll.u32 %v2256, 16
        %v2487 = vor.u32 %v2484, %v2485
        %v2488 = vsel %vm2265, %v2480, %v2487
        %v2489 = vrot.slane %v2484, 4
        %v2491 = vshrl.u32 %v2257, 16
        %v2493 = vrot.slane %v2491, 7
        %v2494 = vshll.u32 %v2257, 16
        %v2496 = vor.u32 %v2493, %v2494
        %v2497 = vsel %vm2265, %v2489, %v2496
        %v2498 = vrot.slane %v2493, 4
        %v2500 = vshrl.u32 %v2258, 16
        %v2502 = vrot.slane %v2500, 7
        %v2503 = vshll.u32 %v2258, 16
        %v2505 = vor.u32 %v2502, %v2503
        %v2506 = vsel %vm2265, %v2498, %v2505
        %v2507 = vrot.slane %v2502, 4
        %v2509 = vshrl.u32 %v2259, 16
        %v2511 = vrot.slane %v2509, 7
        %v2512 = vshll.u32 %v2259, 16
        %v2514 = vor.u32 %v2511, %v2512
        %v2515 = vsel %vm2265, %v2507, %v2514
        %v2516 = vrot.slane %v2511, 4
        %v2518 = vshrl.u32 %v2260, 16
        %v2520 = vrot.slane %v2518, 7
        %v2521 = vshll.u32 %v2260, 16
        %v2523 = vor.u32 %v2520, %v2521
        %v2524 = vsel %vm2265, %v2516, %v2523
        %v2525 = vrot.slane %v2520, 4
        %v2527 = vshrl.u32 %v2261, 16
        %v2529 = vrot.slane %v2527, 7
        %v2530 = vshll.u32 %v2261, 16
        %v2532 = vor.u32 %v2529, %v2530
        %v2533 = vsel %vm2265, %v2525, %v2532
        %v2534 = vrot.slane %v2529, 4
        %v2536 = vshrl.u32 %v2262, 16
        %v2538 = vrot.slane %v2536, 7
        %v2539 = vshll.u32 %v2262, 16
        %v2541 = vor.u32 %v2538, %v2539
        %v2542 = vsel %vm2265, %v2534, %v2541
        %v2543 = vrot.slane %v2538, 4
        %v2545 = vshrl.u32 %v2263, 16
        %v2547 = vrot.slane %v2545, 7
        %v2548 = vshll.u32 %v2263, 16
        %v2550 = vor.u32 %v2547, %v2548
        %v2551 = vsel %vm2265, %v2543, %v2550
        %v2552 = vrot.slane %v2547, 4
        %vm2586 = vcmask 1043456
        %vm2587 = vsmask.f32 7938
        %vm2588 = vmand %vm2586, %vm2587
        %v2589 = vld [vmem:[#allocation2 + $0x18] sm:$0xf]
        %v2590 = vsel %vm2588, %v2272, %v2589
        %2591 = vst [vmem:[#allocation2 + $0x18] sm:$0xf] %v2590
        %2592 = vst [vmem:[#allocation2 + $0x24] sm:$0xf] %v2281
        %2593 = vst [vmem:[#allocation2 + $0x30] sm:$0xf] %v2290
        %2594 = vst [vmem:[#allocation2 + $0x3c] sm:$0xf] %v2299
        %2595 = vst [vmem:[#allocation2 + $0x48] sm:$0xf] %v2308
        %2596 = vst [vmem:[#allocation2 + $0x54] sm:$0xf] %v2317
        %2597 = vst [vmem:[#allocation2 + $0x60] sm:$0xf] %v2326
        %2598 = vst [vmem:[#allocation2 + $0x6c] sm:$0xf] %v2335
        %2599 = vst [vmem:[#allocation2 + $0x78] sm:$0xf] %v2344
        %2600 = vst [vmem:[#allocation2 + $0x84] sm:$0xf] %v2353
        %2601 = vst [vmem:[#allocation2 + $0x90] sm:$0xf] %v2362
        %2602 = vst [vmem:[#allocation2 + $0x9c] sm:$0xf] %v2371
        %2603 = vst [vmem:[#allocation2 + $0xa8] sm:$0xf] %v2380
        %2604 = vst [vmem:[#allocation2 + $0xb4] sm:$0xf] %v2389
        %2605 = vst [vmem:[#allocation2 + $0xc0] sm:$0xf] %v2398
        %2606 = vst [vmem:[#allocation2 + $0xcc] sm:$0xf] %v2407
        %2607 = vst [vmem:[#allocation2 + $0xd8] sm:$0xf] %v2416
        %2608 = vst [vmem:[#allocation2 + $0xe4] sm:$0xf] %v2425
        %2609 = vst [vmem:[#allocation2 + $0xf0] sm:$0xf] %v2434
        %2610 = vst [vmem:[#allocation2 + $0xfc] sm:$0xf] %v2443
        %2611 = vst [vmem:[#allocation2 + $0x108] sm:$0xf] %v2452
        %2612 = vst [vmem:[#allocation2 + $0x114] sm:$0xf] %v2461
        %2613 = vst [vmem:[#allocation2 + $0x120] sm:$0xf] %v2470
        %2614 = vst [vmem:[#allocation2 + $0x12c] sm:$0xf] %v2479
        %2615 = vst [vmem:[#allocation2 + $0x138] sm:$0xf] %v2488
        %2616 = vst [vmem:[#allocation2 + $0x144] sm:$0xf] %v2497
        %2617 = vst [vmem:[#allocation2 + $0x150] sm:$0xf] %v2506
        %2618 = vst [vmem:[#allocation2 + $0x15c] sm:$0xf] %v2515
        %2619 = vst [vmem:[#allocation2 + $0x168] sm:$0xf] %v2524
        %2620 = vst [vmem:[#allocation2 + $0x174] sm:$0xf] %v2533
        %2621 = vst [vmem:[#allocation2 + $0x180] sm:$0xf] %v2542
        %2622 = vst [vmem:[#allocation2 + $0x18c] sm:$0xf] %v2551
        %v2623 = vld [vmem:[#allocation2 + $0x198] sm:$0x1]
        %v2624 = vsel %vm1627, %v2552, %v2623
        %2625 = vst [vmem:[#allocation2 + $0x198] sm:$0x1] %v2624
        %2626 = vst [vmem:[#allocation2 + $0x1c] sm:$0xf] %v1589
        %2627 = vst [vmem:[#allocation2 + $0x28] sm:$0xf] %v1590
        %2628 = vst [vmem:[#allocation2 + $0x34] sm:$0xf] %v1591
        %2629 = vst [vmem:[#allocation2 + $0x40] sm:$0xf] %v1592
        %2630 = vst [vmem:[#allocation2 + $0x4c] sm:$0xf] %v1593
        %2631 = vst [vmem:[#allocation2 + $0x58] sm:$0xf] %v1594
        %2632 = vst [vmem:[#allocation2 + $0x64] sm:$0xf] %v1595
        %2633 = vst [vmem:[#allocation2 + $0x70] sm:$0xf] %v1596
        %2634 = vst [vmem:[#allocation2 + $0x7c] sm:$0xf] %v1597
        %2635 = vst [vmem:[#allocation2 + $0x88] sm:$0xf] %v1598
        %2636 = vst [vmem:[#allocation2 + $0x94] sm:$0xf] %v1599
        %2637 = vst [vmem:[#allocation2 + $0xa0] sm:$0xf] %v1600
        %2638 = vst [vmem:[#allocation2 + $0xac] sm:$0xf] %v1601
        %2639 = vst [vmem:[#allocation2 + $0xb8] sm:$0xf] %v1602
        %2640 = vst [vmem:[#allocation2 + $0xc4] sm:$0xf] %v1603
        %2641 = vst [vmem:[#allocation2 + $0xd0] sm:$0xf] %v1604
        %2642 = vst [vmem:[#allocation2 + $0xdc] sm:$0xf] %v1605
        %2643 = vst [vmem:[#allocation2 + $0xe8] sm:$0xf] %v1606
        %2644 = vst [vmem:[#allocation2 + $0xf4] sm:$0xf] %v1607
        %2645 = vst [vmem:[#allocation2 + $0x100] sm:$0xf] %v1608
        %2646 = vst [vmem:[#allocation2 + $0x10c] sm:$0xf] %v1609
        %2647 = vst [vmem:[#allocation2 + $0x118] sm:$0xf] %v1610
        %2648 = vst [vmem:[#allocation2 + $0x124] sm:$0xf] %v1611
        %2649 = vst [vmem:[#allocation2 + $0x130] sm:$0xf] %v1612
        %2650 = vst [vmem:[#allocation2 + $0x13c] sm:$0xf] %v1613
        %2651 = vst [vmem:[#allocation2 + $0x148] sm:$0xf] %v1614
        %2652 = vst [vmem:[#allocation2 + $0x154] sm:$0xf] %v1615
        %2653 = vst [vmem:[#allocation2 + $0x160] sm:$0xf] %v1616
        %2654 = vst [vmem:[#allocation2 + $0x16c] sm:$0xf] %v1617
        %2655 = vst [vmem:[#allocation2 + $0x178] sm:$0xf] %v1618
        %2656 = vst [vmem:[#allocation2 + $0x184] sm:$0xf] %v1619
        %2657 = vst [vmem:[#allocation2 + $0x190] sm:$0xf] %v1620
        %v2658 = vsel %vm2104, 1, 0
        %v2659 = vsel %vm2105, 1, 0
        %v2660 = vsel %vm2106, 1, 0
        %v2661 = vsel %vm2107, 1, 0
        %v2662 = vsel %vm2108, 1, 0
        %v2663 = vsel %vm2109, 1, 0
        %v2664 = vsel %vm2110, 1, 0
        %v2665 = vsel %vm2111, 1, 0
        %v2666 = vsel %vm2112, 1, 0
        %v2667 = vsel %vm2113, 1, 0
        %v2668 = vsel %vm2114, 1, 0
        %v2669 = vsel %vm2115, 1, 0
        %v2670 = vsel %vm2116, 1, 0
        %v2671 = vsel %vm2117, 1, 0
        %v2672 = vsel %vm2118, 1, 0
        %v2673 = vsel %vm2119, 1, 0
        %v2674 = vsel %vm2120, 1, 0
        %v2675 = vsel %vm2121, 1, 0
        %v2676 = vsel %vm2122, 1, 0
        %v2677 = vsel %vm2123, 1, 0
        %v2678 = vsel %vm2124, 1, 0
        %v2679 = vsel %vm2125, 1, 0
        %v2680 = vsel %vm2126, 1, 0
        %v2681 = vsel %vm2127, 1, 0
        %v2682 = vsel %vm2128, 1, 0
        %v2683 = vsel %vm2129, 1, 0
        %v2684 = vsel %vm2130, 1, 0
        %v2685 = vsel %vm2131, 1, 0
        %v2686 = vsel %vm2132, 1, 0
        %v2687 = vsel %vm2133, 1, 0
        %v2688 = vsel %vm2134, 1, 0
        %v2689 = vsel %vm2135, 1, 0
        %vm2690 = vcmp.eq.s32.totalorder %v2658, 1
        %vm2691 = vcmp.eq.s32.totalorder %v2659, 1
        %vm2692 = vcmp.eq.s32.totalorder %v2660, 1
        %vm2693 = vcmp.eq.s32.totalorder %v2661, 1
        %vm2694 = vcmp.eq.s32.totalorder %v2662, 1
        %vm2695 = vcmp.eq.s32.totalorder %v2663, 1
        %vm2696 = vcmp.eq.s32.totalorder %v2664, 1
        %vm2697 = vcmp.eq.s32.totalorder %v2665, 1
        %vm2698 = vcmp.eq.s32.totalorder %v2666, 1
        %vm2699 = vcmp.eq.s32.totalorder %v2667, 1
        %vm2700 = vcmp.eq.s32.totalorder %v2668, 1
        %vm2701 = vcmp.eq.s32.totalorder %v2669, 1
        %vm2702 = vcmp.eq.s32.totalorder %v2670, 1
        %vm2703 = vcmp.eq.s32.totalorder %v2671, 1
        %vm2704 = vcmp.eq.s32.totalorder %v2672, 1
        %vm2705 = vcmp.eq.s32.totalorder %v2673, 1
        %vm2706 = vcmp.eq.s32.totalorder %v2674, 1
        %vm2707 = vcmp.eq.s32.totalorder %v2675, 1
        %vm2708 = vcmp.eq.s32.totalorder %v2676, 1
        %vm2709 = vcmp.eq.s32.totalorder %v2677, 1
        %vm2710 = vcmp.eq.s32.totalorder %v2678, 1
        %vm2711 = vcmp.eq.s32.totalorder %v2679, 1
        %vm2712 = vcmp.eq.s32.totalorder %v2680, 1
        %vm2713 = vcmp.eq.s32.totalorder %v2681, 1
        %vm2714 = vcmp.eq.s32.totalorder %v2682, 1
        %vm2715 = vcmp.eq.s32.totalorder %v2683, 1
        %vm2716 = vcmp.eq.s32.totalorder %v2684, 1
        %vm2717 = vcmp.eq.s32.totalorder %v2685, 1
        %vm2718 = vcmp.eq.s32.totalorder %v2686, 1
        %vm2719 = vcmp.eq.s32.totalorder %v2687, 1
        %vm2720 = vcmp.eq.s32.totalorder %v2688, 1
        %vm2721 = vcmp.eq.s32.totalorder %v2689, 1
        %vm2722 = vmpackc.low %vm2690, %vm2690
        %vm2723 = vmpackc.low %vm2691, %vm2691
        %vm2724 = vmpackc.low %vm2692, %vm2692
        %vm2725 = vmpackc.low %vm2693, %vm2693
        %vm2726 = vmpackc.low %vm2694, %vm2694
        %vm2727 = vmpackc.low %vm2695, %vm2695
        %vm2728 = vmpackc.low %vm2696, %vm2696
        %vm2729 = vmpackc.low %vm2697, %vm2697
        %vm2730 = vmpackc.low %vm2698, %vm2698
        %vm2731 = vmpackc.low %vm2699, %vm2699
        %vm2732 = vmpackc.low %vm2700, %vm2700
        %vm2733 = vmpackc.low %vm2701, %vm2701
        %vm2734 = vmpackc.low %vm2702, %vm2702
        %vm2735 = vmpackc.low %vm2703, %vm2703
        %vm2736 = vmpackc.low %vm2704, %vm2704
        %vm2737 = vmpackc.low %vm2705, %vm2705
        %vm2738 = vmpackc.low %vm2706, %vm2706
        %vm2739 = vmpackc.low %vm2707, %vm2707
        %vm2740 = vmpackc.low %vm2708, %vm2708
        %vm2741 = vmpackc.low %vm2709, %vm2709
        %vm2742 = vmpackc.low %vm2710, %vm2710
        %vm2743 = vmpackc.low %vm2711, %vm2711
        %vm2744 = vmpackc.low %vm2712, %vm2712
        %vm2745 = vmpackc.low %vm2713, %vm2713
        %vm2746 = vmpackc.low %vm2714, %vm2714
        %vm2747 = vmpackc.low %vm2715, %vm2715
        %vm2748 = vmpackc.low %vm2716, %vm2716
        %vm2749 = vmpackc.low %vm2717, %vm2717
        %vm2750 = vmpackc.low %vm2718, %vm2718
        %vm2751 = vmpackc.low %vm2719, %vm2719
        %vm2752 = vmpackc.low %vm2720, %vm2720
        %vm2753 = vmpackc.low %vm2721, %vm2721
        %v2754 = vsel %vm2722, %v1589, 0
        %v2755 = vsel %vm2723, %v1590, 0
        %v2756 = vsel %vm2724, %v1591, 0
        %v2757 = vsel %vm2725, %v1592, 0
        %v2758 = vsel %vm2726, %v1593, 0
        %v2759 = vsel %vm2727, %v1594, 0
        %v2760 = vsel %vm2728, %v1595, 0
        %v2761 = vsel %vm2729, %v1596, 0
        %v2762 = vsel %vm2730, %v1597, 0
        %v2763 = vsel %vm2731, %v1598, 0
        %v2764 = vsel %vm2732, %v1599, 0
        %v2765 = vsel %vm2733, %v1600, 0
        %v2766 = vsel %vm2734, %v1601, 0
        %v2767 = vsel %vm2735, %v1602, 0
        %v2768 = vsel %vm2736, %v1603, 0
        %v2769 = vsel %vm2737, %v1604, 0
        %v2770 = vsel %vm2738, %v1605, 0
        %v2771 = vsel %vm2739, %v1606, 0
        %v2772 = vsel %vm2740, %v1607, 0
        %v2773 = vsel %vm2741, %v1608, 0
        %v2774 = vsel %vm2742, %v1609, 0
        %v2775 = vsel %vm2743, %v1610, 0
        %v2776 = vsel %vm2744, %v1611, 0
        %v2777 = vsel %vm2745, %v1612, 0
        %v2778 = vsel %vm2746, %v1613, 0
        %v2779 = vsel %vm2747, %v1614, 0
        %v2780 = vsel %vm2748, %v1615, 0
        %v2781 = vsel %vm2749, %v1616, 0
        %v2782 = vsel %vm2750, %v1617, 0
        %v2783 = vsel %vm2751, %v1618, 0
        %v2784 = vsel %vm2752, %v1619, 0
        %v2785 = vsel %vm2753, %v1620, 0
        %vm2786 = vsmask.f32 3328
        %vm2787 = vsmask.f32 7440
        %vm2788 = vmor %vm2786, %vm2787
        %v2790 = vshll.u32 %v2754, 16
        %v2792 = vrot.slane %v2790, 5
        %v2793 = vshrl.u32 %v2754, 16
        %v2795 = vrot.slane %v2793, 4
        %v2796 = vor.u32 %v2795, %v2792
        %v2797 = vrot.slane %v2796, 4
        %v2799 = vshll.u32 %v2755, 16
        %v2801 = vrot.slane %v2799, 5
        %v2802 = vsel %vm2788, %v2797, %v2801
        %v2803 = vshrl.u32 %v2755, 16
        %v2805 = vrot.slane %v2803, 4
        %v2806 = vor.u32 %v2805, %v2801
        %v2807 = vrot.slane %v2806, 4
        %v2809 = vshll.u32 %v2756, 16
        %v2811 = vrot.slane %v2809, 5
        %v2812 = vsel %vm2788, %v2807, %v2811
        %v2813 = vshrl.u32 %v2756, 16
        %v2815 = vrot.slane %v2813, 4
        %v2816 = vor.u32 %v2815, %v2811
        %v2817 = vrot.slane %v2816, 4
        %v2819 = vshll.u32 %v2757, 16
        %v2821 = vrot.slane %v2819, 5
        %v2822 = vsel %vm2788, %v2817, %v2821
        %v2823 = vshrl.u32 %v2757, 16
        %v2825 = vrot.slane %v2823, 4
        %v2826 = vor.u32 %v2825, %v2821
        %v2827 = vrot.slane %v2826, 4
        %v2829 = vshll.u32 %v2758, 16
        %v2831 = vrot.slane %v2829, 5
        %v2832 = vsel %vm2788, %v2827, %v2831
        %v2833 = vshrl.u32 %v2758, 16
        %v2835 = vrot.slane %v2833, 4
        %v2836 = vor.u32 %v2835, %v2831
        %v2837 = vrot.slane %v2836, 4
        %v2839 = vshll.u32 %v2759, 16
        %v2841 = vrot.slane %v2839, 5
        %v2842 = vsel %vm2788, %v2837, %v2841
        %v2843 = vshrl.u32 %v2759, 16
        %v2845 = vrot.slane %v2843, 4
        %v2846 = vor.u32 %v2845, %v2841
        %v2847 = vrot.slane %v2846, 4
        %v2849 = vshll.u32 %v2760, 16
        %v2851 = vrot.slane %v2849, 5
        %v2852 = vsel %vm2788, %v2847, %v2851
        %v2853 = vshrl.u32 %v2760, 16
        %v2855 = vrot.slane %v2853, 4
        %v2856 = vor.u32 %v2855, %v2851
        %v2857 = vrot.slane %v2856, 4
        %v2859 = vshll.u32 %v2761, 16
        %v2861 = vrot.slane %v2859, 5
        %v2862 = vsel %vm2788, %v2857, %v2861
        %v2863 = vshrl.u32 %v2761, 16
        %v2865 = vrot.slane %v2863, 4
        %v2866 = vor.u32 %v2865, %v2861
        %v2867 = vrot.slane %v2866, 4
        %v2869 = vshll.u32 %v2762, 16
        %v2871 = vrot.slane %v2869, 5
        %v2872 = vsel %vm2788, %v2867, %v2871
        %v2873 = vshrl.u32 %v2762, 16
        %v2875 = vrot.slane %v2873, 4
        %v2876 = vor.u32 %v2875, %v2871
        %v2877 = vrot.slane %v2876, 4
        %v2879 = vshll.u32 %v2763, 16
        %v2881 = vrot.slane %v2879, 5
        %v2882 = vsel %vm2788, %v2877, %v2881
        %v2883 = vshrl.u32 %v2763, 16
        %v2885 = vrot.slane %v2883, 4
        %v2886 = vor.u32 %v2885, %v2881
        %v2887 = vrot.slane %v2886, 4
        %v2889 = vshll.u32 %v2764, 16
        %v2891 = vrot.slane %v2889, 5
        %v2892 = vsel %vm2788, %v2887, %v2891
        %v2893 = vshrl.u32 %v2764, 16
        %v2895 = vrot.slane %v2893, 4
        %v2896 = vor.u32 %v2895, %v2891
        %v2897 = vrot.slane %v2896, 4
        %v2899 = vshll.u32 %v2765, 16
        %v2901 = vrot.slane %v2899, 5
        %v2902 = vsel %vm2788, %v2897, %v2901
        %v2903 = vshrl.u32 %v2765, 16
        %v2905 = vrot.slane %v2903, 4
        %v2906 = vor.u32 %v2905, %v2901
        %v2907 = vrot.slane %v2906, 4
        %v2909 = vshll.u32 %v2766, 16
        %v2911 = vrot.slane %v2909, 5
        %v2912 = vsel %vm2788, %v2907, %v2911
        %v2913 = vshrl.u32 %v2766, 16
        %v2915 = vrot.slane %v2913, 4
        %v2916 = vor.u32 %v2915, %v2911
        %v2917 = vrot.slane %v2916, 4
        %v2919 = vshll.u32 %v2767, 16
        %v2921 = vrot.slane %v2919, 5
        %v2922 = vsel %vm2788, %v2917, %v2921
        %v2923 = vshrl.u32 %v2767, 16
        %v2925 = vrot.slane %v2923, 4
        %v2926 = vor.u32 %v2925, %v2921
        %v2927 = vrot.slane %v2926, 4
        %v2929 = vshll.u32 %v2768, 16
        %v2931 = vrot.slane %v2929, 5
        %v2932 = vsel %vm2788, %v2927, %v2931
        %v2933 = vshrl.u32 %v2768, 16
        %v2935 = vrot.slane %v2933, 4
        %v2936 = vor.u32 %v2935, %v2931
        %v2937 = vrot.slane %v2936, 4
        %v2939 = vshll.u32 %v2769, 16
        %v2941 = vrot.slane %v2939, 5
        %v2942 = vsel %vm2788, %v2937, %v2941
        %v2943 = vshrl.u32 %v2769, 16
        %v2945 = vrot.slane %v2943, 4
        %v2946 = vor.u32 %v2945, %v2941
        %v2947 = vrot.slane %v2946, 4
        %v2949 = vshll.u32 %v2770, 16
        %v2951 = vrot.slane %v2949, 5
        %v2952 = vsel %vm2788, %v2947, %v2951
        %v2953 = vshrl.u32 %v2770, 16
        %v2955 = vrot.slane %v2953, 4
        %v2956 = vor.u32 %v2955, %v2951
        %v2957 = vrot.slane %v2956, 4
        %v2959 = vshll.u32 %v2771, 16
        %v2961 = vrot.slane %v2959, 5
        %v2962 = vsel %vm2788, %v2957, %v2961
        %v2963 = vshrl.u32 %v2771, 16
        %v2965 = vrot.slane %v2963, 4
        %v2966 = vor.u32 %v2965, %v2961
        %v2967 = vrot.slane %v2966, 4
        %v2969 = vshll.u32 %v2772, 16
        %v2971 = vrot.slane %v2969, 5
        %v2972 = vsel %vm2788, %v2967, %v2971
        %v2973 = vshrl.u32 %v2772, 16
        %v2975 = vrot.slane %v2973, 4
        %v2976 = vor.u32 %v2975, %v2971
        %v2977 = vrot.slane %v2976, 4
        %v2979 = vshll.u32 %v2773, 16
        %v2981 = vrot.slane %v2979, 5
        %v2982 = vsel %vm2788, %v2977, %v2981
        %v2983 = vshrl.u32 %v2773, 16
        %v2985 = vrot.slane %v2983, 4
        %v2986 = vor.u32 %v2985, %v2981
        %v2987 = vrot.slane %v2986, 4
        %v2989 = vshll.u32 %v2774, 16
        %v2991 = vrot.slane %v2989, 5
        %v2992 = vsel %vm2788, %v2987, %v2991
        %v2993 = vshrl.u32 %v2774, 16
        %v2995 = vrot.slane %v2993, 4
        %v2996 = vor.u32 %v2995, %v2991
        %v2997 = vrot.slane %v2996, 4
        %v2999 = vshll.u32 %v2775, 16
        %v3001 = vrot.slane %v2999, 5
        %v3002 = vsel %vm2788, %v2997, %v3001
        %v3003 = vshrl.u32 %v2775, 16
        %v3005 = vrot.slane %v3003, 4
        %v3006 = vor.u32 %v3005, %v3001
        %v3007 = vrot.slane %v3006, 4
        %v3009 = vshll.u32 %v2776, 16
        %v3011 = vrot.slane %v3009, 5
        %v3012 = vsel %vm2788, %v3007, %v3011
        %v3013 = vshrl.u32 %v2776, 16
        %v3015 = vrot.slane %v3013, 4
        %v3016 = vor.u32 %v3015, %v3011
        %v3017 = vrot.slane %v3016, 4
        %v3019 = vshll.u32 %v2777, 16
        %v3021 = vrot.slane %v3019, 5
        %v3022 = vsel %vm2788, %v3017, %v3021
        %v3023 = vshrl.u32 %v2777, 16
        %v3025 = vrot.slane %v3023, 4
        %v3026 = vor.u32 %v3025, %v3021
        %v3027 = vrot.slane %v3026, 4
        %v3029 = vshll.u32 %v2778, 16
        %v3031 = vrot.slane %v3029, 5
        %v3032 = vsel %vm2788, %v3027, %v3031
        %v3033 = vshrl.u32 %v2778, 16
        %v3035 = vrot.slane %v3033, 4
        %v3036 = vor.u32 %v3035, %v3031
        %v3037 = vrot.slane %v3036, 4
        %v3039 = vshll.u32 %v2779, 16
        %v3041 = vrot.slane %v3039, 5
        %v3042 = vsel %vm2788, %v3037, %v3041
        %v3043 = vshrl.u32 %v2779, 16
        %v3045 = vrot.slane %v3043, 4
        %v3046 = vor.u32 %v3045, %v3041
        %v3047 = vrot.slane %v3046, 4
        %v3049 = vshll.u32 %v2780, 16
        %v3051 = vrot.slane %v3049, 5
        %v3052 = vsel %vm2788, %v3047, %v3051
        %v3053 = vshrl.u32 %v2780, 16
        %v3055 = vrot.slane %v3053, 4
        %v3056 = vor.u32 %v3055, %v3051
        %v3057 = vrot.slane %v3056, 4
        %v3059 = vshll.u32 %v2781, 16
        %v3061 = vrot.slane %v3059, 5
        %v3062 = vsel %vm2788, %v3057, %v3061
        %v3063 = vshrl.u32 %v2781, 16
        %v3065 = vrot.slane %v3063, 4
        %v3066 = vor.u32 %v3065, %v3061
        %v3067 = vrot.slane %v3066, 4
        %v3069 = vshll.u32 %v2782, 16
        %v3071 = vrot.slane %v3069, 5
        %v3072 = vsel %vm2788, %v3067, %v3071
        %v3073 = vshrl.u32 %v2782, 16
        %v3075 = vrot.slane %v3073, 4
        %v3076 = vor.u32 %v3075, %v3071
        %v3077 = vrot.slane %v3076, 4
        %v3079 = vshll.u32 %v2783, 16
        %v3081 = vrot.slane %v3079, 5
        %v3082 = vsel %vm2788, %v3077, %v3081
        %v3083 = vshrl.u32 %v2783, 16
        %v3085 = vrot.slane %v3083, 4
        %v3086 = vor.u32 %v3085, %v3081
        %v3087 = vrot.slane %v3086, 4
        %v3089 = vshll.u32 %v2784, 16
        %v3091 = vrot.slane %v3089, 5
        %v3092 = vsel %vm2788, %v3087, %v3091
        %v3093 = vshrl.u32 %v2784, 16
        %v3095 = vrot.slane %v3093, 4
        %v3096 = vor.u32 %v3095, %v3091
        %v3097 = vrot.slane %v3096, 4
        %v3099 = vshll.u32 %v2785, 16
        %v3101 = vrot.slane %v3099, 5
        %v3102 = vsel %vm2788, %v3097, %v3101
        %v3103 = vshrl.u32 %v2785, 16
        %v3105 = vrot.slane %v3103, 4
        %v3106 = vor.u32 %v3105, %v3101
        %v3107 = vrot.slane %v3106, 4
        %v3141 = vld [vmem:[#allocation2 + $0x14] sm:$0x8]
        %v3142 = vsel %vm1640, %v2792, %v3141
        %3143 = vst [vmem:[#allocation2 + $0x14] sm:$0x8] %v3142
        %3144 = vst [vmem:[#allocation2 + $0x20] sm:$0xf] %v2802
        %3145 = vst [vmem:[#allocation2 + $0x2c] sm:$0xf] %v2812
        %3146 = vst [vmem:[#allocation2 + $0x38] sm:$0xf] %v2822
        %3147 = vst [vmem:[#allocation2 + $0x44] sm:$0xf] %v2832
        %3148 = vst [vmem:[#allocation2 + $0x50] sm:$0xf] %v2842
        %3149 = vst [vmem:[#allocation2 + $0x5c] sm:$0xf] %v2852
        %3150 = vst [vmem:[#allocation2 + $0x68] sm:$0xf] %v2862
        %3151 = vst [vmem:[#allocation2 + $0x74] sm:$0xf] %v2872
        %3152 = vst [vmem:[#allocation2 + $0x80] sm:$0xf] %v2882
        %3153 = vst [vmem:[#allocation2 + $0x8c] sm:$0xf] %v2892
        %3154 = vst [vmem:[#allocation2 + $0x98] sm:$0xf] %v2902
        %3155 = vst [vmem:[#allocation2 + $0xa4] sm:$0xf] %v2912
        %3156 = vst [vmem:[#allocation2 + $0xb0] sm:$0xf] %v2922
        %3157 = vst [vmem:[#allocation2 + $0xbc] sm:$0xf] %v2932
        %3158 = vst [vmem:[#allocation2 + $0xc8] sm:$0xf] %v2942
        %3159 = vst [vmem:[#allocation2 + $0xd4] sm:$0xf] %v2952
        %3160 = vst [vmem:[#allocation2 + $0xe0] sm:$0xf] %v2962
        %3161 = vst [vmem:[#allocation2 + $0xec] sm:$0xf] %v2972
        %3162 = vst [vmem:[#allocation2 + $0xf8] sm:$0xf] %v2982
        %3163 = vst [vmem:[#allocation2 + $0x104] sm:$0xf] %v2992
        %3164 = vst [vmem:[#allocation2 + $0x110] sm:$0xf] %v3002
        %3165 = vst [vmem:[#allocation2 + $0x11c] sm:$0xf] %v3012
        %3166 = vst [vmem:[#allocation2 + $0x128] sm:$0xf] %v3022
        %3167 = vst [vmem:[#allocation2 + $0x134] sm:$0xf] %v3032
        %3168 = vst [vmem:[#allocation2 + $0x140] sm:$0xf] %v3042
        %3169 = vst [vmem:[#allocation2 + $0x14c] sm:$0xf] %v3052
        %3170 = vst [vmem:[#allocation2 + $0x158] sm:$0xf] %v3062
        %3171 = vst [vmem:[#allocation2 + $0x164] sm:$0xf] %v3072
        %3172 = vst [vmem:[#allocation2 + $0x170] sm:$0xf] %v3082
        %3173 = vst [vmem:[#allocation2 + $0x17c] sm:$0xf] %v3092
        %3174 = vst [vmem:[#allocation2 + $0x188] sm:$0xf] %v3102
        %vm3175 = vmand %vm2586, %vm2786
        %v3176 = vld [vmem:[#allocation2 + $0x194] sm:$0xf]
        %v3177 = vsel %vm3175, %v3107, %v3176
        %3178 = vst [vmem:[#allocation2 + $0x194] sm:$0xf] %v3177
        %v3179 = vld [vmem:[#allocation2] sm:$0xff]
        %v3180 = vld [vmem:[#allocation2 + $0x8] sm:$0xf]
        %v3181 = vld [vmem:[#allocation2 + $0xc] sm:$0xff]
        %v3182 = vld [vmem:[#allocation2 + $0x14] sm:$0xf]
        %v3183 = vld [vmem:[#allocation2 + $0x18] sm:$0xff]
        %v3184 = vld [vmem:[#allocation2 + $0x20] sm:$0xf]
        %v3185 = vld [vmem:[#allocation2 + $0x24] sm:$0xff]
        %v3186 = vld [vmem:[#allocation2 + $0x2c] sm:$0xf]
        %v3187 = vld [vmem:[#allocation2 + $0x30] sm:$0xff]
        %v3188 = vld [vmem:[#allocation2 + $0x38] sm:$0xf]
        %v3189 = vld [vmem:[#allocation2 + $0x3c] sm:$0xff]
        %v3190 = vld [vmem:[#allocation2 + $0x44] sm:$0xf]
        %v3191 = vld [vmem:[#allocation2 + $0x48] sm:$0xff]
        %v3192 = vld [vmem:[#allocation2 + $0x50] sm:$0xf]
        %v3193 = vld [vmem:[#allocation2 + $0x54] sm:$0xff]
        %v3194 = vld [vmem:[#allocation2 + $0x5c] sm:$0xf]
        %v3195 = vld [vmem:[#allocation2 + $0x60] sm:$0xff]
        %v3196 = vld [vmem:[#allocation2 + $0x68] sm:$0xf]
        %v3197 = vld [vmem:[#allocation2 + $0x6c] sm:$0xff]
        %v3198 = vld [vmem:[#allocation2 + $0x74] sm:$0xf]
        %v3199 = vld [vmem:[#allocation2 + $0x78] sm:$0xff]
        %v3200 = vld [vmem:[#allocation2 + $0x80] sm:$0xf]
        %v3201 = vld [vmem:[#allocation2 + $0x84] sm:$0xff]
        %v3202 = vld [vmem:[#allocation2 + $0x8c] sm:$0xf]
        %v3203 = vld [vmem:[#allocation2 + $0x90] sm:$0xff]
        %v3204 = vld [vmem:[#allocation2 + $0x98] sm:$0xf]
        %v3205 = vld [vmem:[#allocation2 + $0x9c] sm:$0xff]
        %v3206 = vld [vmem:[#allocation2 + $0xa4] sm:$0xf]
        %v3207 = vld [vmem:[#allocation2 + $0xa8] sm:$0xff]
        %v3208 = vld [vmem:[#allocation2 + $0xb0] sm:$0xf]
        %v3209 = vld [vmem:[#allocation2 + $0xb4] sm:$0xff]
        %v3210 = vld [vmem:[#allocation2 + $0xbc] sm:$0xf]
        %v3211 = vld [vmem:[#allocation2 + $0xc0] sm:$0xff]
        %v3212 = vld [vmem:[#allocation2 + $0xc8] sm:$0xf]
        %v3213 = vld [vmem:[#allocation2 + $0xcc] sm:$0xff]
        %v3214 = vld [vmem:[#allocation2 + $0xd4] sm:$0xf]
        %v3215 = vld [vmem:[#allocation2 + $0xd8] sm:$0xff]
        %v3216 = vld [vmem:[#allocation2 + $0xe0] sm:$0xf]
        %v3217 = vld [vmem:[#allocation2 + $0xe4] sm:$0xff]
        %v3218 = vld [vmem:[#allocation2 + $0xec] sm:$0xf]
        %v3219 = vld [vmem:[#allocation2 + $0xf0] sm:$0xff]
        %v3220 = vld [vmem:[#allocation2 + $0xf8] sm:$0xf]
        %v3221 = vld [vmem:[#allocation2 + $0xfc] sm:$0xff]
        %v3222 = vld [vmem:[#allocation2 + $0x104] sm:$0xf]
        %v3223 = vld [vmem:[#allocation2 + $0x108] sm:$0xff]
        %v3224 = vld [vmem:[#allocation2 + $0x110] sm:$0xf]
        %v3225 = vld [vmem:[#allocation2 + $0x114] sm:$0xff]
        %v3226 = vld [vmem:[#allocation2 + $0x11c] sm:$0xf]
        %v3227 = vld [vmem:[#allocation2 + $0x120] sm:$0xff]
        %v3228 = vld [vmem:[#allocation2 + $0x128] sm:$0xf]
        %v3229 = vld [vmem:[#allocation2 + $0x12c] sm:$0xff]
        %v3230 = vld [vmem:[#allocation2 + $0x134] sm:$0xf]
        %v3231 = vld [vmem:[#allocation2 + $0x138] sm:$0xff]
        %v3232 = vld [vmem:[#allocation2 + $0x140] sm:$0xf]
        %v3233 = vld [vmem:[#allocation2 + $0x144] sm:$0xff]
        %v3234 = vld [vmem:[#allocation2 + $0x14c] sm:$0xf]
        %v3235 = vld [vmem:[#allocation2 + $0x150] sm:$0xff]
        %v3236 = vld [vmem:[#allocation2 + $0x158] sm:$0xf]
        %v3237 = vld [vmem:[#allocation2 + $0x15c] sm:$0xff]
        %v3238 = vld [vmem:[#allocation2 + $0x164] sm:$0xf]
        %v3239 = vld [vmem:[#allocation2 + $0x168] sm:$0xff]
        %v3240 = vld [vmem:[#allocation2 + $0x170] sm:$0xf]
        %v3241 = vld [vmem:[#allocation2 + $0x174] sm:$0xff]
        %v3242 = vld [vmem:[#allocation2 + $0x17c] sm:$0xf]
        %v3243 = vld [vmem:[#allocation8] sm:$0xf]
        %v3244 = vld [vmem:[#allocation8 + $0x4] sm:$0xf]
        %v3245 = vld [vmem:[#allocation8 + $0x8] sm:$0xf]
        %v3246 = vld [vmem:[#allocation8 + $0xc] sm:$0xf]
        %v3247 = vld [vmem:[#allocation8 + $0x10] sm:$0xf]
        %v3248 = vld [vmem:[#allocation8 + $0x14] sm:$0xf]
        %v3249 = vld [vmem:[#allocation8 + $0x18] sm:$0xf]
        %v3250 = vld [vmem:[#allocation8 + $0x1c] sm:$0xf]
        %v3251 = vld [vmem:[#allocation8 + $0x20] sm:$0xf]
        %v3252 = vld [vmem:[#allocation8 + $0x24] sm:$0xf]
        %v3253 = vld [vmem:[#allocation8 + $0x28] sm:$0xf]
        %v3254 = vld [vmem:[#allocation8 + $0x2c] sm:$0xf]
        %v3255 = vld [vmem:[#allocation8 + $0x30] sm:$0xf]
        %v3256 = vld [vmem:[#allocation8 + $0x34] sm:$0xf]
        %v3257 = vld [vmem:[#allocation8 + $0x38] sm:$0xf]
        %v3258 = vld [vmem:[#allocation8 + $0x3c] sm:$0xf]
        %v3259 = vld [vmem:[#allocation8 + $0x40] sm:$0xf]
        %v3260 = vld [vmem:[#allocation8 + $0x44] sm:$0xf]
        %v3261 = vld [vmem:[#allocation8 + $0x48] sm:$0xf]
        %v3262 = vld [vmem:[#allocation8 + $0x4c] sm:$0xf]
        %v3263 = vld [vmem:[#allocation8 + $0x50] sm:$0xf]
        %v3264 = vld [vmem:[#allocation8 + $0x54] sm:$0xf]
        %v3265 = vld [vmem:[#allocation8 + $0x58] sm:$0xf]
        %v3266 = vld [vmem:[#allocation8 + $0x5c] sm:$0xf]
        %v3267 = vld [vmem:[#allocation8 + $0x60] sm:$0xf]
        %v3268 = vld [vmem:[#allocation8 + $0x64] sm:$0xf]
        %v3269 = vld [vmem:[#allocation8 + $0x68] sm:$0xf]
        %v3270 = vld [vmem:[#allocation8 + $0x6c] sm:$0xf]
        %v3271 = vld [vmem:[#allocation8 + $0x70] sm:$0xf]
        %v3272 = vld [vmem:[#allocation8 + $0x74] sm:$0xf]
        %v3273 = vld [vmem:[#allocation8 + $0x78] sm:$0xf]
        %v3274 = vld [vmem:[#allocation8 + $0x7c] sm:$0xf]
        %v3275 = vld [vmem:[#allocation8 + $0x80] sm:$0xf]
        %v3276 = vld [vmem:[#allocation8 + $0x84] sm:$0xf]
        %v3277 = vld [vmem:[#allocation8 + $0x88] sm:$0xf]
        %v3278 = vld [vmem:[#allocation8 + $0x8c] sm:$0xf]
        %v3279 = vld [vmem:[#allocation8 + $0x90] sm:$0xf]
        %v3280 = vld [vmem:[#allocation8 + $0x94] sm:$0xf]
        %v3281 = vld [vmem:[#allocation8 + $0x98] sm:$0xf]
        %v3282 = vld [vmem:[#allocation8 + $0x9c] sm:$0xf]
        %v3283 = vld [vmem:[#allocation8 + $0xa0] sm:$0xf]
        %v3284 = vld [vmem:[#allocation8 + $0xa4] sm:$0xf]
        %v3285 = vld [vmem:[#allocation8 + $0xa8] sm:$0xf]
        %v3286 = vld [vmem:[#allocation8 + $0xac] sm:$0xf]
        %v3287 = vld [vmem:[#allocation8 + $0xb0] sm:$0xf]
        %v3288 = vld [vmem:[#allocation8 + $0xb4] sm:$0xf]
        %v3289 = vld [vmem:[#allocation8 + $0xb8] sm:$0xf]
        %v3290 = vld [vmem:[#allocation8 + $0xbc] sm:$0xf]
        %v3291 = vld [vmem:[#allocation2 + $0x180] sm:$0xff]
        %v3292 = vld [vmem:[#allocation2 + $0x188] sm:$0xf]
        %v3293 = vld [vmem:[#allocation2 + $0x18c] sm:$0xff]
        %v3294 = vld [vmem:[#allocation2 + $0x194] sm:$0xf]
        %s3295 = scalar_lea.vmem [#allocation8], 192
        %v3296 = vld [vmem:[%s3295] sm:$0xf]
        %v3297 = vld [vmem:[%s3295 + $0x4] sm:$0xf]
        %v3298 = vld [vmem:[%s3295 + $0x8] sm:$0xf]
        %v3299 = vld [vmem:[%s3295 + $0xc] sm:$0xf]
        %v3300 = vld [vmem:[%s3295 + $0x10] sm:$0xf]
        %v3301 = vld [vmem:[%s3295 + $0x14] sm:$0xf]
        %v3302 = vld [vmem:[%s3295 + $0x18] sm:$0xf]
        %v3303 = vld [vmem:[%s3295 + $0x1c] sm:$0xf]
        %v3304 = vld [vmem:[%s3295 + $0x20] sm:$0xf]
        %v3305 = vld [vmem:[%s3295 + $0x24] sm:$0xf]
        %v3306 = vld [vmem:[%s3295 + $0x28] sm:$0xf]
        %v3307 = vld [vmem:[%s3295 + $0x2c] sm:$0xf]
        %v3308 = vld [vmem:[%s3295 + $0x30] sm:$0xf]
        %v3309 = vld [vmem:[%s3295 + $0x34] sm:$0xf]
        %v3310 = vld [vmem:[%s3295 + $0x38] sm:$0xf]
        %v3311 = vld [vmem:[%s3295 + $0x3c] sm:$0xf]
        %v3312 = vld [vmem:[%s3295 + $0x40] sm:$0xf]
        %v3313 = vld [vmem:[%s3295 + $0x44] sm:$0xf]
        %v3314 = vld [vmem:[%s3295 + $0x48] sm:$0xf]
        %v3315 = vld [vmem:[%s3295 + $0x4c] sm:$0xf]
        %v3316 = vld [vmem:[%s3295 + $0x50] sm:$0xf]
        %v3317 = vld [vmem:[%s3295 + $0x54] sm:$0xf]
        %v3318 = vld [vmem:[%s3295 + $0x58] sm:$0xf]
        %v3319 = vld [vmem:[%s3295 + $0x5c] sm:$0xf]
        %v3320 = vld [vmem:[%s3295 + $0x60] sm:$0xf]
        %v3321 = vld [vmem:[%s3295 + $0x64] sm:$0xf]
        %v3322 = vld [vmem:[%s3295 + $0x68] sm:$0xf]
        %v3323 = vld [vmem:[%s3295 + $0x6c] sm:$0xf]
        %v3324 = vld [vmem:[%s3295 + $0x70] sm:$0xf]
        %v3325 = vld [vmem:[%s3295 + $0x74] sm:$0xf]
        %v3326 = vld [vmem:[%s3295 + $0x78] sm:$0xf]
        %v3327 = vld [vmem:[%s3295 + $0x7c] sm:$0xf]
        %v3328 = vld [vmem:[%s3295 + $0x80] sm:$0xf]
        %v3329 = vld [vmem:[%s3295 + $0x84] sm:$0xf]
        %v3330 = vld [vmem:[%s3295 + $0x88] sm:$0xf]
        %v3331 = vld [vmem:[%s3295 + $0x8c] sm:$0xf]
        %v3332 = vld [vmem:[%s3295 + $0x90] sm:$0xf]
        %v3333 = vld [vmem:[%s3295 + $0x94] sm:$0xf]
        %v3334 = vld [vmem:[%s3295 + $0x98] sm:$0xf]
        %v3335 = vld [vmem:[%s3295 + $0x9c] sm:$0xf]
        %v3336 = vld [vmem:[%s3295 + $0xa0] sm:$0xf]
        %v3337 = vld [vmem:[%s3295 + $0xa4] sm:$0xf]
        %v3338 = vld [vmem:[%s3295 + $0xa8] sm:$0xf]
        %v3339 = vld [vmem:[%s3295 + $0xac] sm:$0xf]
        %v3340 = vld [vmem:[%s3295 + $0xb0] sm:$0xf]
        %v3341 = vld [vmem:[%s3295 + $0xb4] sm:$0xf]
        %v3342 = vld [vmem:[%s3295 + $0xb8] sm:$0xf]
        %v3343 = vld [vmem:[%s3295 + $0xbc] sm:$0xf]
        %v3408 = vunpack.c.l.b16 %v3183
        %v3409 = vunpack.c.h.b16 %v3183
        %v3410 = vunpack.c.l.b16 %v3184
        %v3411 = vunpack.c.l.b16 %v3185
        %v3412 = vunpack.c.h.b16 %v3185
        %v3413 = vunpack.c.l.b16 %v3186
        %v3414 = vunpack.c.l.b16 %v3187
        %v3415 = vunpack.c.h.b16 %v3187
        %v3416 = vunpack.c.l.b16 %v3188
        %v3417 = vunpack.c.l.b16 %v3189
        %v3418 = vunpack.c.h.b16 %v3189
        %v3419 = vunpack.c.l.b16 %v3190
        %v3420 = vunpack.c.l.b16 %v3191
        %v3421 = vunpack.c.h.b16 %v3191
        %v3422 = vunpack.c.l.b16 %v3192
        %v3423 = vunpack.c.l.b16 %v3193
        %v3424 = vunpack.c.h.b16 %v3193
        %v3425 = vunpack.c.l.b16 %v3194
        %v3426 = vunpack.c.l.b16 %v3195
        %v3427 = vunpack.c.h.b16 %v3195
        %v3428 = vunpack.c.l.b16 %v3196
        %v3429 = vunpack.c.l.b16 %v3197
        %v3430 = vunpack.c.h.b16 %v3197
        %v3431 = vunpack.c.l.b16 %v3198
        %v3432 = vunpack.c.l.b16 %v3199
        %v3433 = vunpack.c.h.b16 %v3199
        %v3434 = vunpack.c.l.b16 %v3200
        %v3435 = vunpack.c.l.b16 %v3201
        %v3436 = vunpack.c.h.b16 %v3201
        %v3437 = vunpack.c.l.b16 %v3202
        %v3438 = vunpack.c.l.b16 %v3203
        %v3439 = vunpack.c.h.b16 %v3203
        %v3440 = vunpack.c.l.b16 %v3204
        %v3441 = vunpack.c.l.b16 %v3205
        %v3442 = vunpack.c.h.b16 %v3205
        %v3443 = vunpack.c.l.b16 %v3206
        %v3444 = vunpack.c.l.b16 %v3207
        %v3445 = vunpack.c.h.b16 %v3207
        %v3446 = vunpack.c.l.b16 %v3208
        %v3447 = vunpack.c.l.b16 %v3209
        %v3448 = vunpack.c.h.b16 %v3209
        %v3449 = vunpack.c.l.b16 %v3210
        %v3450 = vunpack.c.l.b16 %v3211
        %v3451 = vunpack.c.h.b16 %v3211
        %v3452 = vunpack.c.l.b16 %v3212
        %v3453 = vunpack.c.l.b16 %v3213
        %v3454 = vunpack.c.h.b16 %v3213
        %v3455 = vunpack.c.l.b16 %v3214
        %v3456 = vunpack.c.l.b16 %v3215
        %v3457 = vunpack.c.h.b16 %v3215
        %v3458 = vunpack.c.l.b16 %v3216
        %v3459 = vunpack.c.l.b16 %v3217
        %v3460 = vunpack.c.h.b16 %v3217
        %v3461 = vunpack.c.l.b16 %v3218
        %v3462 = vunpack.c.l.b16 %v3219
        %v3463 = vunpack.c.h.b16 %v3219
        %v3464 = vunpack.c.l.b16 %v3220
        %v3465 = vunpack.c.l.b16 %v3221
        %v3466 = vunpack.c.h.b16 %v3221
        %v3467 = vunpack.c.l.b16 %v3222
        %v3468 = vunpack.c.l.b16 %v3223
        %v3469 = vunpack.c.h.b16 %v3223
        %v3470 = vunpack.c.l.b16 %v3224
        %v3471 = vunpack.c.l.b16 %v3225
        %v3472 = vunpack.c.h.b16 %v3225
        %v3473 = vunpack.c.l.b16 %v3226
        %v3474 = vunpack.c.l.b16 %v3227
        %v3475 = vunpack.c.h.b16 %v3227
        %v3476 = vunpack.c.l.b16 %v3228
        %v3477 = vunpack.c.l.b16 %v3229
        %v3478 = vunpack.c.h.b16 %v3229
        %v3479 = vunpack.c.l.b16 %v3230
        %v3480 = vunpack.c.l.b16 %v3231
        %v3481 = vunpack.c.h.b16 %v3231
        %v3482 = vunpack.c.l.b16 %v3232
        %v3483 = vunpack.c.l.b16 %v3233
        %v3484 = vunpack.c.h.b16 %v3233
        %v3485 = vunpack.c.l.b16 %v3234
        %v3486 = vunpack.c.l.b16 %v3235
        %v3487 = vunpack.c.h.b16 %v3235
        %v3488 = vunpack.c.l.b16 %v3236
        %v3489 = vunpack.c.l.b16 %v3237
        %v3490 = vunpack.c.h.b16 %v3237
        %v3491 = vunpack.c.l.b16 %v3238
        %v3492 = vunpack.c.l.b16 %v3239
        %v3493 = vunpack.c.h.b16 %v3239
        %v3494 = vunpack.c.l.b16 %v3240
        %v3495 = vunpack.c.l.b16 %v3241
        %v3496 = vunpack.c.h.b16 %v3241
        %v3497 = vunpack.c.l.b16 %v3242
        %v3498 = vunpack.c.l.b16 %v3291
        %v3499 = vunpack.c.h.b16 %v3291
        %v3500 = vunpack.c.l.b16 %v3292
        %v3501 = vunpack.c.l.b16 %v3293
        %v3502 = vunpack.c.h.b16 %v3293
        %v3503 = vunpack.c.l.b16 %v3294
        %v3504 = vpack.c.b16 %v3411, %v3408
        %v3505 = vpack.c.b16 %v3412, %v3409
        %v3506 = vpack.c.b16 %v3413, %v3410
        %v3507 = vpack.c.b16 %v3417, %v3414
        %v3508 = vpack.c.b16 %v3418, %v3415
        %v3509 = vpack.c.b16 %v3419, %v3416
        %v3510 = vpack.c.b16 %v3423, %v3420
        %v3511 = vpack.c.b16 %v3424, %v3421
        %v3512 = vpack.c.b16 %v3425, %v3422
        %v3513 = vpack.c.b16 %v3429, %v3426
        %v3514 = vpack.c.b16 %v3430, %v3427
        %v3515 = vpack.c.b16 %v3431, %v3428
        %v3516 = vpack.c.b16 %v3435, %v3432
        %v3517 = vpack.c.b16 %v3436, %v3433
        %v3518 = vpack.c.b16 %v3437, %v3434
        %v3519 = vpack.c.b16 %v3441, %v3438
        %v3520 = vpack.c.b16 %v3442, %v3439
        %v3521 = vpack.c.b16 %v3443, %v3440
        %v3522 = vpack.c.b16 %v3447, %v3444
        %v3523 = vpack.c.b16 %v3448, %v3445
        %v3524 = vpack.c.b16 %v3449, %v3446
        %v3525 = vpack.c.b16 %v3453, %v3450
        %v3526 = vpack.c.b16 %v3454, %v3451
        %v3527 = vpack.c.b16 %v3455, %v3452
        %v3528 = vpack.c.b16 %v3459, %v3456
        %v3529 = vpack.c.b16 %v3460, %v3457
        %v3530 = vpack.c.b16 %v3461, %v3458
        %v3531 = vpack.c.b16 %v3465, %v3462
        %v3532 = vpack.c.b16 %v3466, %v3463
        %v3533 = vpack.c.b16 %v3467, %v3464
        %v3534 = vpack.c.b16 %v3471, %v3468
        %v3535 = vpack.c.b16 %v3472, %v3469
        %v3536 = vpack.c.b16 %v3473, %v3470
        %v3537 = vpack.c.b16 %v3477, %v3474
        %v3538 = vpack.c.b16 %v3478, %v3475
        %v3539 = vpack.c.b16 %v3479, %v3476
        %v3540 = vpack.c.b16 %v3483, %v3480
        %v3541 = vpack.c.b16 %v3484, %v3481
        %v3542 = vpack.c.b16 %v3485, %v3482
        %v3543 = vpack.c.b16 %v3489, %v3486
        %v3544 = vpack.c.b16 %v3490, %v3487
        %v3545 = vpack.c.b16 %v3491, %v3488
        %v3546 = vpack.c.b16 %v3495, %v3492
        %v3547 = vpack.c.b16 %v3496, %v3493
        %v3548 = vpack.c.b16 %v3497, %v3494
        %v3549 = vpack.c.b16 %v3501, %v3498
        %v3550 = vpack.c.b16 %v3502, %v3499
        %v3551 = vpack.c.b16 %v3503, %v3500
        %v3648 = vunpack.c.l.b16 %v3296
        %v3649 = vunpack.c.l.b16 %v3297
        %v3650 = vunpack.c.l.b16 %v3298
        %v3651 = vunpack.c.l.b16 %v3299
        %v3652 = vunpack.c.l.b16 %v3300
        %v3653 = vunpack.c.l.b16 %v3301
        %v3654 = vunpack.c.l.b16 %v3302
        %v3655 = vunpack.c.l.b16 %v3303
        %v3656 = vunpack.c.l.b16 %v3304
        %v3657 = vunpack.c.l.b16 %v3305
        %v3658 = vunpack.c.l.b16 %v3306
        %v3659 = vunpack.c.l.b16 %v3307
        %v3660 = vunpack.c.l.b16 %v3308
        %v3661 = vunpack.c.l.b16 %v3309
        %v3662 = vunpack.c.l.b16 %v3310
        %v3663 = vunpack.c.l.b16 %v3311
        %v3664 = vunpack.c.l.b16 %v3312
        %v3665 = vunpack.c.l.b16 %v3313
        %v3666 = vunpack.c.l.b16 %v3314
        %v3667 = vunpack.c.l.b16 %v3315
        %v3668 = vunpack.c.l.b16 %v3316
        %v3669 = vunpack.c.l.b16 %v3317
        %v3670 = vunpack.c.l.b16 %v3318
        %v3671 = vunpack.c.l.b16 %v3319
        %v3672 = vunpack.c.l.b16 %v3320
        %v3673 = vunpack.c.l.b16 %v3321
        %v3674 = vunpack.c.l.b16 %v3322
        %v3675 = vunpack.c.l.b16 %v3323
        %v3676 = vunpack.c.l.b16 %v3324
        %v3677 = vunpack.c.l.b16 %v3325
        %v3678 = vunpack.c.l.b16 %v3326
        %v3679 = vunpack.c.l.b16 %v3327
        %v3680 = vunpack.c.l.b16 %v3328
        %v3681 = vunpack.c.l.b16 %v3329
        %v3682 = vunpack.c.l.b16 %v3330
        %v3683 = vunpack.c.l.b16 %v3331
        %v3684 = vunpack.c.l.b16 %v3332
        %v3685 = vunpack.c.l.b16 %v3333
        %v3686 = vunpack.c.l.b16 %v3334
        %v3687 = vunpack.c.l.b16 %v3335
        %v3688 = vunpack.c.l.b16 %v3336
        %v3689 = vunpack.c.l.b16 %v3337
        %v3690 = vunpack.c.l.b16 %v3338
        %v3691 = vunpack.c.l.b16 %v3339
        %v3692 = vunpack.c.l.b16 %v3340
        %v3693 = vunpack.c.l.b16 %v3341
        %v3694 = vunpack.c.l.b16 %v3342
        %v3695 = vunpack.c.l.b16 %v3343
        %v3696 = vpack.c.b16 %v3649, %v3648
        %v3697 = vpack.c.b16 %v3651, %v3650
        %v3698 = vpack.c.b16 %v3653, %v3652
        %v3699 = vpack.c.b16 %v3655, %v3654
        %v3700 = vpack.c.b16 %v3657, %v3656
        %v3701 = vpack.c.b16 %v3659, %v3658
        %v3702 = vpack.c.b16 %v3661, %v3660
        %v3703 = vpack.c.b16 %v3663, %v3662
        %v3704 = vpack.c.b16 %v3665, %v3664
        %v3705 = vpack.c.b16 %v3667, %v3666
        %v3706 = vpack.c.b16 %v3669, %v3668
        %v3707 = vpack.c.b16 %v3671, %v3670
        %v3708 = vpack.c.b16 %v3673, %v3672
        %v3709 = vpack.c.b16 %v3675, %v3674
        %v3710 = vpack.c.b16 %v3677, %v3676
        %v3711 = vpack.c.b16 %v3679, %v3678
        %v3712 = vpack.c.b16 %v3681, %v3680
        %v3713 = vpack.c.b16 %v3683, %v3682
        %v3714 = vpack.c.b16 %v3685, %v3684
        %v3715 = vpack.c.b16 %v3687, %v3686
        %v3716 = vpack.c.b16 %v3689, %v3688
        %v3717 = vpack.c.b16 %v3691, %v3690
        %v3718 = vpack.c.b16 %v3693, %v3692
        %v3719 = vpack.c.b16 %v3695, %v3694
        %3744 = vmatpush.bf16.msra.mxu0 %v3703
        %3745 = vmatpush.bf16.msra.mxu0 %v3702
        %3746 = vmatpush.bf16.msra.mxu0 %v3701
        %3747 = vmatpush.bf16.msra.mxu0 %v3700
        %3748 = vmatpush.bf16.msra.mxu0 %v3699
        %3749 = vmatpush.bf16.msra.mxu0 %v3698
        %3750 = vmatpush.bf16.msra.mxu0 %v3697
        %3751 = vmatpush.bf16.msra.mxu0 %v3696
        %3752 = vmatmul.bf16.gmra.mxu0 %v3504
        %v3753 = vpop.f32.mrf.mxu0
        %v3754 = vadd.f32 0.0, %v3753
        %v3755 = vpop.f32.mrf.mxu0
        %v3756 = vadd.f32 0.0, %v3755
        %3757 = vmatmul.bf16.gmra.mxu0 %v3507
        %v3758 = vpop.f32.mrf.mxu0
        %v3759 = vadd.f32 0.0, %v3758
        %v3760 = vpop.f32.mrf.mxu0
        %v3761 = vadd.f32 0.0, %v3760
        %3762 = vmatmul.bf16.gmra.mxu0 %v3510
        %v3763 = vpop.f32.mrf.mxu0
        %v3764 = vadd.f32 0.0, %v3763
        %v3765 = vpop.f32.mrf.mxu0
        %v3766 = vadd.f32 0.0, %v3765
        %3767 = vmatmul.bf16.gmra.mxu0 %v3513
        %v3768 = vpop.f32.mrf.mxu0
        %v3769 = vadd.f32 0.0, %v3768
        %v3770 = vpop.f32.mrf.mxu0
        %v3771 = vadd.f32 0.0, %v3770
        %3772 = vmatmul.bf16.gmra.mxu0 %v3516
        %v3773 = vpop.f32.mrf.mxu0
        %v3774 = vadd.f32 0.0, %v3773
        %v3775 = vpop.f32.mrf.mxu0
        %v3776 = vadd.f32 0.0, %v3775
        %3777 = vmatmul.bf16.gmra.mxu0 %v3519
        %v3778 = vpop.f32.mrf.mxu0
        %v3779 = vadd.f32 0.0, %v3778
        %v3780 = vpop.f32.mrf.mxu0
        %v3781 = vadd.f32 0.0, %v3780
        %3782 = vmatmul.bf16.gmra.mxu0 %v3522
        %v3783 = vpop.f32.mrf.mxu0
        %v3784 = vadd.f32 0.0, %v3783
        %v3785 = vpop.f32.mrf.mxu0
        %v3786 = vadd.f32 0.0, %v3785
        %3787 = vmatmul.bf16.gmra.mxu0 %v3525
        %v3788 = vpop.f32.mrf.mxu0
        %v3789 = vadd.f32 0.0, %v3788
        %v3790 = vpop.f32.mrf.mxu0
        %v3791 = vadd.f32 0.0, %v3790
        %3792 = vmatmul.bf16.gmra.mxu0 %v3528
        %v3793 = vpop.f32.mrf.mxu0
        %v3794 = vadd.f32 0.0, %v3793
        %v3795 = vpop.f32.mrf.mxu0
        %v3796 = vadd.f32 0.0, %v3795
        %3797 = vmatmul.bf16.gmra.mxu0 %v3531
        %v3798 = vpop.f32.mrf.mxu0
        %v3799 = vadd.f32 0.0, %v3798
        %v3800 = vpop.f32.mrf.mxu0
        %v3801 = vadd.f32 0.0, %v3800
        %3802 = vmatmul.bf16.gmra.mxu0 %v3534
        %v3803 = vpop.f32.mrf.mxu0
        %v3804 = vadd.f32 0.0, %v3803
        %v3805 = vpop.f32.mrf.mxu0
        %v3806 = vadd.f32 0.0, %v3805
        %3807 = vmatmul.bf16.gmra.mxu0 %v3537
        %v3808 = vpop.f32.mrf.mxu0
        %v3809 = vadd.f32 0.0, %v3808
        %v3810 = vpop.f32.mrf.mxu0
        %v3811 = vadd.f32 0.0, %v3810
        %3812 = vmatmul.bf16.gmra.mxu0 %v3540
        %v3813 = vpop.f32.mrf.mxu0
        %v3814 = vadd.f32 0.0, %v3813
        %v3815 = vpop.f32.mrf.mxu0
        %v3816 = vadd.f32 0.0, %v3815
        %3817 = vmatmul.bf16.gmra.mxu0 %v3543
        %v3818 = vpop.f32.mrf.mxu0
        %v3819 = vadd.f32 0.0, %v3818
        %v3820 = vpop.f32.mrf.mxu0
        %v3821 = vadd.f32 0.0, %v3820
        %3822 = vmatmul.bf16.gmra.mxu0 %v3546
        %v3823 = vpop.f32.mrf.mxu0
        %v3824 = vadd.f32 0.0, %v3823
        %v3825 = vpop.f32.mrf.mxu0
        %v3826 = vadd.f32 0.0, %v3825
        %3827 = vmatmul.bf16.gmra.mxu0 %v3549
        %v3828 = vpop.f32.mrf.mxu0
        %v3829 = vadd.f32 0.0, %v3828
        %v3830 = vpop.f32.mrf.mxu0
        %v3831 = vadd.f32 0.0, %v3830
        %3832 = vdwg.mxu0
        %3833 = vmatpush.bf16.msra.mxu0 %v3711
        %3834 = vmatpush.bf16.msra.mxu0 %v3710
        %3835 = vmatpush.bf16.msra.mxu0 %v3709
        %3836 = vmatpush.bf16.msra.mxu0 %v3708
        %3837 = vmatpush.bf16.msra.mxu0 %v3707
        %3838 = vmatpush.bf16.msra.mxu0 %v3706
        %3839 = vmatpush.bf16.msra.mxu0 %v3705
        %3840 = vmatpush.bf16.msra.mxu0 %v3704
        %3841 = vmatmul.bf16.gmra.mxu0 %v3505
        %v3842 = vpop.f32.mrf.mxu0
        %v3843 = vadd.f32 %v3754, %v3842
        %v3844 = vpop.f32.mrf.mxu0
        %v3845 = vadd.f32 %v3756, %v3844
        %3846 = vmatmul.bf16.gmra.mxu0 %v3508
        %v3847 = vpop.f32.mrf.mxu0
        %v3848 = vadd.f32 %v3759, %v3847
        %v3849 = vpop.f32.mrf.mxu0
        %v3850 = vadd.f32 %v3761, %v3849
        %3851 = vmatmul.bf16.gmra.mxu0 %v3511
        %v3852 = vpop.f32.mrf.mxu0
        %v3853 = vadd.f32 %v3764, %v3852
        %v3854 = vpop.f32.mrf.mxu0
        %v3855 = vadd.f32 %v3766, %v3854
        %3856 = vmatmul.bf16.gmra.mxu0 %v3514
        %v3857 = vpop.f32.mrf.mxu0
        %v3858 = vadd.f32 %v3769, %v3857
        %v3859 = vpop.f32.mrf.mxu0
        %v3860 = vadd.f32 %v3771, %v3859
        %3861 = vmatmul.bf16.gmra.mxu0 %v3517
        %v3862 = vpop.f32.mrf.mxu0
        %v3863 = vadd.f32 %v3774, %v3862
        %v3864 = vpop.f32.mrf.mxu0
        %v3865 = vadd.f32 %v3776, %v3864
        %3866 = vmatmul.bf16.gmra.mxu0 %v3520
        %v3867 = vpop.f32.mrf.mxu0
        %v3868 = vadd.f32 %v3779, %v3867
        %v3869 = vpop.f32.mrf.mxu0
        %v3870 = vadd.f32 %v3781, %v3869
        %3871 = vmatmul.bf16.gmra.mxu0 %v3523
        %v3872 = vpop.f32.mrf.mxu0
        %v3873 = vadd.f32 %v3784, %v3872
        %v3874 = vpop.f32.mrf.mxu0
        %v3875 = vadd.f32 %v3786, %v3874
        %3876 = vmatmul.bf16.gmra.mxu0 %v3526
        %v3877 = vpop.f32.mrf.mxu0
        %v3878 = vadd.f32 %v3789, %v3877
        %v3879 = vpop.f32.mrf.mxu0
        %v3880 = vadd.f32 %v3791, %v3879
        %3881 = vmatmul.bf16.gmra.mxu0 %v3529
        %v3882 = vpop.f32.mrf.mxu0
        %v3883 = vadd.f32 %v3794, %v3882
        %v3884 = vpop.f32.mrf.mxu0
        %v3885 = vadd.f32 %v3796, %v3884
        %3886 = vmatmul.bf16.gmra.mxu0 %v3532
        %v3887 = vpop.f32.mrf.mxu0
        %v3888 = vadd.f32 %v3799, %v3887
        %v3889 = vpop.f32.mrf.mxu0
        %v3890 = vadd.f32 %v3801, %v3889
        %3891 = vmatmul.bf16.gmra.mxu0 %v3535
        %v3892 = vpop.f32.mrf.mxu0
        %v3893 = vadd.f32 %v3804, %v3892
        %v3894 = vpop.f32.mrf.mxu0
        %v3895 = vadd.f32 %v3806, %v3894
        %3896 = vmatmul.bf16.gmra.mxu0 %v3538
        %v3897 = vpop.f32.mrf.mxu0
        %v3898 = vadd.f32 %v3809, %v3897
        %v3899 = vpop.f32.mrf.mxu0
        %v3900 = vadd.f32 %v3811, %v3899
        %3901 = vmatmul.bf16.gmra.mxu0 %v3541
        %v3902 = vpop.f32.mrf.mxu0
        %v3903 = vadd.f32 %v3814, %v3902
        %v3904 = vpop.f32.mrf.mxu0
        %v3905 = vadd.f32 %v3816, %v3904
        %3906 = vmatmul.bf16.gmra.mxu0 %v3544
        %v3907 = vpop.f32.mrf.mxu0
        %v3908 = vadd.f32 %v3819, %v3907
        %v3909 = vpop.f32.mrf.mxu0
        %v3910 = vadd.f32 %v3821, %v3909
        %3911 = vmatmul.bf16.gmra.mxu0 %v3547
        %v3912 = vpop.f32.mrf.mxu0
        %v3913 = vadd.f32 %v3824, %v3912
        %v3914 = vpop.f32.mrf.mxu0
        %v3915 = vadd.f32 %v3826, %v3914
        %3916 = vmatmul.bf16.gmra.mxu0 %v3550
        %v3917 = vpop.f32.mrf.mxu0
        %v3918 = vadd.f32 %v3829, %v3917
        %v3919 = vpop.f32.mrf.mxu0
        %v3920 = vadd.f32 %v3831, %v3919
        %3921 = vdwg.mxu0
        %3922 = vmatpush.bf16.msra.mxu0 %v3719
        %3923 = vmatpush.bf16.msra.mxu0 %v3718
        %3924 = vmatpush.bf16.msra.mxu0 %v3717
        %3925 = vmatpush.bf16.msra.mxu0 %v3716
        %3926 = vmatpush.bf16.msra.mxu0 %v3715
        %3927 = vmatpush.bf16.msra.mxu0 %v3714
        %3928 = vmatpush.bf16.msra.mxu0 %v3713
        %3929 = vmatpush.bf16.msra.mxu0 %v3712
        %3930 = vmatmul.bf16.gmra.mxu0 %v3506
        %v3931 = vpop.f32.mrf.mxu0
        %v3932 = vadd.f32 %v3843, %v3931
        %v3933 = vpop.f32.mrf.mxu0
        %v3934 = vadd.f32 %v3845, %v3933
        %3935 = vmatmul.bf16.gmra.mxu0 %v3509
        %v3936 = vpop.f32.mrf.mxu0
        %v3937 = vadd.f32 %v3848, %v3936
        %v3938 = vpop.f32.mrf.mxu0
        %v3939 = vadd.f32 %v3850, %v3938
        %3940 = vmatmul.bf16.gmra.mxu0 %v3512
        %v3941 = vpop.f32.mrf.mxu0
        %v3942 = vadd.f32 %v3853, %v3941
        %v3943 = vpop.f32.mrf.mxu0
        %v3944 = vadd.f32 %v3855, %v3943
        %3945 = vmatmul.bf16.gmra.mxu0 %v3515
        %v3946 = vpop.f32.mrf.mxu0
        %v3947 = vadd.f32 %v3858, %v3946
        %v3948 = vpop.f32.mrf.mxu0
        %v3949 = vadd.f32 %v3860, %v3948
        %3950 = vmatmul.bf16.gmra.mxu0 %v3518
        %v3951 = vpop.f32.mrf.mxu0
        %v3952 = vadd.f32 %v3863, %v3951
        %v3953 = vpop.f32.mrf.mxu0
        %v3954 = vadd.f32 %v3865, %v3953
        %3955 = vmatmul.bf16.gmra.mxu0 %v3521
        %v3956 = vpop.f32.mrf.mxu0
        %v3957 = vadd.f32 %v3868, %v3956
        %v3958 = vpop.f32.mrf.mxu0
        %v3959 = vadd.f32 %v3870, %v3958
        %3960 = vmatmul.bf16.gmra.mxu0 %v3524
        %v3961 = vpop.f32.mrf.mxu0
        %v3962 = vadd.f32 %v3873, %v3961
        %v3963 = vpop.f32.mrf.mxu0
        %v3964 = vadd.f32 %v3875, %v3963
        %3965 = vmatmul.bf16.gmra.mxu0 %v3527
        %v3966 = vpop.f32.mrf.mxu0
        %v3967 = vadd.f32 %v3878, %v3966
        %v3968 = vpop.f32.mrf.mxu0
        %v3969 = vadd.f32 %v3880, %v3968
        %3970 = vmatmul.bf16.gmra.mxu0 %v3530
        %v3971 = vpop.f32.mrf.mxu0
        %v3972 = vadd.f32 %v3883, %v3971
        %v3973 = vpop.f32.mrf.mxu0
        %v3974 = vadd.f32 %v3885, %v3973
        %3975 = vmatmul.bf16.gmra.mxu0 %v3533
        %v3976 = vpop.f32.mrf.mxu0
        %v3977 = vadd.f32 %v3888, %v3976
        %v3978 = vpop.f32.mrf.mxu0
        %v3979 = vadd.f32 %v3890, %v3978
        %3980 = vmatmul.bf16.gmra.mxu0 %v3536
        %v3981 = vpop.f32.mrf.mxu0
        %v3982 = vadd.f32 %v3893, %v3981
        %v3983 = vpop.f32.mrf.mxu0
        %v3984 = vadd.f32 %v3895, %v3983
        %3985 = vmatmul.bf16.gmra.mxu0 %v3539
        %v3986 = vpop.f32.mrf.mxu0
        %v3987 = vadd.f32 %v3898, %v3986
        %v3988 = vpop.f32.mrf.mxu0
        %v3989 = vadd.f32 %v3900, %v3988
        %3990 = vmatmul.bf16.gmra.mxu0 %v3542
        %v3991 = vpop.f32.mrf.mxu0
        %v3992 = vadd.f32 %v3903, %v3991
        %v3993 = vpop.f32.mrf.mxu0
        %v3994 = vadd.f32 %v3905, %v3993
        %3995 = vmatmul.bf16.gmra.mxu0 %v3545
        %v3996 = vpop.f32.mrf.mxu0
        %v3997 = vadd.f32 %v3908, %v3996
        %v3998 = vpop.f32.mrf.mxu0
        %v3999 = vadd.f32 %v3910, %v3998
        %4000 = vmatmul.bf16.gmra.mxu0 %v3548
        %v4001 = vpop.f32.mrf.mxu0
        %v4002 = vadd.f32 %v3913, %v4001
        %v4003 = vpop.f32.mrf.mxu0
        %v4004 = vadd.f32 %v3915, %v4003
        %4005 = vmatmul.bf16.gmra.mxu0 %v3551
        %v4006 = vpop.f32.mrf.mxu0
        %v4007 = vadd.f32 %v3918, %v4006
        %v4008 = vpop.f32.mrf.mxu0
        %v4009 = vadd.f32 %v3920, %v4008
        %4010 = vdwg.mxu0
        %v4015 = vunpack.c.l.b16 %v3179
        %v4016 = vunpack.c.h.b16 %v3179
        %v4017 = vunpack.c.l.b16 %v3180
        %v4018 = vunpack.c.l.b16 %v3181
        %v4019 = vunpack.c.h.b16 %v3181
        %v4020 = vunpack.c.l.b16 %v3182
        %v4021 = vpack.c.b16 %v4018, %v4015
        %v4022 = vpack.c.b16 %v4019, %v4016
        %v4023 = vpack.c.b16 %v4020, %v4017
        %v4075 = vunpack.c.l.b16 %v3243
        %v4076 = vunpack.c.l.b16 %v3244
        %v4077 = vunpack.c.l.b16 %v3245
        %v4078 = vunpack.c.l.b16 %v3246
        %v4079 = vunpack.c.l.b16 %v3247
        %v4080 = vunpack.c.l.b16 %v3248
        %v4081 = vunpack.c.l.b16 %v3249
        %v4082 = vunpack.c.l.b16 %v3250
        %v4083 = vunpack.c.l.b16 %v3251
        %v4084 = vunpack.c.l.b16 %v3252
        %v4085 = vunpack.c.l.b16 %v3253
        %v4086 = vunpack.c.l.b16 %v3254
        %v4087 = vunpack.c.l.b16 %v3255
        %v4088 = vunpack.c.l.b16 %v3256
        %v4089 = vunpack.c.l.b16 %v3257
        %v4090 = vunpack.c.l.b16 %v3258
        %v4091 = vunpack.c.l.b16 %v3259
        %v4092 = vunpack.c.l.b16 %v3260
        %v4093 = vunpack.c.l.b16 %v3261
        %v4094 = vunpack.c.l.b16 %v3262
        %v4095 = vunpack.c.l.b16 %v3263
        %v4096 = vunpack.c.l.b16 %v3264
        %v4097 = vunpack.c.l.b16 %v3265
        %v4098 = vunpack.c.l.b16 %v3266
        %v4099 = vunpack.c.l.b16 %v3267
        %v4100 = vunpack.c.l.b16 %v3268
        %v4101 = vunpack.c.l.b16 %v3269
        %v4102 = vunpack.c.l.b16 %v3270
        %v4103 = vunpack.c.l.b16 %v3271
        %v4104 = vunpack.c.l.b16 %v3272
        %v4105 = vunpack.c.l.b16 %v3273
        %v4106 = vunpack.c.l.b16 %v3274
        %v4107 = vunpack.c.l.b16 %v3275
        %v4108 = vunpack.c.l.b16 %v3276
        %v4109 = vunpack.c.l.b16 %v3277
        %v4110 = vunpack.c.l.b16 %v3278
        %v4111 = vunpack.c.l.b16 %v3279
        %v4112 = vunpack.c.l.b16 %v3280
        %v4113 = vunpack.c.l.b16 %v3281
        %v4114 = vunpack.c.l.b16 %v3282
        %v4115 = vunpack.c.l.b16 %v3283
        %v4116 = vunpack.c.l.b16 %v3284
        %v4117 = vunpack.c.l.b16 %v3285
        %v4118 = vunpack.c.l.b16 %v3286
        %v4119 = vunpack.c.l.b16 %v3287
        %v4120 = vunpack.c.l.b16 %v3288
        %v4121 = vunpack.c.l.b16 %v3289
        %v4122 = vunpack.c.l.b16 %v3290
        %v4123 = vpack.c.b16 %v4076, %v4075
        %v4124 = vpack.c.b16 %v4078, %v4077
        %v4125 = vpack.c.b16 %v4080, %v4079
        %v4126 = vpack.c.b16 %v4082, %v4081
        %v4127 = vpack.c.b16 %v4084, %v4083
        %v4128 = vpack.c.b16 %v4086, %v4085
        %v4129 = vpack.c.b16 %v4088, %v4087
        %v4130 = vpack.c.b16 %v4090, %v4089
        %v4131 = vpack.c.b16 %v4092, %v4091
        %v4132 = vpack.c.b16 %v4094, %v4093
        %v4133 = vpack.c.b16 %v4096, %v4095
        %v4134 = vpack.c.b16 %v4098, %v4097
        %v4135 = vpack.c.b16 %v4100, %v4099
        %v4136 = vpack.c.b16 %v4102, %v4101
        %v4137 = vpack.c.b16 %v4104, %v4103
        %v4138 = vpack.c.b16 %v4106, %v4105
        %v4139 = vpack.c.b16 %v4108, %v4107
        %v4140 = vpack.c.b16 %v4110, %v4109
        %v4141 = vpack.c.b16 %v4112, %v4111
        %v4142 = vpack.c.b16 %v4114, %v4113
        %v4143 = vpack.c.b16 %v4116, %v4115
        %v4144 = vpack.c.b16 %v4118, %v4117
        %v4145 = vpack.c.b16 %v4120, %v4119
        %v4146 = vpack.c.b16 %v4122, %v4121
        %4171 = vmatpush.bf16.msra.mxu0 %v4130
        %4172 = vmatpush.bf16.msra.mxu0 %v4129
        %4173 = vmatpush.bf16.msra.mxu0 %v4128
        %4174 = vmatpush.bf16.msra.mxu0 %v4127
        %4175 = vmatpush.bf16.msra.mxu0 %v4126
        %4176 = vmatpush.bf16.msra.mxu0 %v4125
        %4177 = vmatpush.bf16.msra.mxu0 %v4124
        %4178 = vmatpush.bf16.msra.mxu0 %v4123
        %4179 = vmatmul.bf16.gmra.mxu0 %v4021
        %v4180 = vpop.f32.mrf.mxu0
        %v4181 = vadd.f32 %v3932, %v4180
        %v4182 = vpop.f32.mrf.mxu0
        %v4183 = vadd.f32 %v3934, %v4182
        %4184 = vmatmul.bf16.gmra.mxu0 %v3504
        %v4185 = vpop.f32.mrf.mxu0
        %v4186 = vadd.f32 %v3937, %v4185
        %v4187 = vpop.f32.mrf.mxu0
        %v4188 = vadd.f32 %v3939, %v4187
        %4189 = vmatmul.bf16.gmra.mxu0 %v3507
        %v4190 = vpop.f32.mrf.mxu0
        %v4191 = vadd.f32 %v3942, %v4190
        %v4192 = vpop.f32.mrf.mxu0
        %v4193 = vadd.f32 %v3944, %v4192
        %4194 = vmatmul.bf16.gmra.mxu0 %v3510
        %v4195 = vpop.f32.mrf.mxu0
        %v4196 = vadd.f32 %v3947, %v4195
        %v4197 = vpop.f32.mrf.mxu0
        %v4198 = vadd.f32 %v3949, %v4197
        %4199 = vmatmul.bf16.gmra.mxu0 %v3513
        %v4200 = vpop.f32.mrf.mxu0
        %v4201 = vadd.f32 %v3952, %v4200
        %v4202 = vpop.f32.mrf.mxu0
        %v4203 = vadd.f32 %v3954, %v4202
        %4204 = vmatmul.bf16.gmra.mxu0 %v3516
        %v4205 = vpop.f32.mrf.mxu0
        %v4206 = vadd.f32 %v3957, %v4205
        %v4207 = vpop.f32.mrf.mxu0
        %v4208 = vadd.f32 %v3959, %v4207
        %4209 = vmatmul.bf16.gmra.mxu0 %v3519
        %v4210 = vpop.f32.mrf.mxu0
        %v4211 = vadd.f32 %v3962, %v4210
        %v4212 = vpop.f32.mrf.mxu0
        %v4213 = vadd.f32 %v3964, %v4212
        %4214 = vmatmul.bf16.gmra.mxu0 %v3522
        %v4215 = vpop.f32.mrf.mxu0
        %v4216 = vadd.f32 %v3967, %v4215
        %v4217 = vpop.f32.mrf.mxu0
        %v4218 = vadd.f32 %v3969, %v4217
        %4219 = vmatmul.bf16.gmra.mxu0 %v3525
        %v4220 = vpop.f32.mrf.mxu0
        %v4221 = vadd.f32 %v3972, %v4220
        %v4222 = vpop.f32.mrf.mxu0
        %v4223 = vadd.f32 %v3974, %v4222
        %4224 = vmatmul.bf16.gmra.mxu0 %v3528
        %v4225 = vpop.f32.mrf.mxu0
        %v4226 = vadd.f32 %v3977, %v4225
        %v4227 = vpop.f32.mrf.mxu0
        %v4228 = vadd.f32 %v3979, %v4227
        %4229 = vmatmul.bf16.gmra.mxu0 %v3531
        %v4230 = vpop.f32.mrf.mxu0
        %v4231 = vadd.f32 %v3982, %v4230
        %v4232 = vpop.f32.mrf.mxu0
        %v4233 = vadd.f32 %v3984, %v4232
        %4234 = vmatmul.bf16.gmra.mxu0 %v3534
        %v4235 = vpop.f32.mrf.mxu0
        %v4236 = vadd.f32 %v3987, %v4235
        %v4237 = vpop.f32.mrf.mxu0
        %v4238 = vadd.f32 %v3989, %v4237
        %4239 = vmatmul.bf16.gmra.mxu0 %v3537
        %v4240 = vpop.f32.mrf.mxu0
        %v4241 = vadd.f32 %v3992, %v4240
        %v4242 = vpop.f32.mrf.mxu0
        %v4243 = vadd.f32 %v3994, %v4242
        %4244 = vmatmul.bf16.gmra.mxu0 %v3540
        %v4245 = vpop.f32.mrf.mxu0
        %v4246 = vadd.f32 %v3997, %v4245
        %v4247 = vpop.f32.mrf.mxu0
        %v4248 = vadd.f32 %v3999, %v4247
        %4249 = vmatmul.bf16.gmra.mxu0 %v3543
        %v4250 = vpop.f32.mrf.mxu0
        %v4251 = vadd.f32 %v4002, %v4250
        %v4252 = vpop.f32.mrf.mxu0
        %v4253 = vadd.f32 %v4004, %v4252
        %4254 = vmatmul.bf16.gmra.mxu0 %v3546
        %v4255 = vpop.f32.mrf.mxu0
        %v4256 = vadd.f32 %v4007, %v4255
        %v4257 = vpop.f32.mrf.mxu0
        %v4258 = vadd.f32 %v4009, %v4257
        %4259 = vdwg.mxu0
        %4260 = vmatpush.bf16.msra.mxu0 %v4138
        %4261 = vmatpush.bf16.msra.mxu0 %v4137
        %4262 = vmatpush.bf16.msra.mxu0 %v4136
        %4263 = vmatpush.bf16.msra.mxu0 %v4135
        %4264 = vmatpush.bf16.msra.mxu0 %v4134
        %4265 = vmatpush.bf16.msra.mxu0 %v4133
        %4266 = vmatpush.bf16.msra.mxu0 %v4132
        %4267 = vmatpush.bf16.msra.mxu0 %v4131
        %4268 = vmatmul.bf16.gmra.mxu0 %v4022
        %v4269 = vpop.f32.mrf.mxu0
        %v4270 = vadd.f32 %v4181, %v4269
        %v4271 = vpop.f32.mrf.mxu0
        %v4272 = vadd.f32 %v4183, %v4271
        %4273 = vmatmul.bf16.gmra.mxu0 %v3505
        %v4274 = vpop.f32.mrf.mxu0
        %v4275 = vadd.f32 %v4186, %v4274
        %v4276 = vpop.f32.mrf.mxu0
        %v4277 = vadd.f32 %v4188, %v4276
        %4278 = vmatmul.bf16.gmra.mxu0 %v3508
        %v4279 = vpop.f32.mrf.mxu0
        %v4280 = vadd.f32 %v4191, %v4279
        %v4281 = vpop.f32.mrf.mxu0
        %v4282 = vadd.f32 %v4193, %v4281
        %4283 = vmatmul.bf16.gmra.mxu0 %v3511
        %v4284 = vpop.f32.mrf.mxu0
        %v4285 = vadd.f32 %v4196, %v4284
        %v4286 = vpop.f32.mrf.mxu0
        %v4287 = vadd.f32 %v4198, %v4286
        %4288 = vmatmul.bf16.gmra.mxu0 %v3514
        %v4289 = vpop.f32.mrf.mxu0
        %v4290 = vadd.f32 %v4201, %v4289
        %v4291 = vpop.f32.mrf.mxu0
        %v4292 = vadd.f32 %v4203, %v4291
        %4293 = vmatmul.bf16.gmra.mxu0 %v3517
        %v4294 = vpop.f32.mrf.mxu0
        %v4295 = vadd.f32 %v4206, %v4294
        %v4296 = vpop.f32.mrf.mxu0
        %v4297 = vadd.f32 %v4208, %v4296
        %4298 = vmatmul.bf16.gmra.mxu0 %v3520
        %v4299 = vpop.f32.mrf.mxu0
        %v4300 = vadd.f32 %v4211, %v4299
        %v4301 = vpop.f32.mrf.mxu0
        %v4302 = vadd.f32 %v4213, %v4301
        %4303 = vmatmul.bf16.gmra.mxu0 %v3523
        %v4304 = vpop.f32.mrf.mxu0
        %v4305 = vadd.f32 %v4216, %v4304
        %v4306 = vpop.f32.mrf.mxu0
        %v4307 = vadd.f32 %v4218, %v4306
        %4308 = vmatmul.bf16.gmra.mxu0 %v3526
        %v4309 = vpop.f32.mrf.mxu0
        %v4310 = vadd.f32 %v4221, %v4309
        %v4311 = vpop.f32.mrf.mxu0
        %v4312 = vadd.f32 %v4223, %v4311
        %4313 = vmatmul.bf16.gmra.mxu0 %v3529
        %v4314 = vpop.f32.mrf.mxu0
        %v4315 = vadd.f32 %v4226, %v4314
        %v4316 = vpop.f32.mrf.mxu0
        %v4317 = vadd.f32 %v4228, %v4316
        %4318 = vmatmul.bf16.gmra.mxu0 %v3532
        %v4319 = vpop.f32.mrf.mxu0
        %v4320 = vadd.f32 %v4231, %v4319
        %v4321 = vpop.f32.mrf.mxu0
        %v4322 = vadd.f32 %v4233, %v4321
        %4323 = vmatmul.bf16.gmra.mxu0 %v3535
        %v4324 = vpop.f32.mrf.mxu0
        %v4325 = vadd.f32 %v4236, %v4324
        %v4326 = vpop.f32.mrf.mxu0
        %v4327 = vadd.f32 %v4238, %v4326
        %4328 = vmatmul.bf16.gmra.mxu0 %v3538
        %v4329 = vpop.f32.mrf.mxu0
        %v4330 = vadd.f32 %v4241, %v4329
        %v4331 = vpop.f32.mrf.mxu0
        %v4332 = vadd.f32 %v4243, %v4331
        %4333 = vmatmul.bf16.gmra.mxu0 %v3541
        %v4334 = vpop.f32.mrf.mxu0
        %v4335 = vadd.f32 %v4246, %v4334
        %v4336 = vpop.f32.mrf.mxu0
        %v4337 = vadd.f32 %v4248, %v4336
        %4338 = vmatmul.bf16.gmra.mxu0 %v3544
        %v4339 = vpop.f32.mrf.mxu0
        %v4340 = vadd.f32 %v4251, %v4339
        %v4341 = vpop.f32.mrf.mxu0
        %v4342 = vadd.f32 %v4253, %v4341
        %4343 = vmatmul.bf16.gmra.mxu0 %v3547
        %v4344 = vpop.f32.mrf.mxu0
        %v4345 = vadd.f32 %v4256, %v4344
        %v4346 = vpop.f32.mrf.mxu0
        %v4347 = vadd.f32 %v4258, %v4346
        %4348 = vdwg.mxu0
        %4349 = vmatpush.bf16.msra.mxu0 %v4146
        %4350 = vmatpush.bf16.msra.mxu0 %v4145
        %4351 = vmatpush.bf16.msra.mxu0 %v4144
        %4352 = vmatpush.bf16.msra.mxu0 %v4143
        %4353 = vmatpush.bf16.msra.mxu0 %v4142
        %4354 = vmatpush.bf16.msra.mxu0 %v4141
        %4355 = vmatpush.bf16.msra.mxu0 %v4140
        %4356 = vmatpush.bf16.msra.mxu0 %v4139
        %4357 = vmatmul.bf16.gmra.mxu0 %v4023
        %v4358 = vpop.f32.mrf.mxu0
        %v4359 = vadd.f32 %v4270, %v4358
        %v4360 = vpop.f32.mrf.mxu0
        %v4361 = vadd.f32 %v4272, %v4360
        %4362 = vmatmul.bf16.gmra.mxu0 %v3506
        %v4363 = vpop.f32.mrf.mxu0
        %v4364 = vadd.f32 %v4275, %v4363
        %v4365 = vpop.f32.mrf.mxu0
        %v4366 = vadd.f32 %v4277, %v4365
        %4367 = vmatmul.bf16.gmra.mxu0 %v3509
        %v4368 = vpop.f32.mrf.mxu0
        %v4369 = vadd.f32 %v4280, %v4368
        %v4370 = vpop.f32.mrf.mxu0
        %v4371 = vadd.f32 %v4282, %v4370
        %4372 = vmatmul.bf16.gmra.mxu0 %v3512
        %v4373 = vpop.f32.mrf.mxu0
        %v4374 = vadd.f32 %v4285, %v4373
        %v4375 = vpop.f32.mrf.mxu0
        %v4376 = vadd.f32 %v4287, %v4375
        %4377 = vmatmul.bf16.gmra.mxu0 %v3515
        %v4378 = vpop.f32.mrf.mxu0
        %v4379 = vadd.f32 %v4290, %v4378
        %v4380 = vpop.f32.mrf.mxu0
        %v4381 = vadd.f32 %v4292, %v4380
        %4382 = vmatmul.bf16.gmra.mxu0 %v3518
        %v4383 = vpop.f32.mrf.mxu0
        %v4384 = vadd.f32 %v4295, %v4383
        %v4385 = vpop.f32.mrf.mxu0
        %v4386 = vadd.f32 %v4297, %v4385
        %4387 = vmatmul.bf16.gmra.mxu0 %v3521
        %v4388 = vpop.f32.mrf.mxu0
        %v4389 = vadd.f32 %v4300, %v4388
        %v4390 = vpop.f32.mrf.mxu0
        %v4391 = vadd.f32 %v4302, %v4390
        %4392 = vmatmul.bf16.gmra.mxu0 %v3524
        %v4393 = vpop.f32.mrf.mxu0
        %v4394 = vadd.f32 %v4305, %v4393
        %v4395 = vpop.f32.mrf.mxu0
        %v4396 = vadd.f32 %v4307, %v4395
        %4397 = vmatmul.bf16.gmra.mxu0 %v3527
        %v4398 = vpop.f32.mrf.mxu0
        %v4399 = vadd.f32 %v4310, %v4398
        %v4400 = vpop.f32.mrf.mxu0
        %v4401 = vadd.f32 %v4312, %v4400
        %4402 = vmatmul.bf16.gmra.mxu0 %v3530
        %v4403 = vpop.f32.mrf.mxu0
        %v4404 = vadd.f32 %v4315, %v4403
        %v4405 = vpop.f32.mrf.mxu0
        %v4406 = vadd.f32 %v4317, %v4405
        %4407 = vmatmul.bf16.gmra.mxu0 %v3533
        %v4408 = vpop.f32.mrf.mxu0
        %v4409 = vadd.f32 %v4320, %v4408
        %v4410 = vpop.f32.mrf.mxu0
        %v4411 = vadd.f32 %v4322, %v4410
        %4412 = vmatmul.bf16.gmra.mxu0 %v3536
        %v4413 = vpop.f32.mrf.mxu0
        %v4414 = vadd.f32 %v4325, %v4413
        %v4415 = vpop.f32.mrf.mxu0
        %v4416 = vadd.f32 %v4327, %v4415
        %4417 = vmatmul.bf16.gmra.mxu0 %v3539
        %v4418 = vpop.f32.mrf.mxu0
        %v4419 = vadd.f32 %v4330, %v4418
        %v4420 = vpop.f32.mrf.mxu0
        %v4421 = vadd.f32 %v4332, %v4420
        %4422 = vmatmul.bf16.gmra.mxu0 %v3542
        %v4423 = vpop.f32.mrf.mxu0
        %v4424 = vadd.f32 %v4335, %v4423
        %v4425 = vpop.f32.mrf.mxu0
        %v4426 = vadd.f32 %v4337, %v4425
        %4427 = vmatmul.bf16.gmra.mxu0 %v3545
        %v4428 = vpop.f32.mrf.mxu0
        %v4429 = vadd.f32 %v4340, %v4428
        %v4430 = vpop.f32.mrf.mxu0
        %v4431 = vadd.f32 %v4342, %v4430
        %4432 = vmatmul.bf16.gmra.mxu0 %v3548
        %v4433 = vpop.f32.mrf.mxu0
        %v4434 = vadd.f32 %v4345, %v4433
        %v4435 = vpop.f32.mrf.mxu0
        %v4436 = vadd.f32 %v4347, %v4435
        %4437 = vdwg.mxu0
        %v4438 = vld [vmem:[#allocation2 + $0x30] sm:$0xff]
        %v4439 = vld [vmem:[#allocation2 + $0x38] sm:$0xf]
        %v4440 = vld [vmem:[#allocation2 + $0x3c] sm:$0xff]
        %v4441 = vld [vmem:[#allocation2 + $0x44] sm:$0xf]
        %v4442 = vld [vmem:[#allocation2 + $0x48] sm:$0xff]
        %v4443 = vld [vmem:[#allocation2 + $0x50] sm:$0xf]
        %v4444 = vld [vmem:[#allocation2 + $0x54] sm:$0xff]
        %v4445 = vld [vmem:[#allocation2 + $0x5c] sm:$0xf]
        %v4446 = vld [vmem:[#allocation2 + $0x60] sm:$0xff]
        %v4447 = vld [vmem:[#allocation2 + $0x68] sm:$0xf]
        %v4448 = vld [vmem:[#allocation2 + $0x6c] sm:$0xff]
        %v4449 = vld [vmem:[#allocation2 + $0x74] sm:$0xf]
        %v4450 = vld [vmem:[#allocation2 + $0x78] sm:$0xff]
        %v4451 = vld [vmem:[#allocation2 + $0x80] sm:$0xf]
        %v4452 = vld [vmem:[#allocation2 + $0x84] sm:$0xff]
        %v4453 = vld [vmem:[#allocation2 + $0x8c] sm:$0xf]
        %v4454 = vld [vmem:[#allocation2 + $0x90] sm:$0xff]
        %v4455 = vld [vmem:[#allocation2 + $0x98] sm:$0xf]
        %v4456 = vld [vmem:[#allocation2 + $0x9c] sm:$0xff]
        %v4457 = vld [vmem:[#allocation2 + $0xa4] sm:$0xf]
        %v4458 = vld [vmem:[#allocation2 + $0xa8] sm:$0xff]
        %v4459 = vld [vmem:[#allocation2 + $0xb0] sm:$0xf]
        %v4460 = vld [vmem:[#allocation2 + $0xb4] sm:$0xff]
        %v4461 = vld [vmem:[#allocation2 + $0xbc] sm:$0xf]
        %v4462 = vld [vmem:[#allocation2 + $0xc0] sm:$0xff]
        %v4463 = vld [vmem:[#allocation2 + $0xc8] sm:$0xf]
        %v4464 = vld [vmem:[#allocation2 + $0xcc] sm:$0xff]
        %v4465 = vld [vmem:[#allocation2 + $0xd4] sm:$0xf]
        %v4466 = vld [vmem:[#allocation2 + $0xd8] sm:$0xff]
        %v4467 = vld [vmem:[#allocation2 + $0xe0] sm:$0xf]
        %v4468 = vld [vmem:[#allocation2 + $0xe4] sm:$0xff]
        %v4469 = vld [vmem:[#allocation2 + $0xec] sm:$0xf]
        %v4470 = vld [vmem:[#allocation2 + $0xf0] sm:$0xff]
        %v4471 = vld [vmem:[#allocation2 + $0xf8] sm:$0xf]
        %v4472 = vld [vmem:[#allocation2 + $0xfc] sm:$0xff]
        %v4473 = vld [vmem:[#allocation2 + $0x104] sm:$0xf]
        %v4474 = vld [vmem:[#allocation2 + $0x108] sm:$0xff]
        %v4475 = vld [vmem:[#allocation2 + $0x110] sm:$0xf]
        %v4476 = vld [vmem:[#allocation2 + $0x114] sm:$0xff]
        %v4477 = vld [vmem:[#allocation2 + $0x11c] sm:$0xf]
        %v4478 = vld [vmem:[#allocation2 + $0x120] sm:$0xff]
        %v4479 = vld [vmem:[#allocation2 + $0x128] sm:$0xf]
        %v4480 = vld [vmem:[#allocation2 + $0x12c] sm:$0xff]
        %v4481 = vld [vmem:[#allocation2 + $0x134] sm:$0xf]
        %v4482 = vld [vmem:[#allocation2 + $0x138] sm:$0xff]
        %v4483 = vld [vmem:[#allocation2 + $0x140] sm:$0xf]
        %v4484 = vld [vmem:[#allocation2 + $0x144] sm:$0xff]
        %v4485 = vld [vmem:[#allocation2 + $0x14c] sm:$0xf]
        %v4486 = vld [vmem:[#allocation2 + $0x150] sm:$0xff]
        %v4487 = vld [vmem:[#allocation2 + $0x158] sm:$0xf]
        %v4488 = vld [vmem:[#allocation2 + $0x15c] sm:$0xff]
        %v4489 = vld [vmem:[#allocation2 + $0x164] sm:$0xf]
        %v4490 = vld [vmem:[#allocation2 + $0x168] sm:$0xff]
        %v4491 = vld [vmem:[#allocation2 + $0x170] sm:$0xf]
        %v4492 = vld [vmem:[#allocation2 + $0x174] sm:$0xff]
        %v4493 = vld [vmem:[#allocation2 + $0x17c] sm:$0xf]
        %v4494 = vld [vmem:[#allocation2 + $0x180] sm:$0xff]
        %v4495 = vld [vmem:[#allocation2 + $0x188] sm:$0xf]
        %v4496 = vld [vmem:[#allocation2 + $0x18c] sm:$0xff]
        %v4497 = vld [vmem:[#allocation2 + $0x194] sm:$0xf]
        %v4498 = vld [vmem:[#allocation2 + $0x198] sm:$0xff]
        %v4499 = vld [vmem:[#allocation2 + $0x1a0] sm:$0xf]
        %v4500 = vld [vmem:[#allocation2 + $0x1a4] sm:$0xff]
        %v4501 = vld [vmem:[#allocation2 + $0x1ac] sm:$0xf]
        %s4502 = scalar_lea.vmem [#allocation8], 384
        %v4503 = vld [vmem:[%s4502] sm:$0xf]
        %v4504 = vld [vmem:[%s4502 + $0x4] sm:$0xf]
        %v4505 = vld [vmem:[%s4502 + $0x8] sm:$0xf]
        %v4506 = vld [vmem:[%s4502 + $0xc] sm:$0xf]
        %v4507 = vld [vmem:[%s4502 + $0x10] sm:$0xf]
        %v4508 = vld [vmem:[%s4502 + $0x14] sm:$0xf]
        %v4509 = vld [vmem:[%s4502 + $0x18] sm:$0xf]
        %v4510 = vld [vmem:[%s4502 + $0x1c] sm:$0xf]
        %v4511 = vld [vmem:[%s4502 + $0x20] sm:$0xf]
        %v4512 = vld [vmem:[%s4502 + $0x24] sm:$0xf]
        %v4513 = vld [vmem:[%s4502 + $0x28] sm:$0xf]
        %v4514 = vld [vmem:[%s4502 + $0x2c] sm:$0xf]
        %v4515 = vld [vmem:[%s4502 + $0x30] sm:$0xf]
        %v4516 = vld [vmem:[%s4502 + $0x34] sm:$0xf]
        %v4517 = vld [vmem:[%s4502 + $0x38] sm:$0xf]
        %v4518 = vld [vmem:[%s4502 + $0x3c] sm:$0xf]
        %v4519 = vld [vmem:[%s4502 + $0x40] sm:$0xf]
        %v4520 = vld [vmem:[%s4502 + $0x44] sm:$0xf]
        %v4521 = vld [vmem:[%s4502 + $0x48] sm:$0xf]
        %v4522 = vld [vmem:[%s4502 + $0x4c] sm:$0xf]
        %v4523 = vld [vmem:[%s4502 + $0x50] sm:$0xf]
        %v4524 = vld [vmem:[%s4502 + $0x54] sm:$0xf]
        %v4525 = vld [vmem:[%s4502 + $0x58] sm:$0xf]
        %v4526 = vld [vmem:[%s4502 + $0x5c] sm:$0xf]
        %v4527 = vld [vmem:[%s4502 + $0x60] sm:$0xf]
        %v4528 = vld [vmem:[%s4502 + $0x64] sm:$0xf]
        %v4529 = vld [vmem:[%s4502 + $0x68] sm:$0xf]
        %v4530 = vld [vmem:[%s4502 + $0x6c] sm:$0xf]
        %v4531 = vld [vmem:[%s4502 + $0x70] sm:$0xf]
        %v4532 = vld [vmem:[%s4502 + $0x74] sm:$0xf]
        %v4533 = vld [vmem:[%s4502 + $0x78] sm:$0xf]
        %v4534 = vld [vmem:[%s4502 + $0x7c] sm:$0xf]
        %v4535 = vld [vmem:[%s4502 + $0x80] sm:$0xf]
        %v4536 = vld [vmem:[%s4502 + $0x84] sm:$0xf]
        %v4537 = vld [vmem:[%s4502 + $0x88] sm:$0xf]
        %v4538 = vld [vmem:[%s4502 + $0x8c] sm:$0xf]
        %v4539 = vld [vmem:[%s4502 + $0x90] sm:$0xf]
        %v4540 = vld [vmem:[%s4502 + $0x94] sm:$0xf]
        %v4541 = vld [vmem:[%s4502 + $0x98] sm:$0xf]
        %v4542 = vld [vmem:[%s4502 + $0x9c] sm:$0xf]
        %v4543 = vld [vmem:[%s4502 + $0xa0] sm:$0xf]
        %v4544 = vld [vmem:[%s4502 + $0xa4] sm:$0xf]
        %v4545 = vld [vmem:[%s4502 + $0xa8] sm:$0xf]
        %v4546 = vld [vmem:[%s4502 + $0xac] sm:$0xf]
        %v4547 = vld [vmem:[%s4502 + $0xb0] sm:$0xf]
        %v4548 = vld [vmem:[%s4502 + $0xb4] sm:$0xf]
        %v4549 = vld [vmem:[%s4502 + $0xb8] sm:$0xf]
        %v4550 = vld [vmem:[%s4502 + $0xbc] sm:$0xf]
        %v4615 = vunpack.c.l.b16 %v4438
        %v4616 = vunpack.c.h.b16 %v4438
        %v4617 = vunpack.c.l.b16 %v4439
        %v4618 = vunpack.c.l.b16 %v4440
        %v4619 = vunpack.c.h.b16 %v4440
        %v4620 = vunpack.c.l.b16 %v4441
        %v4621 = vunpack.c.l.b16 %v4442
        %v4622 = vunpack.c.h.b16 %v4442
        %v4623 = vunpack.c.l.b16 %v4443
        %v4624 = vunpack.c.l.b16 %v4444
        %v4625 = vunpack.c.h.b16 %v4444
        %v4626 = vunpack.c.l.b16 %v4445
        %v4627 = vunpack.c.l.b16 %v4446
        %v4628 = vunpack.c.h.b16 %v4446
        %v4629 = vunpack.c.l.b16 %v4447
        %v4630 = vunpack.c.l.b16 %v4448
        %v4631 = vunpack.c.h.b16 %v4448
        %v4632 = vunpack.c.l.b16 %v4449
        %v4633 = vunpack.c.l.b16 %v4450
        %v4634 = vunpack.c.h.b16 %v4450
        %v4635 = vunpack.c.l.b16 %v4451
        %v4636 = vunpack.c.l.b16 %v4452
        %v4637 = vunpack.c.h.b16 %v4452
        %v4638 = vunpack.c.l.b16 %v4453
        %v4639 = vunpack.c.l.b16 %v4454
        %v4640 = vunpack.c.h.b16 %v4454
        %v4641 = vunpack.c.l.b16 %v4455
        %v4642 = vunpack.c.l.b16 %v4456
        %v4643 = vunpack.c.h.b16 %v4456
        %v4644 = vunpack.c.l.b16 %v4457
        %v4645 = vunpack.c.l.b16 %v4458
        %v4646 = vunpack.c.h.b16 %v4458
        %v4647 = vunpack.c.l.b16 %v4459
        %v4648 = vunpack.c.l.b16 %v4460
        %v4649 = vunpack.c.h.b16 %v4460
        %v4650 = vunpack.c.l.b16 %v4461
        %v4651 = vunpack.c.l.b16 %v4462
        %v4652 = vunpack.c.h.b16 %v4462
        %v4653 = vunpack.c.l.b16 %v4463
        %v4654 = vunpack.c.l.b16 %v4464
        %v4655 = vunpack.c.h.b16 %v4464
        %v4656 = vunpack.c.l.b16 %v4465
        %v4657 = vunpack.c.l.b16 %v4466
        %v4658 = vunpack.c.h.b16 %v4466
        %v4659 = vunpack.c.l.b16 %v4467
        %v4660 = vunpack.c.l.b16 %v4468
        %v4661 = vunpack.c.h.b16 %v4468
        %v4662 = vunpack.c.l.b16 %v4469
        %v4663 = vunpack.c.l.b16 %v4470
        %v4664 = vunpack.c.h.b16 %v4470
        %v4665 = vunpack.c.l.b16 %v4471
        %v4666 = vunpack.c.l.b16 %v4472
        %v4667 = vunpack.c.h.b16 %v4472
        %v4668 = vunpack.c.l.b16 %v4473
        %v4669 = vunpack.c.l.b16 %v4474
        %v4670 = vunpack.c.h.b16 %v4474
        %v4671 = vunpack.c.l.b16 %v4475
        %v4672 = vunpack.c.l.b16 %v4476
        %v4673 = vunpack.c.h.b16 %v4476
        %v4674 = vunpack.c.l.b16 %v4477
        %v4675 = vunpack.c.l.b16 %v4478
        %v4676 = vunpack.c.h.b16 %v4478
        %v4677 = vunpack.c.l.b16 %v4479
        %v4678 = vunpack.c.l.b16 %v4480
        %v4679 = vunpack.c.h.b16 %v4480
        %v4680 = vunpack.c.l.b16 %v4481
        %v4681 = vunpack.c.l.b16 %v4482
        %v4682 = vunpack.c.h.b16 %v4482
        %v4683 = vunpack.c.l.b16 %v4483
        %v4684 = vunpack.c.l.b16 %v4484
        %v4685 = vunpack.c.h.b16 %v4484
        %v4686 = vunpack.c.l.b16 %v4485
        %v4687 = vunpack.c.l.b16 %v4486
        %v4688 = vunpack.c.h.b16 %v4486
        %v4689 = vunpack.c.l.b16 %v4487
        %v4690 = vunpack.c.l.b16 %v4488
        %v4691 = vunpack.c.h.b16 %v4488
        %v4692 = vunpack.c.l.b16 %v4489
        %v4693 = vunpack.c.l.b16 %v4490
        %v4694 = vunpack.c.h.b16 %v4490
        %v4695 = vunpack.c.l.b16 %v4491
        %v4696 = vunpack.c.l.b16 %v4492
        %v4697 = vunpack.c.h.b16 %v4492
        %v4698 = vunpack.c.l.b16 %v4493
        %v4699 = vunpack.c.l.b16 %v4494
        %v4700 = vunpack.c.h.b16 %v4494
        %v4701 = vunpack.c.l.b16 %v4495
        %v4702 = vunpack.c.l.b16 %v4496
        %v4703 = vunpack.c.h.b16 %v4496
        %v4704 = vunpack.c.l.b16 %v4497
        %v4705 = vunpack.c.l.b16 %v4498
        %v4706 = vunpack.c.h.b16 %v4498
        %v4707 = vunpack.c.l.b16 %v4499
        %v4708 = vunpack.c.l.b16 %v4500
        %v4709 = vunpack.c.h.b16 %v4500
        %v4710 = vunpack.c.l.b16 %v4501
        %v4711 = vpack.c.b16 %v4618, %v4615
        %v4712 = vpack.c.b16 %v4619, %v4616
        %v4713 = vpack.c.b16 %v4620, %v4617
        %v4714 = vpack.c.b16 %v4624, %v4621
        %v4715 = vpack.c.b16 %v4625, %v4622
        %v4716 = vpack.c.b16 %v4626, %v4623
        %v4717 = vpack.c.b16 %v4630, %v4627
        %v4718 = vpack.c.b16 %v4631, %v4628
        %v4719 = vpack.c.b16 %v4632, %v4629
        %v4720 = vpack.c.b16 %v4636, %v4633
        %v4721 = vpack.c.b16 %v4637, %v4634
        %v4722 = vpack.c.b16 %v4638, %v4635
        %v4723 = vpack.c.b16 %v4642, %v4639
        %v4724 = vpack.c.b16 %v4643, %v4640
        %v4725 = vpack.c.b16 %v4644, %v4641
        %v4726 = vpack.c.b16 %v4648, %v4645
        %v4727 = vpack.c.b16 %v4649, %v4646
        %v4728 = vpack.c.b16 %v4650, %v4647
        %v4729 = vpack.c.b16 %v4654, %v4651
        %v4730 = vpack.c.b16 %v4655, %v4652
        %v4731 = vpack.c.b16 %v4656, %v4653
        %v4732 = vpack.c.b16 %v4660, %v4657
        %v4733 = vpack.c.b16 %v4661, %v4658
        %v4734 = vpack.c.b16 %v4662, %v4659
        %v4735 = vpack.c.b16 %v4666, %v4663
        %v4736 = vpack.c.b16 %v4667, %v4664
        %v4737 = vpack.c.b16 %v4668, %v4665
        %v4738 = vpack.c.b16 %v4672, %v4669
        %v4739 = vpack.c.b16 %v4673, %v4670
        %v4740 = vpack.c.b16 %v4674, %v4671
        %v4741 = vpack.c.b16 %v4678, %v4675
        %v4742 = vpack.c.b16 %v4679, %v4676
        %v4743 = vpack.c.b16 %v4680, %v4677
        %v4744 = vpack.c.b16 %v4684, %v4681
        %v4745 = vpack.c.b16 %v4685, %v4682
        %v4746 = vpack.c.b16 %v4686, %v4683
        %v4747 = vpack.c.b16 %v4690, %v4687
        %v4748 = vpack.c.b16 %v4691, %v4688
        %v4749 = vpack.c.b16 %v4692, %v4689
        %v4750 = vpack.c.b16 %v4696, %v4693
        %v4751 = vpack.c.b16 %v4697, %v4694
        %v4752 = vpack.c.b16 %v4698, %v4695
        %v4753 = vpack.c.b16 %v4702, %v4699
        %v4754 = vpack.c.b16 %v4703, %v4700
        %v4755 = vpack.c.b16 %v4704, %v4701
        %v4756 = vpack.c.b16 %v4708, %v4705
        %v4757 = vpack.c.b16 %v4709, %v4706
        %v4758 = vpack.c.b16 %v4710, %v4707
        %v4855 = vunpack.c.l.b16 %v4503
        %v4856 = vunpack.c.l.b16 %v4504
        %v4857 = vunpack.c.l.b16 %v4505
        %v4858 = vunpack.c.l.b16 %v4506
        %v4859 = vunpack.c.l.b16 %v4507
        %v4860 = vunpack.c.l.b16 %v4508
        %v4861 = vunpack.c.l.b16 %v4509
        %v4862 = vunpack.c.l.b16 %v4510
        %v4863 = vunpack.c.l.b16 %v4511
        %v4864 = vunpack.c.l.b16 %v4512
        %v4865 = vunpack.c.l.b16 %v4513
        %v4866 = vunpack.c.l.b16 %v4514
        %v4867 = vunpack.c.l.b16 %v4515
        %v4868 = vunpack.c.l.b16 %v4516
        %v4869 = vunpack.c.l.b16 %v4517
        %v4870 = vunpack.c.l.b16 %v4518
        %v4871 = vunpack.c.l.b16 %v4519
        %v4872 = vunpack.c.l.b16 %v4520
        %v4873 = vunpack.c.l.b16 %v4521
        %v4874 = vunpack.c.l.b16 %v4522
        %v4875 = vunpack.c.l.b16 %v4523
        %v4876 = vunpack.c.l.b16 %v4524
        %v4877 = vunpack.c.l.b16 %v4525
        %v4878 = vunpack.c.l.b16 %v4526
        %v4879 = vunpack.c.l.b16 %v4527
        %v4880 = vunpack.c.l.b16 %v4528
        %v4881 = vunpack.c.l.b16 %v4529
        %v4882 = vunpack.c.l.b16 %v4530
        %v4883 = vunpack.c.l.b16 %v4531
        %v4884 = vunpack.c.l.b16 %v4532
        %v4885 = vunpack.c.l.b16 %v4533
        %v4886 = vunpack.c.l.b16 %v4534
        %v4887 = vunpack.c.l.b16 %v4535
        %v4888 = vunpack.c.l.b16 %v4536
        %v4889 = vunpack.c.l.b16 %v4537
        %v4890 = vunpack.c.l.b16 %v4538
        %v4891 = vunpack.c.l.b16 %v4539
        %v4892 = vunpack.c.l.b16 %v4540
        %v4893 = vunpack.c.l.b16 %v4541
        %v4894 = vunpack.c.l.b16 %v4542
        %v4895 = vunpack.c.l.b16 %v4543
        %v4896 = vunpack.c.l.b16 %v4544
        %v4897 = vunpack.c.l.b16 %v4545
        %v4898 = vunpack.c.l.b16 %v4546
        %v4899 = vunpack.c.l.b16 %v4547
        %v4900 = vunpack.c.l.b16 %v4548
        %v4901 = vunpack.c.l.b16 %v4549
        %v4902 = vunpack.c.l.b16 %v4550
        %v4903 = vpack.c.b16 %v4856, %v4855
        %v4904 = vpack.c.b16 %v4858, %v4857
        %v4905 = vpack.c.b16 %v4860, %v4859
        %v4906 = vpack.c.b16 %v4862, %v4861
        %v4907 = vpack.c.b16 %v4864, %v4863
        %v4908 = vpack.c.b16 %v4866, %v4865
        %v4909 = vpack.c.b16 %v4868, %v4867
        %v4910 = vpack.c.b16 %v4870, %v4869
        %v4911 = vpack.c.b16 %v4872, %v4871
        %v4912 = vpack.c.b16 %v4874, %v4873
        %v4913 = vpack.c.b16 %v4876, %v4875
        %v4914 = vpack.c.b16 %v4878, %v4877
        %v4915 = vpack.c.b16 %v4880, %v4879
        %v4916 = vpack.c.b16 %v4882, %v4881
        %v4917 = vpack.c.b16 %v4884, %v4883
        %v4918 = vpack.c.b16 %v4886, %v4885
        %v4919 = vpack.c.b16 %v4888, %v4887
        %v4920 = vpack.c.b16 %v4890, %v4889
        %v4921 = vpack.c.b16 %v4892, %v4891
        %v4922 = vpack.c.b16 %v4894, %v4893
        %v4923 = vpack.c.b16 %v4896, %v4895
        %v4924 = vpack.c.b16 %v4898, %v4897
        %v4925 = vpack.c.b16 %v4900, %v4899
        %v4926 = vpack.c.b16 %v4902, %v4901
        %4951 = vmatpush.bf16.msra.mxu0 %v4910
        %4952 = vmatpush.bf16.msra.mxu0 %v4909
        %4953 = vmatpush.bf16.msra.mxu0 %v4908
        %4954 = vmatpush.bf16.msra.mxu0 %v4907
        %4955 = vmatpush.bf16.msra.mxu0 %v4906
        %4956 = vmatpush.bf16.msra.mxu0 %v4905
        %4957 = vmatpush.bf16.msra.mxu0 %v4904
        %4958 = vmatpush.bf16.msra.mxu0 %v4903
        %4959 = vmatmul.bf16.gmra.mxu0 %v4711
        %v4960 = vpop.f32.mrf.mxu0
        %v4961 = vadd.f32 0.0, %v4960
        %v4962 = vpop.f32.mrf.mxu0
        %v4963 = vadd.f32 0.0, %v4962
        %4964 = vmatmul.bf16.gmra.mxu0 %v4714
        %v4965 = vpop.f32.mrf.mxu0
        %v4966 = vadd.f32 0.0, %v4965
        %v4967 = vpop.f32.mrf.mxu0
        %v4968 = vadd.f32 0.0, %v4967
        %4969 = vmatmul.bf16.gmra.mxu0 %v4717
        %v4970 = vpop.f32.mrf.mxu0
        %v4971 = vadd.f32 0.0, %v4970
        %v4972 = vpop.f32.mrf.mxu0
        %v4973 = vadd.f32 0.0, %v4972
        %4974 = vmatmul.bf16.gmra.mxu0 %v4720
        %v4975 = vpop.f32.mrf.mxu0
        %v4976 = vadd.f32 0.0, %v4975
        %v4977 = vpop.f32.mrf.mxu0
        %v4978 = vadd.f32 0.0, %v4977
        %4979 = vmatmul.bf16.gmra.mxu0 %v4723
        %v4980 = vpop.f32.mrf.mxu0
        %v4981 = vadd.f32 0.0, %v4980
        %v4982 = vpop.f32.mrf.mxu0
        %v4983 = vadd.f32 0.0, %v4982
        %4984 = vmatmul.bf16.gmra.mxu0 %v4726
        %v4985 = vpop.f32.mrf.mxu0
        %v4986 = vadd.f32 0.0, %v4985
        %v4987 = vpop.f32.mrf.mxu0
        %v4988 = vadd.f32 0.0, %v4987
        %4989 = vmatmul.bf16.gmra.mxu0 %v4729
        %v4990 = vpop.f32.mrf.mxu0
        %v4991 = vadd.f32 0.0, %v4990
        %v4992 = vpop.f32.mrf.mxu0
        %v4993 = vadd.f32 0.0, %v4992
        %4994 = vmatmul.bf16.gmra.mxu0 %v4732
        %v4995 = vpop.f32.mrf.mxu0
        %v4996 = vadd.f32 0.0, %v4995
        %v4997 = vpop.f32.mrf.mxu0
        %v4998 = vadd.f32 0.0, %v4997
        %4999 = vmatmul.bf16.gmra.mxu0 %v4735
        %v5000 = vpop.f32.mrf.mxu0
        %v5001 = vadd.f32 0.0, %v5000
        %v5002 = vpop.f32.mrf.mxu0
        %v5003 = vadd.f32 0.0, %v5002
        %5004 = vmatmul.bf16.gmra.mxu0 %v4738
        %v5005 = vpop.f32.mrf.mxu0
        %v5006 = vadd.f32 0.0, %v5005
        %v5007 = vpop.f32.mrf.mxu0
        %v5008 = vadd.f32 0.0, %v5007
        %5009 = vmatmul.bf16.gmra.mxu0 %v4741
        %v5010 = vpop.f32.mrf.mxu0
        %v5011 = vadd.f32 0.0, %v5010
        %v5012 = vpop.f32.mrf.mxu0
        %v5013 = vadd.f32 0.0, %v5012
        %5014 = vmatmul.bf16.gmra.mxu0 %v4744
        %v5015 = vpop.f32.mrf.mxu0
        %v5016 = vadd.f32 0.0, %v5015
        %v5017 = vpop.f32.mrf.mxu0
        %v5018 = vadd.f32 0.0, %v5017
        %5019 = vmatmul.bf16.gmra.mxu0 %v4747
        %v5020 = vpop.f32.mrf.mxu0
        %v5021 = vadd.f32 0.0, %v5020
        %v5022 = vpop.f32.mrf.mxu0
        %v5023 = vadd.f32 0.0, %v5022
        %5024 = vmatmul.bf16.gmra.mxu0 %v4750
        %v5025 = vpop.f32.mrf.mxu0
        %v5026 = vadd.f32 0.0, %v5025
        %v5027 = vpop.f32.mrf.mxu0
        %v5028 = vadd.f32 0.0, %v5027
        %5029 = vmatmul.bf16.gmra.mxu0 %v4753
        %v5030 = vpop.f32.mrf.mxu0
        %v5031 = vadd.f32 0.0, %v5030
        %v5032 = vpop.f32.mrf.mxu0
        %v5033 = vadd.f32 0.0, %v5032
        %5034 = vmatmul.bf16.gmra.mxu0 %v4756
        %v5035 = vpop.f32.mrf.mxu0
        %v5036 = vadd.f32 0.0, %v5035
        %v5037 = vpop.f32.mrf.mxu0
        %v5038 = vadd.f32 0.0, %v5037
        %5039 = vdwg.mxu0
        %5040 = vmatpush.bf16.msra.mxu0 %v4918
        %5041 = vmatpush.bf16.msra.mxu0 %v4917
        %5042 = vmatpush.bf16.msra.mxu0 %v4916
        %5043 = vmatpush.bf16.msra.mxu0 %v4915
        %5044 = vmatpush.bf16.msra.mxu0 %v4914
        %5045 = vmatpush.bf16.msra.mxu0 %v4913
        %5046 = vmatpush.bf16.msra.mxu0 %v4912
        %5047 = vmatpush.bf16.msra.mxu0 %v4911
        %5048 = vmatmul.bf16.gmra.mxu0 %v4712
        %v5049 = vpop.f32.mrf.mxu0
        %v5050 = vadd.f32 %v4961, %v5049
        %v5051 = vpop.f32.mrf.mxu0
        %v5052 = vadd.f32 %v4963, %v5051
        %5053 = vmatmul.bf16.gmra.mxu0 %v4715
        %v5054 = vpop.f32.mrf.mxu0
        %v5055 = vadd.f32 %v4966, %v5054
        %v5056 = vpop.f32.mrf.mxu0
        %v5057 = vadd.f32 %v4968, %v5056
        %5058 = vmatmul.bf16.gmra.mxu0 %v4718
        %v5059 = vpop.f32.mrf.mxu0
        %v5060 = vadd.f32 %v4971, %v5059
        %v5061 = vpop.f32.mrf.mxu0
        %v5062 = vadd.f32 %v4973, %v5061
        %5063 = vmatmul.bf16.gmra.mxu0 %v4721
        %v5064 = vpop.f32.mrf.mxu0
        %v5065 = vadd.f32 %v4976, %v5064
        %v5066 = vpop.f32.mrf.mxu0
        %v5067 = vadd.f32 %v4978, %v5066
        %5068 = vmatmul.bf16.gmra.mxu0 %v4724
        %v5069 = vpop.f32.mrf.mxu0
        %v5070 = vadd.f32 %v4981, %v5069
        %v5071 = vpop.f32.mrf.mxu0
        %v5072 = vadd.f32 %v4983, %v5071
        %5073 = vmatmul.bf16.gmra.mxu0 %v4727
        %v5074 = vpop.f32.mrf.mxu0
        %v5075 = vadd.f32 %v4986, %v5074
        %v5076 = vpop.f32.mrf.mxu0
        %v5077 = vadd.f32 %v4988, %v5076
        %5078 = vmatmul.bf16.gmra.mxu0 %v4730
        %v5079 = vpop.f32.mrf.mxu0
        %v5080 = vadd.f32 %v4991, %v5079
        %v5081 = vpop.f32.mrf.mxu0
        %v5082 = vadd.f32 %v4993, %v5081
        %5083 = vmatmul.bf16.gmra.mxu0 %v4733
        %v5084 = vpop.f32.mrf.mxu0
        %v5085 = vadd.f32 %v4996, %v5084
        %v5086 = vpop.f32.mrf.mxu0
        %v5087 = vadd.f32 %v4998, %v5086
        %5088 = vmatmul.bf16.gmra.mxu0 %v4736
        %v5089 = vpop.f32.mrf.mxu0
        %v5090 = vadd.f32 %v5001, %v5089
        %v5091 = vpop.f32.mrf.mxu0
        %v5092 = vadd.f32 %v5003, %v5091
        %5093 = vmatmul.bf16.gmra.mxu0 %v4739
        %v5094 = vpop.f32.mrf.mxu0
        %v5095 = vadd.f32 %v5006, %v5094
        %v5096 = vpop.f32.mrf.mxu0
        %v5097 = vadd.f32 %v5008, %v5096
        %5098 = vmatmul.bf16.gmra.mxu0 %v4742
        %v5099 = vpop.f32.mrf.mxu0
        %v5100 = vadd.f32 %v5011, %v5099
        %v5101 = vpop.f32.mrf.mxu0
        %v5102 = vadd.f32 %v5013, %v5101
        %5103 = vmatmul.bf16.gmra.mxu0 %v4745
        %v5104 = vpop.f32.mrf.mxu0
        %v5105 = vadd.f32 %v5016, %v5104
        %v5106 = vpop.f32.mrf.mxu0
        %v5107 = vadd.f32 %v5018, %v5106
        %5108 = vmatmul.bf16.gmra.mxu0 %v4748
        %v5109 = vpop.f32.mrf.mxu0
        %v5110 = vadd.f32 %v5021, %v5109
        %v5111 = vpop.f32.mrf.mxu0
        %v5112 = vadd.f32 %v5023, %v5111
        %5113 = vmatmul.bf16.gmra.mxu0 %v4751
        %v5114 = vpop.f32.mrf.mxu0
        %v5115 = vadd.f32 %v5026, %v5114
        %v5116 = vpop.f32.mrf.mxu0
        %v5117 = vadd.f32 %v5028, %v5116
        %5118 = vmatmul.bf16.gmra.mxu0 %v4754
        %v5119 = vpop.f32.mrf.mxu0
        %v5120 = vadd.f32 %v5031, %v5119
        %v5121 = vpop.f32.mrf.mxu0
        %v5122 = vadd.f32 %v5033, %v5121
        %5123 = vmatmul.bf16.gmra.mxu0 %v4757
        %v5124 = vpop.f32.mrf.mxu0
        %v5125 = vadd.f32 %v5036, %v5124
        %v5126 = vpop.f32.mrf.mxu0
        %v5127 = vadd.f32 %v5038, %v5126
        %5128 = vdwg.mxu0
        %5129 = vmatpush.bf16.msra.mxu0 %v4926
        %5130 = vmatpush.bf16.msra.mxu0 %v4925
        %5131 = vmatpush.bf16.msra.mxu0 %v4924
        %5132 = vmatpush.bf16.msra.mxu0 %v4923
        %5133 = vmatpush.bf16.msra.mxu0 %v4922
        %5134 = vmatpush.bf16.msra.mxu0 %v4921
        %5135 = vmatpush.bf16.msra.mxu0 %v4920
        %5136 = vmatpush.bf16.msra.mxu0 %v4919
        %5137 = vmatmul.bf16.gmra.mxu0 %v4713
        %v5138 = vpop.f32.mrf.mxu0
        %v5139 = vadd.f32 %v5050, %v5138
        %v5140 = vpop.f32.mrf.mxu0
        %v5141 = vadd.f32 %v5052, %v5140
        %5142 = vmatmul.bf16.gmra.mxu0 %v4716
        %v5143 = vpop.f32.mrf.mxu0
        %v5144 = vadd.f32 %v5055, %v5143
        %v5145 = vpop.f32.mrf.mxu0
        %v5146 = vadd.f32 %v5057, %v5145
        %5147 = vmatmul.bf16.gmra.mxu0 %v4719
        %v5148 = vpop.f32.mrf.mxu0
        %v5149 = vadd.f32 %v5060, %v5148
        %v5150 = vpop.f32.mrf.mxu0
        %v5151 = vadd.f32 %v5062, %v5150
        %5152 = vmatmul.bf16.gmra.mxu0 %v4722
        %v5153 = vpop.f32.mrf.mxu0
        %v5154 = vadd.f32 %v5065, %v5153
        %v5155 = vpop.f32.mrf.mxu0
        %v5156 = vadd.f32 %v5067, %v5155
        %5157 = vmatmul.bf16.gmra.mxu0 %v4725
        %v5158 = vpop.f32.mrf.mxu0
        %v5159 = vadd.f32 %v5070, %v5158
        %v5160 = vpop.f32.mrf.mxu0
        %v5161 = vadd.f32 %v5072, %v5160
        %5162 = vmatmul.bf16.gmra.mxu0 %v4728
        %v5163 = vpop.f32.mrf.mxu0
        %v5164 = vadd.f32 %v5075, %v5163
        %v5165 = vpop.f32.mrf.mxu0
        %v5166 = vadd.f32 %v5077, %v5165
        %5167 = vmatmul.bf16.gmra.mxu0 %v4731
        %v5168 = vpop.f32.mrf.mxu0
        %v5169 = vadd.f32 %v5080, %v5168
        %v5170 = vpop.f32.mrf.mxu0
        %v5171 = vadd.f32 %v5082, %v5170
        %5172 = vmatmul.bf16.gmra.mxu0 %v4734
        %v5173 = vpop.f32.mrf.mxu0
        %v5174 = vadd.f32 %v5085, %v5173
        %v5175 = vpop.f32.mrf.mxu0
        %v5176 = vadd.f32 %v5087, %v5175
        %5177 = vmatmul.bf16.gmra.mxu0 %v4737
        %v5178 = vpop.f32.mrf.mxu0
        %v5179 = vadd.f32 %v5090, %v5178
        %v5180 = vpop.f32.mrf.mxu0
        %v5181 = vadd.f32 %v5092, %v5180
        %5182 = vmatmul.bf16.gmra.mxu0 %v4740
        %v5183 = vpop.f32.mrf.mxu0
        %v5184 = vadd.f32 %v5095, %v5183
        %v5185 = vpop.f32.mrf.mxu0
        %v5186 = vadd.f32 %v5097, %v5185
        %5187 = vmatmul.bf16.gmra.mxu0 %v4743
        %v5188 = vpop.f32.mrf.mxu0
        %v5189 = vadd.f32 %v5100, %v5188
        %v5190 = vpop.f32.mrf.mxu0
        %v5191 = vadd.f32 %v5102, %v5190
        %5192 = vmatmul.bf16.gmra.mxu0 %v4746
        %v5193 = vpop.f32.mrf.mxu0
        %v5194 = vadd.f32 %v5105, %v5193
        %v5195 = vpop.f32.mrf.mxu0
        %v5196 = vadd.f32 %v5107, %v5195
        %5197 = vmatmul.bf16.gmra.mxu0 %v4749
        %v5198 = vpop.f32.mrf.mxu0
        %v5199 = vadd.f32 %v5110, %v5198
        %v5200 = vpop.f32.mrf.mxu0
        %v5201 = vadd.f32 %v5112, %v5200
        %5202 = vmatmul.bf16.gmra.mxu0 %v4752
        %v5203 = vpop.f32.mrf.mxu0
        %v5204 = vadd.f32 %v5115, %v5203
        %v5205 = vpop.f32.mrf.mxu0
        %v5206 = vadd.f32 %v5117, %v5205
        %5207 = vmatmul.bf16.gmra.mxu0 %v4755
        %v5208 = vpop.f32.mrf.mxu0
        %v5209 = vadd.f32 %v5120, %v5208
        %v5210 = vpop.f32.mrf.mxu0
        %v5211 = vadd.f32 %v5122, %v5210
        %5212 = vmatmul.bf16.gmra.mxu0 %v4758
        %v5213 = vpop.f32.mrf.mxu0
        %v5214 = vadd.f32 %v5125, %v5213
        %v5215 = vpop.f32.mrf.mxu0
        %v5216 = vadd.f32 %v5127, %v5215
        %5217 = vdwg.mxu0
        %v5218 = vadd.f32 %v4359, %v5139
        %v5219 = vadd.f32 %v4361, %v5141
        %v5220 = vadd.f32 %v4364, %v5144
        %v5221 = vadd.f32 %v4366, %v5146
        %v5222 = vadd.f32 %v4369, %v5149
        %v5223 = vadd.f32 %v4371, %v5151
        %v5224 = vadd.f32 %v4374, %v5154
        %v5225 = vadd.f32 %v4376, %v5156
        %v5226 = vadd.f32 %v4379, %v5159
        %v5227 = vadd.f32 %v4381, %v5161
        %v5228 = vadd.f32 %v4384, %v5164
        %v5229 = vadd.f32 %v4386, %v5166
        %v5230 = vadd.f32 %v4389, %v5169
        %v5231 = vadd.f32 %v4391, %v5171
        %v5232 = vadd.f32 %v4394, %v5174
        %v5233 = vadd.f32 %v4396, %v5176
        %v5234 = vadd.f32 %v4399, %v5179
        %v5235 = vadd.f32 %v4401, %v5181
        %v5236 = vadd.f32 %v4404, %v5184
        %v5237 = vadd.f32 %v4406, %v5186
        %v5238 = vadd.f32 %v4409, %v5189
        %v5239 = vadd.f32 %v4411, %v5191
        %v5240 = vadd.f32 %v4414, %v5194
        %v5241 = vadd.f32 %v4416, %v5196
        %v5242 = vadd.f32 %v4419, %v5199
        %v5243 = vadd.f32 %v4421, %v5201
        %v5244 = vadd.f32 %v4424, %v5204
        %v5245 = vadd.f32 %v4426, %v5206
        %v5246 = vadd.f32 %v4429, %v5209
        %v5247 = vadd.f32 %v4431, %v5211
        %v5248 = vadd.f32 %v4434, %v5214
        %v5249 = vadd.f32 %v4436, %v5216
        %v5250 = vld [vmem:[#allocation14] sm:$0x1]
        %v5252 = vperm.slane %v5250, 0
        %v5254 = vmul.f32 %v5218, %v5252
        %v5255 = vmul.f32 %v5219, %v5252
        %v5256 = vmul.f32 %v5220, %v5252
        %v5257 = vmul.f32 %v5221, %v5252
        %v5258 = vmul.f32 %v5222, %v5252
        %v5259 = vmul.f32 %v5223, %v5252
        %v5260 = vmul.f32 %v5224, %v5252
        %v5261 = vmul.f32 %v5225, %v5252
        %v5262 = vmul.f32 %v5226, %v5252
        %v5263 = vmul.f32 %v5227, %v5252
        %v5264 = vmul.f32 %v5228, %v5252
        %v5265 = vmul.f32 %v5229, %v5252
        %v5266 = vmul.f32 %v5230, %v5252
        %v5267 = vmul.f32 %v5231, %v5252
        %v5268 = vmul.f32 %v5232, %v5252
        %v5269 = vmul.f32 %v5233, %v5252
        %v5270 = vmul.f32 %v5234, %v5252
        %v5271 = vmul.f32 %v5235, %v5252
        %v5272 = vmul.f32 %v5236, %v5252
        %v5273 = vmul.f32 %v5237, %v5252
        %v5274 = vmul.f32 %v5238, %v5252
        %v5275 = vmul.f32 %v5239, %v5252
        %v5276 = vmul.f32 %v5240, %v5252
        %v5277 = vmul.f32 %v5241, %v5252
        %v5278 = vmul.f32 %v5242, %v5252
        %v5279 = vmul.f32 %v5243, %v5252
        %v5280 = vmul.f32 %v5244, %v5252
        %v5281 = vmul.f32 %v5245, %v5252
        %v5282 = vmul.f32 %v5246, %v5252
        %v5283 = vmul.f32 %v5247, %v5252
        %v5284 = vmul.f32 %v5248, %v5252
        %v5285 = vmul.f32 %v5249, %v5252
        %v5286 = vld [vmem:[#allocation15] sm:$0x1]
        %v5288 = vperm.slane %v5286, 0
        %v5290 = vadd.f32 %v5254, %v5288
        %v5291 = vadd.f32 %v5255, %v5288
        %v5292 = vadd.f32 %v5256, %v5288
        %v5293 = vadd.f32 %v5257, %v5288
        %v5294 = vadd.f32 %v5258, %v5288
        %v5295 = vadd.f32 %v5259, %v5288
        %v5296 = vadd.f32 %v5260, %v5288
        %v5297 = vadd.f32 %v5261, %v5288
        %v5298 = vadd.f32 %v5262, %v5288
        %v5299 = vadd.f32 %v5263, %v5288
        %v5300 = vadd.f32 %v5264, %v5288
        %v5301 = vadd.f32 %v5265, %v5288
        %v5302 = vadd.f32 %v5266, %v5288
        %v5303 = vadd.f32 %v5267, %v5288
        %v5304 = vadd.f32 %v5268, %v5288
        %v5305 = vadd.f32 %v5269, %v5288
        %v5306 = vadd.f32 %v5270, %v5288
        %v5307 = vadd.f32 %v5271, %v5288
        %v5308 = vadd.f32 %v5272, %v5288
        %v5309 = vadd.f32 %v5273, %v5288
        %v5310 = vadd.f32 %v5274, %v5288
        %v5311 = vadd.f32 %v5275, %v5288
        %v5312 = vadd.f32 %v5276, %v5288
        %v5313 = vadd.f32 %v5277, %v5288
        %v5314 = vadd.f32 %v5278, %v5288
        %v5315 = vadd.f32 %v5279, %v5288
        %v5316 = vadd.f32 %v5280, %v5288
        %v5317 = vadd.f32 %v5281, %v5288
        %v5318 = vadd.f32 %v5282, %v5288
        %v5319 = vadd.f32 %v5283, %v5288
        %v5320 = vadd.f32 %v5284, %v5288
        %v5321 = vadd.f32 %v5285, %v5288
        %v5322 = vmax.f32 %v5290, 0.0
        %v5323 = vmax.f32 %v5291, 0.0
        %v5324 = vmax.f32 %v5292, 0.0
        %v5325 = vmax.f32 %v5293, 0.0
        %v5326 = vmax.f32 %v5294, 0.0
        %v5327 = vmax.f32 %v5295, 0.0
        %v5328 = vmax.f32 %v5296, 0.0
        %v5329 = vmax.f32 %v5297, 0.0
        %v5330 = vmax.f32 %v5298, 0.0
        %v5331 = vmax.f32 %v5299, 0.0
        %v5332 = vmax.f32 %v5300, 0.0
        %v5333 = vmax.f32 %v5301, 0.0
        %v5334 = vmax.f32 %v5302, 0.0
        %v5335 = vmax.f32 %v5303, 0.0
        %v5336 = vmax.f32 %v5304, 0.0
        %v5337 = vmax.f32 %v5305, 0.0
        %v5338 = vmax.f32 %v5306, 0.0
        %v5339 = vmax.f32 %v5307, 0.0
        %v5340 = vmax.f32 %v5308, 0.0
        %v5341 = vmax.f32 %v5309, 0.0
        %v5342 = vmax.f32 %v5310, 0.0
        %v5343 = vmax.f32 %v5311, 0.0
        %v5344 = vmax.f32 %v5312, 0.0
        %v5345 = vmax.f32 %v5313, 0.0
        %v5346 = vmax.f32 %v5314, 0.0
        %v5347 = vmax.f32 %v5315, 0.0
        %v5348 = vmax.f32 %v5316, 0.0
        %v5349 = vmax.f32 %v5317, 0.0
        %v5350 = vmax.f32 %v5318, 0.0
        %v5351 = vmax.f32 %v5319, 0.0
        %v5352 = vmax.f32 %v5320, 0.0
        %v5353 = vmax.f32 %v5321, 0.0
        %v5354 = vpack.c.bf16 %v5323, %v5322
        %v5355 = vpack.c.bf16 %v5325, %v5324
        %v5356 = vpack.c.bf16 %v5327, %v5326
        %v5357 = vpack.c.bf16 %v5329, %v5328
        %v5358 = vpack.c.bf16 %v5331, %v5330
        %v5359 = vpack.c.bf16 %v5333, %v5332
        %v5360 = vpack.c.bf16 %v5335, %v5334
        %v5361 = vpack.c.bf16 %v5337, %v5336
        %v5362 = vpack.c.bf16 %v5339, %v5338
        %v5363 = vpack.c.bf16 %v5341, %v5340
        %v5364 = vpack.c.bf16 %v5343, %v5342
        %v5365 = vpack.c.bf16 %v5345, %v5344
        %v5366 = vpack.c.bf16 %v5347, %v5346
        %v5367 = vpack.c.bf16 %v5349, %v5348
        %v5368 = vpack.c.bf16 %v5351, %v5350
        %v5369 = vpack.c.bf16 %v5353, %v5352
        %v5370 = vld [vmem:[#allocation9] sm:$0xff]
        %v5371 = vld [vmem:[#allocation9 + $0x8] sm:$0xff]
        %v5372 = vld [vmem:[#allocation9 + $0x10] sm:$0xff]
        %v5373 = vld [vmem:[#allocation9 + $0x18] sm:$0xff]
        %v5374 = vld [vmem:[#allocation9 + $0x20] sm:$0xff]
        %v5375 = vld [vmem:[#allocation9 + $0x28] sm:$0xff]
        %v5376 = vld [vmem:[#allocation9 + $0x30] sm:$0xff]
        %v5377 = vld [vmem:[#allocation9 + $0x38] sm:$0xff]
        %v5378 = vld [vmem:[#allocation9 + $0x40] sm:$0xff]
        %v5379 = vld [vmem:[#allocation9 + $0x48] sm:$0xff]
        %v5380 = vld [vmem:[#allocation9 + $0x50] sm:$0xff]
        %v5381 = vld [vmem:[#allocation9 + $0x58] sm:$0xff]
        %v5382 = vld [vmem:[#allocation9 + $0x60] sm:$0xff]
        %v5383 = vld [vmem:[#allocation9 + $0x68] sm:$0xff]
        %v5384 = vld [vmem:[#allocation9 + $0x70] sm:$0xff]
        %v5385 = vld [vmem:[#allocation9 + $0x78] sm:$0xff]
        %v5386 = vld [vmem:[#allocation9 + $0x80] sm:$0xff]
        %v5387 = vld [vmem:[#allocation9 + $0x88] sm:$0xff]
        %v5388 = vld [vmem:[#allocation9 + $0x90] sm:$0xff]
        %v5389 = vld [vmem:[#allocation9 + $0x98] sm:$0xff]
        %v5390 = vld [vmem:[#allocation9 + $0xa0] sm:$0xff]
        %v5391 = vld [vmem:[#allocation9 + $0xa8] sm:$0xff]
        %v5392 = vld [vmem:[#allocation9 + $0xb0] sm:$0xff]
        %v5393 = vld [vmem:[#allocation9 + $0xb8] sm:$0xff]
        %v5394 = vld [vmem:[#allocation9 + $0xc0] sm:$0xff]
        %v5395 = vld [vmem:[#allocation9 + $0xc8] sm:$0xff]
        %v5396 = vld [vmem:[#allocation9 + $0xd0] sm:$0xff]
        %v5397 = vld [vmem:[#allocation9 + $0xd8] sm:$0xff]
        %v5398 = vld [vmem:[#allocation9 + $0xe0] sm:$0xff]
        %v5399 = vld [vmem:[#allocation9 + $0xe8] sm:$0xff]
        %v5400 = vld [vmem:[#allocation9 + $0xf0] sm:$0xff]
        %v5401 = vld [vmem:[#allocation9 + $0xf8] sm:$0xff]
        %v5434 = vunpack.c.l.b16 %v5370
        %v5435 = vunpack.c.h.b16 %v5370
        %v5436 = vunpack.c.l.b16 %v5371
        %v5437 = vunpack.c.h.b16 %v5371
        %v5438 = vunpack.c.l.b16 %v5372
        %v5439 = vunpack.c.h.b16 %v5372
        %v5440 = vunpack.c.l.b16 %v5373
        %v5441 = vunpack.c.h.b16 %v5373
        %v5442 = vunpack.c.l.b16 %v5374
        %v5443 = vunpack.c.h.b16 %v5374
        %v5444 = vunpack.c.l.b16 %v5375
        %v5445 = vunpack.c.h.b16 %v5375
        %v5446 = vunpack.c.l.b16 %v5376
        %v5447 = vunpack.c.h.b16 %v5376
        %v5448 = vunpack.c.l.b16 %v5377
        %v5449 = vunpack.c.h.b16 %v5377
        %v5450 = vunpack.c.l.b16 %v5378
        %v5451 = vunpack.c.h.b16 %v5378
        %v5452 = vunpack.c.l.b16 %v5379
        %v5453 = vunpack.c.h.b16 %v5379
        %v5454 = vunpack.c.l.b16 %v5380
        %v5455 = vunpack.c.h.b16 %v5380
        %v5456 = vunpack.c.l.b16 %v5381
        %v5457 = vunpack.c.h.b16 %v5381
        %v5458 = vunpack.c.l.b16 %v5382
        %v5459 = vunpack.c.h.b16 %v5382
        %v5460 = vunpack.c.l.b16 %v5383
        %v5461 = vunpack.c.h.b16 %v5383
        %v5462 = vunpack.c.l.b16 %v5384
        %v5463 = vunpack.c.h.b16 %v5384
        %v5464 = vunpack.c.l.b16 %v5385
        %v5465 = vunpack.c.h.b16 %v5385
        %v5466 = vunpack.c.l.b16 %v5386
        %v5467 = vunpack.c.h.b16 %v5386
        %v5468 = vunpack.c.l.b16 %v5387
        %v5469 = vunpack.c.h.b16 %v5387
        %v5470 = vunpack.c.l.b16 %v5388
        %v5471 = vunpack.c.h.b16 %v5388
        %v5472 = vunpack.c.l.b16 %v5389
        %v5473 = vunpack.c.h.b16 %v5389
        %v5474 = vunpack.c.l.b16 %v5390
        %v5475 = vunpack.c.h.b16 %v5390
        %v5476 = vunpack.c.l.b16 %v5391
        %v5477 = vunpack.c.h.b16 %v5391
        %v5478 = vunpack.c.l.b16 %v5392
        %v5479 = vunpack.c.h.b16 %v5392
        %v5480 = vunpack.c.l.b16 %v5393
        %v5481 = vunpack.c.h.b16 %v5393
        %v5482 = vunpack.c.l.b16 %v5394
        %v5483 = vunpack.c.h.b16 %v5394
        %v5484 = vunpack.c.l.b16 %v5395
        %v5485 = vunpack.c.h.b16 %v5395
        %v5486 = vunpack.c.l.b16 %v5396
        %v5487 = vunpack.c.h.b16 %v5396
        %v5488 = vunpack.c.l.b16 %v5397
        %v5489 = vunpack.c.h.b16 %v5397
        %v5490 = vunpack.c.l.b16 %v5398
        %v5491 = vunpack.c.h.b16 %v5398
        %v5492 = vunpack.c.l.b16 %v5399
        %v5493 = vunpack.c.h.b16 %v5399
        %v5494 = vunpack.c.l.b16 %v5400
        %v5495 = vunpack.c.h.b16 %v5400
        %v5496 = vunpack.c.l.b16 %v5401
        %v5497 = vunpack.c.h.b16 %v5401
        %v5498 = vpack.c.b16 %v5438, %v5434
        %v5499 = vpack.c.b16 %v5439, %v5435
        %v5500 = vpack.c.b16 %v5440, %v5436
        %v5501 = vpack.c.b16 %v5441, %v5437
        %v5502 = vpack.c.b16 %v5446, %v5442
        %v5503 = vpack.c.b16 %v5447, %v5443
        %v5504 = vpack.c.b16 %v5448, %v5444
        %v5505 = vpack.c.b16 %v5449, %v5445
        %v5506 = vpack.c.b16 %v5454, %v5450
        %v5507 = vpack.c.b16 %v5455, %v5451
        %v5508 = vpack.c.b16 %v5456, %v5452
        %v5509 = vpack.c.b16 %v5457, %v5453
        %v5510 = vpack.c.b16 %v5462, %v5458
        %v5511 = vpack.c.b16 %v5463, %v5459
        %v5512 = vpack.c.b16 %v5464, %v5460
        %v5513 = vpack.c.b16 %v5465, %v5461
        %v5514 = vpack.c.b16 %v5470, %v5466
        %v5515 = vpack.c.b16 %v5471, %v5467
        %v5516 = vpack.c.b16 %v5472, %v5468
        %v5517 = vpack.c.b16 %v5473, %v5469
        %v5518 = vpack.c.b16 %v5478, %v5474
        %v5519 = vpack.c.b16 %v5479, %v5475
        %v5520 = vpack.c.b16 %v5480, %v5476
        %v5521 = vpack.c.b16 %v5481, %v5477
        %v5522 = vpack.c.b16 %v5486, %v5482
        %v5523 = vpack.c.b16 %v5487, %v5483
        %v5524 = vpack.c.b16 %v5488, %v5484
        %v5525 = vpack.c.b16 %v5489, %v5485
        %v5526 = vpack.c.b16 %v5494, %v5490
        %v5527 = vpack.c.b16 %v5495, %v5491
        %v5528 = vpack.c.b16 %v5496, %v5492
        %v5529 = vpack.c.b16 %v5497, %v5493
        %5562 = vmatpush.bf16.msra.mxu0 %v5526
        %5563 = vmatpush.bf16.msra.mxu0 %v5522
        %5564 = vmatpush.bf16.msra.mxu0 %v5518
        %5565 = vmatpush.bf16.msra.mxu0 %v5514
        %5566 = vmatpush.bf16.msra.mxu0 %v5510
        %5567 = vmatpush.bf16.msra.mxu0 %v5506
        %5568 = vmatpush.bf16.msra.mxu0 %v5502
        %5569 = vmatpush.bf16.msra.mxu0 %v5498
        %5570 = vmatmul.bf16.gmra.mxu0 %v5354
        %v5571 = vpop.f32.mrf.mxu0
        %v5572 = vadd.f32 0.0, %v5571
        %v5573 = vpop.f32.mrf.mxu0
        %v5574 = vadd.f32 0.0, %v5573
        %5575 = vmatmul.bf16.gmra.mxu0 %v5355
        %v5576 = vpop.f32.mrf.mxu0
        %v5577 = vadd.f32 0.0, %v5576
        %v5578 = vpop.f32.mrf.mxu0
        %v5579 = vadd.f32 0.0, %v5578
        %5580 = vmatmul.bf16.gmra.mxu0 %v5356
        %v5581 = vpop.f32.mrf.mxu0
        %v5582 = vadd.f32 0.0, %v5581
        %v5583 = vpop.f32.mrf.mxu0
        %v5584 = vadd.f32 0.0, %v5583
        %5585 = vmatmul.bf16.gmra.mxu0 %v5357
        %v5586 = vpop.f32.mrf.mxu0
        %v5587 = vadd.f32 0.0, %v5586
        %v5588 = vpop.f32.mrf.mxu0
        %v5589 = vadd.f32 0.0, %v5588
        %5590 = vmatmul.bf16.gmra.mxu0 %v5358
        %v5591 = vpop.f32.mrf.mxu0
        %v5592 = vadd.f32 0.0, %v5591
        %v5593 = vpop.f32.mrf.mxu0
        %v5594 = vadd.f32 0.0, %v5593
        %5595 = vmatmul.bf16.gmra.mxu0 %v5359
        %v5596 = vpop.f32.mrf.mxu0
        %v5597 = vadd.f32 0.0, %v5596
        %v5598 = vpop.f32.mrf.mxu0
        %v5599 = vadd.f32 0.0, %v5598
        %5600 = vmatmul.bf16.gmra.mxu0 %v5360
        %v5601 = vpop.f32.mrf.mxu0
        %v5602 = vadd.f32 0.0, %v5601
        %v5603 = vpop.f32.mrf.mxu0
        %v5604 = vadd.f32 0.0, %v5603
        %5605 = vmatmul.bf16.gmra.mxu0 %v5361
        %v5606 = vpop.f32.mrf.mxu0
        %v5607 = vadd.f32 0.0, %v5606
        %v5608 = vpop.f32.mrf.mxu0
        %v5609 = vadd.f32 0.0, %v5608
        %5610 = vmatmul.bf16.gmra.mxu0 %v5362
        %v5611 = vpop.f32.mrf.mxu0
        %v5612 = vadd.f32 0.0, %v5611
        %v5613 = vpop.f32.mrf.mxu0
        %v5614 = vadd.f32 0.0, %v5613
        %5615 = vmatmul.bf16.gmra.mxu0 %v5363
        %v5616 = vpop.f32.mrf.mxu0
        %v5617 = vadd.f32 0.0, %v5616
        %v5618 = vpop.f32.mrf.mxu0
        %v5619 = vadd.f32 0.0, %v5618
        %5620 = vmatmul.bf16.gmra.mxu0 %v5364
        %v5621 = vpop.f32.mrf.mxu0
        %v5622 = vadd.f32 0.0, %v5621
        %v5623 = vpop.f32.mrf.mxu0
        %v5624 = vadd.f32 0.0, %v5623
        %5625 = vmatmul.bf16.gmra.mxu0 %v5365
        %v5626 = vpop.f32.mrf.mxu0
        %v5627 = vadd.f32 0.0, %v5626
        %v5628 = vpop.f32.mrf.mxu0
        %v5629 = vadd.f32 0.0, %v5628
        %5630 = vmatmul.bf16.gmra.mxu0 %v5366
        %v5631 = vpop.f32.mrf.mxu0
        %v5632 = vadd.f32 0.0, %v5631
        %v5633 = vpop.f32.mrf.mxu0
        %v5634 = vadd.f32 0.0, %v5633
        %5635 = vmatmul.bf16.gmra.mxu0 %v5367
        %v5636 = vpop.f32.mrf.mxu0
        %v5637 = vadd.f32 0.0, %v5636
        %v5638 = vpop.f32.mrf.mxu0
        %v5639 = vadd.f32 0.0, %v5638
        %5640 = vmatmul.bf16.gmra.mxu0 %v5368
        %v5641 = vpop.f32.mrf.mxu0
        %v5642 = vadd.f32 0.0, %v5641
        %v5643 = vpop.f32.mrf.mxu0
        %v5644 = vadd.f32 0.0, %v5643
        %5645 = vmatmul.bf16.gmra.mxu0 %v5369
        %v5646 = vpop.f32.mrf.mxu0
        %v5647 = vadd.f32 0.0, %v5646
        %v5648 = vpop.f32.mrf.mxu0
        %v5649 = vadd.f32 0.0, %v5648
        %5650 = vdwg.mxu0
        %5651 = vmatpush.bf16.msra.mxu0 %v5527
        %5652 = vmatpush.bf16.msra.mxu0 %v5523
        %5653 = vmatpush.bf16.msra.mxu0 %v5519
        %5654 = vmatpush.bf16.msra.mxu0 %v5515
        %5655 = vmatpush.bf16.msra.mxu0 %v5511
        %5656 = vmatpush.bf16.msra.mxu0 %v5507
        %5657 = vmatpush.bf16.msra.mxu0 %v5503
        %5658 = vmatpush.bf16.msra.mxu0 %v5499
        %5659 = vmatmul.bf16.gmra.mxu0 %v5354
        %v5660 = vpop.f32.mrf.mxu0
        %v5661 = vadd.f32 0.0, %v5660
        %v5662 = vpop.f32.mrf.mxu0
        %v5663 = vadd.f32 0.0, %v5662
        %5664 = vmatmul.bf16.gmra.mxu0 %v5355
        %v5665 = vpop.f32.mrf.mxu0
        %v5666 = vadd.f32 0.0, %v5665
        %v5667 = vpop.f32.mrf.mxu0
        %v5668 = vadd.f32 0.0, %v5667
        %5669 = vmatmul.bf16.gmra.mxu0 %v5356
        %v5670 = vpop.f32.mrf.mxu0
        %v5671 = vadd.f32 0.0, %v5670
        %v5672 = vpop.f32.mrf.mxu0
        %v5673 = vadd.f32 0.0, %v5672
        %5674 = vmatmul.bf16.gmra.mxu0 %v5357
        %v5675 = vpop.f32.mrf.mxu0
        %v5676 = vadd.f32 0.0, %v5675
        %v5677 = vpop.f32.mrf.mxu0
        %v5678 = vadd.f32 0.0, %v5677
        %5679 = vmatmul.bf16.gmra.mxu0 %v5358
        %v5680 = vpop.f32.mrf.mxu0
        %v5681 = vadd.f32 0.0, %v5680
        %v5682 = vpop.f32.mrf.mxu0
        %v5683 = vadd.f32 0.0, %v5682
        %5684 = vmatmul.bf16.gmra.mxu0 %v5359
        %v5685 = vpop.f32.mrf.mxu0
        %v5686 = vadd.f32 0.0, %v5685
        %v5687 = vpop.f32.mrf.mxu0
        %v5688 = vadd.f32 0.0, %v5687
        %5689 = vmatmul.bf16.gmra.mxu0 %v5360
        %v5690 = vpop.f32.mrf.mxu0
        %v5691 = vadd.f32 0.0, %v5690
        %v5692 = vpop.f32.mrf.mxu0
        %v5693 = vadd.f32 0.0, %v5692
        %5694 = vmatmul.bf16.gmra.mxu0 %v5361
        %v5695 = vpop.f32.mrf.mxu0
        %v5696 = vadd.f32 0.0, %v5695
        %v5697 = vpop.f32.mrf.mxu0
        %v5698 = vadd.f32 0.0, %v5697
        %5699 = vmatmul.bf16.gmra.mxu0 %v5362
        %v5700 = vpop.f32.mrf.mxu0
        %v5701 = vadd.f32 0.0, %v5700
        %v5702 = vpop.f32.mrf.mxu0
        %v5703 = vadd.f32 0.0, %v5702
        %5704 = vmatmul.bf16.gmra.mxu0 %v5363
        %v5705 = vpop.f32.mrf.mxu0
        %v5706 = vadd.f32 0.0, %v5705
        %v5707 = vpop.f32.mrf.mxu0
        %v5708 = vadd.f32 0.0, %v5707
        %5709 = vmatmul.bf16.gmra.mxu0 %v5364
        %v5710 = vpop.f32.mrf.mxu0
        %v5711 = vadd.f32 0.0, %v5710
        %v5712 = vpop.f32.mrf.mxu0
        %v5713 = vadd.f32 0.0, %v5712
        %5714 = vmatmul.bf16.gmra.mxu0 %v5365
        %v5715 = vpop.f32.mrf.mxu0
        %v5716 = vadd.f32 0.0, %v5715
        %v5717 = vpop.f32.mrf.mxu0
        %v5718 = vadd.f32 0.0, %v5717
        %5719 = vmatmul.bf16.gmra.mxu0 %v5366
        %v5720 = vpop.f32.mrf.mxu0
        %v5721 = vadd.f32 0.0, %v5720
        %v5722 = vpop.f32.mrf.mxu0
        %v5723 = vadd.f32 0.0, %v5722
        %5724 = vmatmul.bf16.gmra.mxu0 %v5367
        %v5725 = vpop.f32.mrf.mxu0
        %v5726 = vadd.f32 0.0, %v5725
        %v5727 = vpop.f32.mrf.mxu0
        %v5728 = vadd.f32 0.0, %v5727
        %5729 = vmatmul.bf16.gmra.mxu0 %v5368
        %v5730 = vpop.f32.mrf.mxu0
        %v5731 = vadd.f32 0.0, %v5730
        %v5732 = vpop.f32.mrf.mxu0
        %v5733 = vadd.f32 0.0, %v5732
        %5734 = vmatmul.bf16.gmra.mxu0 %v5369
        %v5735 = vpop.f32.mrf.mxu0
        %v5736 = vadd.f32 0.0, %v5735
        %v5737 = vpop.f32.mrf.mxu0
        %v5738 = vadd.f32 0.0, %v5737
        %5739 = vdwg.mxu0
        %5740 = vmatpush.bf16.msra.mxu0 %v5528
        %5741 = vmatpush.bf16.msra.mxu0 %v5524
        %5742 = vmatpush.bf16.msra.mxu0 %v5520
        %5743 = vmatpush.bf16.msra.mxu0 %v5516
        %5744 = vmatpush.bf16.msra.mxu0 %v5512
        %5745 = vmatpush.bf16.msra.mxu0 %v5508
        %5746 = vmatpush.bf16.msra.mxu0 %v5504
        %5747 = vmatpush.bf16.msra.mxu0 %v5500
        %5748 = vmatmul.bf16.gmra.mxu0 %v5354
        %v5749 = vpop.f32.mrf.mxu0
        %v5750 = vadd.f32 0.0, %v5749
        %v5751 = vpop.f32.mrf.mxu0
        %v5752 = vadd.f32 0.0, %v5751
        %5753 = vmatmul.bf16.gmra.mxu0 %v5355
        %v5754 = vpop.f32.mrf.mxu0
        %v5755 = vadd.f32 0.0, %v5754
        %v5756 = vpop.f32.mrf.mxu0
        %v5757 = vadd.f32 0.0, %v5756
        %5758 = vmatmul.bf16.gmra.mxu0 %v5356
        %v5759 = vpop.f32.mrf.mxu0
        %v5760 = vadd.f32 0.0, %v5759
        %v5761 = vpop.f32.mrf.mxu0
        %v5762 = vadd.f32 0.0, %v5761
        %5763 = vmatmul.bf16.gmra.mxu0 %v5357
        %v5764 = vpop.f32.mrf.mxu0
        %v5765 = vadd.f32 0.0, %v5764
        %v5766 = vpop.f32.mrf.mxu0
        %v5767 = vadd.f32 0.0, %v5766
        %5768 = vmatmul.bf16.gmra.mxu0 %v5358
        %v5769 = vpop.f32.mrf.mxu0
        %v5770 = vadd.f32 0.0, %v5769
        %v5771 = vpop.f32.mrf.mxu0
        %v5772 = vadd.f32 0.0, %v5771
        %5773 = vmatmul.bf16.gmra.mxu0 %v5359
        %v5774 = vpop.f32.mrf.mxu0
        %v5775 = vadd.f32 0.0, %v5774
        %v5776 = vpop.f32.mrf.mxu0
        %v5777 = vadd.f32 0.0, %v5776
        %5778 = vmatmul.bf16.gmra.mxu0 %v5360
        %v5779 = vpop.f32.mrf.mxu0
        %v5780 = vadd.f32 0.0, %v5779
        %v5781 = vpop.f32.mrf.mxu0
        %v5782 = vadd.f32 0.0, %v5781
        %5783 = vmatmul.bf16.gmra.mxu0 %v5361
        %v5784 = vpop.f32.mrf.mxu0
        %v5785 = vadd.f32 0.0, %v5784
        %v5786 = vpop.f32.mrf.mxu0
        %v5787 = vadd.f32 0.0, %v5786
        %5788 = vmatmul.bf16.gmra.mxu0 %v5362
        %v5789 = vpop.f32.mrf.mxu0
        %v5790 = vadd.f32 0.0, %v5789
        %v5791 = vpop.f32.mrf.mxu0
        %v5792 = vadd.f32 0.0, %v5791
        %5793 = vmatmul.bf16.gmra.mxu0 %v5363
        %v5794 = vpop.f32.mrf.mxu0
        %v5795 = vadd.f32 0.0, %v5794
        %v5796 = vpop.f32.mrf.mxu0
        %v5797 = vadd.f32 0.0, %v5796
        %5798 = vmatmul.bf16.gmra.mxu0 %v5364
        %v5799 = vpop.f32.mrf.mxu0
        %v5800 = vadd.f32 0.0, %v5799
        %v5801 = vpop.f32.mrf.mxu0
        %v5802 = vadd.f32 0.0, %v5801
        %5803 = vmatmul.bf16.gmra.mxu0 %v5365
        %v5804 = vpop.f32.mrf.mxu0
        %v5805 = vadd.f32 0.0, %v5804
        %v5806 = vpop.f32.mrf.mxu0
        %v5807 = vadd.f32 0.0, %v5806
        %5808 = vmatmul.bf16.gmra.mxu0 %v5366
        %v5809 = vpop.f32.mrf.mxu0
        %v5810 = vadd.f32 0.0, %v5809
        %v5811 = vpop.f32.mrf.mxu0
        %v5812 = vadd.f32 0.0, %v5811
        %5813 = vmatmul.bf16.gmra.mxu0 %v5367
        %v5814 = vpop.f32.mrf.mxu0
        %v5815 = vadd.f32 0.0, %v5814
        %v5816 = vpop.f32.mrf.mxu0
        %v5817 = vadd.f32 0.0, %v5816
        %5818 = vmatmul.bf16.gmra.mxu0 %v5368
        %v5819 = vpop.f32.mrf.mxu0
        %v5820 = vadd.f32 0.0, %v5819
        %v5821 = vpop.f32.mrf.mxu0
        %v5822 = vadd.f32 0.0, %v5821
        %5823 = vmatmul.bf16.gmra.mxu0 %v5369
        %v5824 = vpop.f32.mrf.mxu0
        %v5825 = vadd.f32 0.0, %v5824
        %v5826 = vpop.f32.mrf.mxu0
        %v5827 = vadd.f32 0.0, %v5826
        %5828 = vdwg.mxu0
        %5829 = vmatpush.bf16.msra.mxu0 %v5529
        %5830 = vmatpush.bf16.msra.mxu0 %v5525
        %5831 = vmatpush.bf16.msra.mxu0 %v5521
        %5832 = vmatpush.bf16.msra.mxu0 %v5517
        %5833 = vmatpush.bf16.msra.mxu0 %v5513
        %5834 = vmatpush.bf16.msra.mxu0 %v5509
        %5835 = vmatpush.bf16.msra.mxu0 %v5505
        %5836 = vmatpush.bf16.msra.mxu0 %v5501
        %5837 = vmatmul.bf16.gmra.mxu0 %v5354
        %v5838 = vpop.f32.mrf.mxu0
        %v5839 = vadd.f32 0.0, %v5838
        %v5840 = vpop.f32.mrf.mxu0
        %v5841 = vadd.f32 0.0, %v5840
        %5842 = vmatmul.bf16.gmra.mxu0 %v5355
        %v5843 = vpop.f32.mrf.mxu0
        %v5844 = vadd.f32 0.0, %v5843
        %v5845 = vpop.f32.mrf.mxu0
        %v5846 = vadd.f32 0.0, %v5845
        %5847 = vmatmul.bf16.gmra.mxu0 %v5356
        %v5848 = vpop.f32.mrf.mxu0
        %v5849 = vadd.f32 0.0, %v5848
        %v5850 = vpop.f32.mrf.mxu0
        %v5851 = vadd.f32 0.0, %v5850
        %5852 = vmatmul.bf16.gmra.mxu0 %v5357
        %v5853 = vpop.f32.mrf.mxu0
        %v5854 = vadd.f32 0.0, %v5853
        %v5855 = vpop.f32.mrf.mxu0
        %v5856 = vadd.f32 0.0, %v5855
        %5857 = vmatmul.bf16.gmra.mxu0 %v5358
        %v5858 = vpop.f32.mrf.mxu0
        %v5859 = vadd.f32 0.0, %v5858
        %v5860 = vpop.f32.mrf.mxu0
        %v5861 = vadd.f32 0.0, %v5860
        %5862 = vmatmul.bf16.gmra.mxu0 %v5359
        %v5863 = vpop.f32.mrf.mxu0
        %v5864 = vadd.f32 0.0, %v5863
        %v5865 = vpop.f32.mrf.mxu0
        %v5866 = vadd.f32 0.0, %v5865
        %5867 = vmatmul.bf16.gmra.mxu0 %v5360
        %v5868 = vpop.f32.mrf.mxu0
        %v5869 = vadd.f32 0.0, %v5868
        %v5870 = vpop.f32.mrf.mxu0
        %v5871 = vadd.f32 0.0, %v5870
        %5872 = vmatmul.bf16.gmra.mxu0 %v5361
        %v5873 = vpop.f32.mrf.mxu0
        %v5874 = vadd.f32 0.0, %v5873
        %v5875 = vpop.f32.mrf.mxu0
        %v5876 = vadd.f32 0.0, %v5875
        %5877 = vmatmul.bf16.gmra.mxu0 %v5362
        %v5878 = vpop.f32.mrf.mxu0
        %v5879 = vadd.f32 0.0, %v5878
        %v5880 = vpop.f32.mrf.mxu0
        %v5881 = vadd.f32 0.0, %v5880
        %5882 = vmatmul.bf16.gmra.mxu0 %v5363
        %v5883 = vpop.f32.mrf.mxu0
        %v5884 = vadd.f32 0.0, %v5883
        %v5885 = vpop.f32.mrf.mxu0
        %v5886 = vadd.f32 0.0, %v5885
        %5887 = vmatmul.bf16.gmra.mxu0 %v5364
        %v5888 = vpop.f32.mrf.mxu0
        %v5889 = vadd.f32 0.0, %v5888
        %v5890 = vpop.f32.mrf.mxu0
        %v5891 = vadd.f32 0.0, %v5890
        %5892 = vmatmul.bf16.gmra.mxu0 %v5365
        %v5893 = vpop.f32.mrf.mxu0
        %v5894 = vadd.f32 0.0, %v5893
        %v5895 = vpop.f32.mrf.mxu0
        %v5896 = vadd.f32 0.0, %v5895
        %5897 = vmatmul.bf16.gmra.mxu0 %v5366
        %v5898 = vpop.f32.mrf.mxu0
        %v5899 = vadd.f32 0.0, %v5898
        %v5900 = vpop.f32.mrf.mxu0
        %v5901 = vadd.f32 0.0, %v5900
        %5902 = vmatmul.bf16.gmra.mxu0 %v5367
        %v5903 = vpop.f32.mrf.mxu0
        %v5904 = vadd.f32 0.0, %v5903
        %v5905 = vpop.f32.mrf.mxu0
        %v5906 = vadd.f32 0.0, %v5905
        %5907 = vmatmul.bf16.gmra.mxu0 %v5368
        %v5908 = vpop.f32.mrf.mxu0
        %v5909 = vadd.f32 0.0, %v5908
        %v5910 = vpop.f32.mrf.mxu0
        %v5911 = vadd.f32 0.0, %v5910
        %5912 = vmatmul.bf16.gmra.mxu0 %v5369
        %v5913 = vpop.f32.mrf.mxu0
        %v5914 = vadd.f32 0.0, %v5913
        %v5915 = vpop.f32.mrf.mxu0
        %v5916 = vadd.f32 0.0, %v5915
        %5917 = vdwg.mxu0
        %v5918 = vld [vmem:[%s8] sm:$0xf]
        %v5920 = vperm.slane %v5918, 0
        %v5921 = vperm.slane %v5918, 1
        %v5922 = vperm.slane %v5918, 2
        %v5923 = vperm.slane %v5918, 3
        %v5928 = vmul.f32 %v5572, %v5920
        %v5929 = vmul.f32 %v5661, %v5921
        %v5930 = vmul.f32 %v5750, %v5922
        %v5931 = vmul.f32 %v5839, %v5923
        %v5932 = vmul.f32 %v5574, %v5920
        %v5933 = vmul.f32 %v5663, %v5921
        %v5934 = vmul.f32 %v5752, %v5922
        %v5935 = vmul.f32 %v5841, %v5923
        %v5936 = vmul.f32 %v5577, %v5920
        %v5937 = vmul.f32 %v5666, %v5921
        %v5938 = vmul.f32 %v5755, %v5922
        %v5939 = vmul.f32 %v5844, %v5923
        %v5940 = vmul.f32 %v5579, %v5920
        %v5941 = vmul.f32 %v5668, %v5921
        %v5942 = vmul.f32 %v5757, %v5922
        %v5943 = vmul.f32 %v5846, %v5923
        %v5944 = vmul.f32 %v5582, %v5920
        %v5945 = vmul.f32 %v5671, %v5921
        %v5946 = vmul.f32 %v5760, %v5922
        %v5947 = vmul.f32 %v5849, %v5923
        %v5948 = vmul.f32 %v5584, %v5920
        %v5949 = vmul.f32 %v5673, %v5921
        %v5950 = vmul.f32 %v5762, %v5922
        %v5951 = vmul.f32 %v5851, %v5923
        %v5952 = vmul.f32 %v5587, %v5920
        %v5953 = vmul.f32 %v5676, %v5921
        %v5954 = vmul.f32 %v5765, %v5922
        %v5955 = vmul.f32 %v5854, %v5923
        %v5956 = vmul.f32 %v5589, %v5920
        %v5957 = vmul.f32 %v5678, %v5921
        %v5958 = vmul.f32 %v5767, %v5922
        %v5959 = vmul.f32 %v5856, %v5923
        %v5960 = vmul.f32 %v5592, %v5920
        %v5961 = vmul.f32 %v5681, %v5921
        %v5962 = vmul.f32 %v5770, %v5922
        %v5963 = vmul.f32 %v5859, %v5923
        %v5964 = vmul.f32 %v5594, %v5920
        %v5965 = vmul.f32 %v5683, %v5921
        %v5966 = vmul.f32 %v5772, %v5922
        %v5967 = vmul.f32 %v5861, %v5923
        %v5968 = vmul.f32 %v5597, %v5920
        %v5969 = vmul.f32 %v5686, %v5921
        %v5970 = vmul.f32 %v5775, %v5922
        %v5971 = vmul.f32 %v5864, %v5923
        %v5972 = vmul.f32 %v5599, %v5920
        %v5973 = vmul.f32 %v5688, %v5921
        %v5974 = vmul.f32 %v5777, %v5922
        %v5975 = vmul.f32 %v5866, %v5923
        %v5976 = vmul.f32 %v5602, %v5920
        %v5977 = vmul.f32 %v5691, %v5921
        %v5978 = vmul.f32 %v5780, %v5922
        %v5979 = vmul.f32 %v5869, %v5923
        %v5980 = vmul.f32 %v5604, %v5920
        %v5981 = vmul.f32 %v5693, %v5921
        %v5982 = vmul.f32 %v5782, %v5922
        %v5983 = vmul.f32 %v5871, %v5923
        %v5984 = vmul.f32 %v5607, %v5920
        %v5985 = vmul.f32 %v5696, %v5921
        %v5986 = vmul.f32 %v5785, %v5922
        %v5987 = vmul.f32 %v5874, %v5923
        %v5988 = vmul.f32 %v5609, %v5920
        %v5989 = vmul.f32 %v5698, %v5921
        %v5990 = vmul.f32 %v5787, %v5922
        %v5991 = vmul.f32 %v5876, %v5923
        %v5992 = vmul.f32 %v5612, %v5920
        %v5993 = vmul.f32 %v5701, %v5921
        %v5994 = vmul.f32 %v5790, %v5922
        %v5995 = vmul.f32 %v5879, %v5923
        %v5996 = vmul.f32 %v5614, %v5920
        %v5997 = vmul.f32 %v5703, %v5921
        %v5998 = vmul.f32 %v5792, %v5922
        %v5999 = vmul.f32 %v5881, %v5923
        %v6000 = vmul.f32 %v5617, %v5920
        %v6001 = vmul.f32 %v5706, %v5921
        %v6002 = vmul.f32 %v5795, %v5922
        %v6003 = vmul.f32 %v5884, %v5923
        %v6004 = vmul.f32 %v5619, %v5920
        %v6005 = vmul.f32 %v5708, %v5921
        %v6006 = vmul.f32 %v5797, %v5922
        %v6007 = vmul.f32 %v5886, %v5923
        %v6008 = vmul.f32 %v5622, %v5920
        %v6009 = vmul.f32 %v5711, %v5921
        %v6010 = vmul.f32 %v5800, %v5922
        %v6011 = vmul.f32 %v5889, %v5923
        %v6012 = vmul.f32 %v5624, %v5920
        %v6013 = vmul.f32 %v5713, %v5921
        %v6014 = vmul.f32 %v5802, %v5922
        %v6015 = vmul.f32 %v5891, %v5923
        %v6016 = vmul.f32 %v5627, %v5920
        %v6017 = vmul.f32 %v5716, %v5921
        %v6018 = vmul.f32 %v5805, %v5922
        %v6019 = vmul.f32 %v5894, %v5923
        %v6020 = vmul.f32 %v5629, %v5920
        %v6021 = vmul.f32 %v5718, %v5921
        %v6022 = vmul.f32 %v5807, %v5922
        %v6023 = vmul.f32 %v5896, %v5923
        %v6024 = vmul.f32 %v5632, %v5920
        %v6025 = vmul.f32 %v5721, %v5921
        %v6026 = vmul.f32 %v5810, %v5922
        %v6027 = vmul.f32 %v5899, %v5923
        %v6028 = vmul.f32 %v5634, %v5920
        %v6029 = vmul.f32 %v5723, %v5921
        %v6030 = vmul.f32 %v5812, %v5922
        %v6031 = vmul.f32 %v5901, %v5923
        %v6032 = vmul.f32 %v5637, %v5920
        %v6033 = vmul.f32 %v5726, %v5921
        %v6034 = vmul.f32 %v5815, %v5922
        %v6035 = vmul.f32 %v5904, %v5923
        %v6036 = vmul.f32 %v5639, %v5920
        %v6037 = vmul.f32 %v5728, %v5921
        %v6038 = vmul.f32 %v5817, %v5922
        %v6039 = vmul.f32 %v5906, %v5923
        %v6040 = vmul.f32 %v5642, %v5920
        %v6041 = vmul.f32 %v5731, %v5921
        %v6042 = vmul.f32 %v5820, %v5922
        %v6043 = vmul.f32 %v5909, %v5923
        %v6044 = vmul.f32 %v5644, %v5920
        %v6045 = vmul.f32 %v5733, %v5921
        %v6046 = vmul.f32 %v5822, %v5922
        %v6047 = vmul.f32 %v5911, %v5923
        %v6048 = vmul.f32 %v5647, %v5920
        %v6049 = vmul.f32 %v5736, %v5921
        %v6050 = vmul.f32 %v5825, %v5922
        %v6051 = vmul.f32 %v5914, %v5923
        %v6052 = vmul.f32 %v5649, %v5920
        %v6053 = vmul.f32 %v5738, %v5921
        %v6054 = vmul.f32 %v5827, %v5922
        %v6055 = vmul.f32 %v5916, %v5923
        %v6056 = vld [vmem:[%s9] sm:$0xf]
        %v6058 = vperm.slane %v6056, 0
        %v6059 = vperm.slane %v6056, 1
        %v6060 = vperm.slane %v6056, 2
        %v6061 = vperm.slane %v6056, 3
        %v6066 = vadd.f32 %v5928, %v6058
        %v6067 = vadd.f32 %v5929, %v6059
        %v6068 = vadd.f32 %v5930, %v6060
        %v6069 = vadd.f32 %v5931, %v6061
        %v6070 = vadd.f32 %v5932, %v6058
        %v6071 = vadd.f32 %v5933, %v6059
        %v6072 = vadd.f32 %v5934, %v6060
        %v6073 = vadd.f32 %v5935, %v6061
        %v6074 = vadd.f32 %v5936, %v6058
        %v6075 = vadd.f32 %v5937, %v6059
        %v6076 = vadd.f32 %v5938, %v6060
        %v6077 = vadd.f32 %v5939, %v6061
        %v6078 = vadd.f32 %v5940, %v6058
        %v6079 = vadd.f32 %v5941, %v6059
        %v6080 = vadd.f32 %v5942, %v6060
        %v6081 = vadd.f32 %v5943, %v6061
        %v6082 = vadd.f32 %v5944, %v6058
        %v6083 = vadd.f32 %v5945, %v6059
        %v6084 = vadd.f32 %v5946, %v6060
        %v6085 = vadd.f32 %v5947, %v6061
        %v6086 = vadd.f32 %v5948, %v6058
        %v6087 = vadd.f32 %v5949, %v6059
        %v6088 = vadd.f32 %v5950, %v6060
        %v6089 = vadd.f32 %v5951, %v6061
        %v6090 = vadd.f32 %v5952, %v6058
        %v6091 = vadd.f32 %v5953, %v6059
        %v6092 = vadd.f32 %v5954, %v6060
        %v6093 = vadd.f32 %v5955, %v6061
        %v6094 = vadd.f32 %v5956, %v6058
        %v6095 = vadd.f32 %v5957, %v6059
        %v6096 = vadd.f32 %v5958, %v6060
        %v6097 = vadd.f32 %v5959, %v6061
        %v6098 = vadd.f32 %v5960, %v6058
        %v6099 = vadd.f32 %v5961, %v6059
        %v6100 = vadd.f32 %v5962, %v6060
        %v6101 = vadd.f32 %v5963, %v6061
        %v6102 = vadd.f32 %v5964, %v6058
        %v6103 = vadd.f32 %v5965, %v6059
        %v6104 = vadd.f32 %v5966, %v6060
        %v6105 = vadd.f32 %v5967, %v6061
        %v6106 = vadd.f32 %v5968, %v6058
        %v6107 = vadd.f32 %v5969, %v6059
        %v6108 = vadd.f32 %v5970, %v6060
        %v6109 = vadd.f32 %v5971, %v6061
        %v6110 = vadd.f32 %v5972, %v6058
        %v6111 = vadd.f32 %v5973, %v6059
        %v6112 = vadd.f32 %v5974, %v6060
        %v6113 = vadd.f32 %v5975, %v6061
        %v6114 = vadd.f32 %v5976, %v6058
        %v6115 = vadd.f32 %v5977, %v6059
        %v6116 = vadd.f32 %v5978, %v6060
        %v6117 = vadd.f32 %v5979, %v6061
        %v6118 = vadd.f32 %v5980, %v6058
        %v6119 = vadd.f32 %v5981, %v6059
        %v6120 = vadd.f32 %v5982, %v6060
        %v6121 = vadd.f32 %v5983, %v6061
        %v6122 = vadd.f32 %v5984, %v6058
        %v6123 = vadd.f32 %v5985, %v6059
        %v6124 = vadd.f32 %v5986, %v6060
        %v6125 = vadd.f32 %v5987, %v6061
        %v6126 = vadd.f32 %v5988, %v6058
        %v6127 = vadd.f32 %v5989, %v6059
        %v6128 = vadd.f32 %v5990, %v6060
        %v6129 = vadd.f32 %v5991, %v6061
        %v6130 = vadd.f32 %v5992, %v6058
        %v6131 = vadd.f32 %v5993, %v6059
        %v6132 = vadd.f32 %v5994, %v6060
        %v6133 = vadd.f32 %v5995, %v6061
        %v6134 = vadd.f32 %v5996, %v6058
        %v6135 = vadd.f32 %v5997, %v6059
        %v6136 = vadd.f32 %v5998, %v6060
        %v6137 = vadd.f32 %v5999, %v6061
        %v6138 = vadd.f32 %v6000, %v6058
        %v6139 = vadd.f32 %v6001, %v6059
        %v6140 = vadd.f32 %v6002, %v6060
        %v6141 = vadd.f32 %v6003, %v6061
        %v6142 = vadd.f32 %v6004, %v6058
        %v6143 = vadd.f32 %v6005, %v6059
        %v6144 = vadd.f32 %v6006, %v6060
        %v6145 = vadd.f32 %v6007, %v6061
        %v6146 = vadd.f32 %v6008, %v6058
        %v6147 = vadd.f32 %v6009, %v6059
        %v6148 = vadd.f32 %v6010, %v6060
        %v6149 = vadd.f32 %v6011, %v6061
        %v6150 = vadd.f32 %v6012, %v6058
        %v6151 = vadd.f32 %v6013, %v6059
        %v6152 = vadd.f32 %v6014, %v6060
        %v6153 = vadd.f32 %v6015, %v6061
        %v6154 = vadd.f32 %v6016, %v6058
        %v6155 = vadd.f32 %v6017, %v6059
        %v6156 = vadd.f32 %v6018, %v6060
        %v6157 = vadd.f32 %v6019, %v6061
        %v6158 = vadd.f32 %v6020, %v6058
        %v6159 = vadd.f32 %v6021, %v6059
        %v6160 = vadd.f32 %v6022, %v6060
        %v6161 = vadd.f32 %v6023, %v6061
        %v6162 = vadd.f32 %v6024, %v6058
        %v6163 = vadd.f32 %v6025, %v6059
        %v6164 = vadd.f32 %v6026, %v6060
        %v6165 = vadd.f32 %v6027, %v6061
        %v6166 = vadd.f32 %v6028, %v6058
        %v6167 = vadd.f32 %v6029, %v6059
        %v6168 = vadd.f32 %v6030, %v6060
        %v6169 = vadd.f32 %v6031, %v6061
        %v6170 = vadd.f32 %v6032, %v6058
        %v6171 = vadd.f32 %v6033, %v6059
        %v6172 = vadd.f32 %v6034, %v6060
        %v6173 = vadd.f32 %v6035, %v6061
        %v6174 = vadd.f32 %v6036, %v6058
        %v6175 = vadd.f32 %v6037, %v6059
        %v6176 = vadd.f32 %v6038, %v6060
        %v6177 = vadd.f32 %v6039, %v6061
        %v6178 = vadd.f32 %v6040, %v6058
        %v6179 = vadd.f32 %v6041, %v6059
        %v6180 = vadd.f32 %v6042, %v6060
        %v6181 = vadd.f32 %v6043, %v6061
        %v6182 = vadd.f32 %v6044, %v6058
        %v6183 = vadd.f32 %v6045, %v6059
        %v6184 = vadd.f32 %v6046, %v6060
        %v6185 = vadd.f32 %v6047, %v6061
        %v6186 = vadd.f32 %v6048, %v6058
        %v6187 = vadd.f32 %v6049, %v6059
        %v6188 = vadd.f32 %v6050, %v6060
        %v6189 = vadd.f32 %v6051, %v6061
        %v6190 = vadd.f32 %v6052, %v6058
        %v6191 = vadd.f32 %v6053, %v6059
        %v6192 = vadd.f32 %v6054, %v6060
        %v6193 = vadd.f32 %v6055, %v6061
        %v6194 = vld [vmem:[%s415] sm:$0xff]
        %v6195 = vld [vmem:[%s415 + $0x8] sm:$0xff]
        %v6196 = vld [vmem:[%s415 + $0x10] sm:$0xff]
        %v6197 = vld [vmem:[%s415 + $0x18] sm:$0xff]
        %v6198 = vld [vmem:[%s415 + $0x20] sm:$0xff]
        %v6199 = vld [vmem:[%s415 + $0x28] sm:$0xff]
        %v6200 = vld [vmem:[%s415 + $0x30] sm:$0xff]
        %v6201 = vld [vmem:[%s415 + $0x38] sm:$0xff]
        %v6202 = vld [vmem:[%s415 + $0x40] sm:$0xff]
        %v6203 = vld [vmem:[%s415 + $0x48] sm:$0xff]
        %v6204 = vld [vmem:[%s415 + $0x50] sm:$0xff]
        %v6205 = vld [vmem:[%s415 + $0x58] sm:$0xff]
        %v6206 = vld [vmem:[%s415 + $0x60] sm:$0xff]
        %v6207 = vld [vmem:[%s415 + $0x68] sm:$0xff]
        %v6208 = vld [vmem:[%s415 + $0x70] sm:$0xff]
        %v6209 = vld [vmem:[%s415 + $0x78] sm:$0xff]
        %v6210 = vld [vmem:[%s415 + $0x80] sm:$0xff]
        %v6211 = vld [vmem:[%s415 + $0x88] sm:$0xff]
        %v6212 = vld [vmem:[%s415 + $0x90] sm:$0xff]
        %v6213 = vld [vmem:[%s415 + $0x98] sm:$0xff]
        %v6214 = vld [vmem:[%s415 + $0xa0] sm:$0xff]
        %v6215 = vld [vmem:[%s415 + $0xa8] sm:$0xff]
        %v6216 = vld [vmem:[%s415 + $0xb0] sm:$0xff]
        %v6217 = vld [vmem:[%s415 + $0xb8] sm:$0xff]
        %v6218 = vld [vmem:[%s415 + $0xc0] sm:$0xff]
        %v6219 = vld [vmem:[%s415 + $0xc8] sm:$0xff]
        %v6220 = vld [vmem:[%s415 + $0xd0] sm:$0xff]
        %v6221 = vld [vmem:[%s415 + $0xd8] sm:$0xff]
        %v6222 = vld [vmem:[%s415 + $0xe0] sm:$0xff]
        %v6223 = vld [vmem:[%s415 + $0xe8] sm:$0xff]
        %v6224 = vld [vmem:[%s415 + $0xf0] sm:$0xff]
        %v6225 = vld [vmem:[%s415 + $0xf8] sm:$0xff]
        %v6226 = vld [vmem:[%s415 + $0x100] sm:$0xff]
        %v6227 = vld [vmem:[%s415 + $0x108] sm:$0xff]
        %v6228 = vld [vmem:[%s415 + $0x110] sm:$0xff]
        %v6229 = vld [vmem:[%s415 + $0x118] sm:$0xff]
        %v6230 = vld [vmem:[%s415 + $0x120] sm:$0xff]
        %v6231 = vld [vmem:[%s415 + $0x128] sm:$0xff]
        %v6232 = vld [vmem:[%s415 + $0x130] sm:$0xff]
        %v6233 = vld [vmem:[%s415 + $0x138] sm:$0xff]
        %v6234 = vld [vmem:[%s415 + $0x140] sm:$0xff]
        %v6235 = vld [vmem:[%s415 + $0x148] sm:$0xff]
        %v6236 = vld [vmem:[%s415 + $0x150] sm:$0xff]
        %v6237 = vld [vmem:[%s415 + $0x158] sm:$0xff]
        %v6238 = vld [vmem:[%s415 + $0x160] sm:$0xff]
        %v6239 = vld [vmem:[%s415 + $0x168] sm:$0xff]
        %v6240 = vld [vmem:[%s415 + $0x170] sm:$0xff]
        %v6241 = vld [vmem:[%s415 + $0x178] sm:$0xff]
        %v6242 = vld [vmem:[%s415 + $0x180] sm:$0xff]
        %v6243 = vld [vmem:[%s415 + $0x188] sm:$0xff]
        %v6244 = vld [vmem:[%s415 + $0x190] sm:$0xff]
        %v6245 = vld [vmem:[%s415 + $0x198] sm:$0xff]
        %v6246 = vld [vmem:[%s415 + $0x1a0] sm:$0xff]
        %v6247 = vld [vmem:[%s415 + $0x1a8] sm:$0xff]
        %v6248 = vld [vmem:[%s415 + $0x1b0] sm:$0xff]
        %v6249 = vld [vmem:[%s415 + $0x1b8] sm:$0xff]
        %v6250 = vld [vmem:[%s415 + $0x1c0] sm:$0xff]
        %v6251 = vld [vmem:[%s415 + $0x1c8] sm:$0xff]
        %v6252 = vld [vmem:[%s415 + $0x1d0] sm:$0xff]
        %v6253 = vld [vmem:[%s415 + $0x1d8] sm:$0xff]
        %v6254 = vld [vmem:[%s415 + $0x1e0] sm:$0xff]
        %v6255 = vld [vmem:[%s415 + $0x1e8] sm:$0xff]
        %v6256 = vld [vmem:[%s415 + $0x1f0] sm:$0xff]
        %v6257 = vld [vmem:[%s415 + $0x1f8] sm:$0xff]
        %v6258 = vunpack.c.l.bf16 %v6194
        %v6259 = vunpack.c.h.bf16 %v6194
        %v6260 = vunpack.c.l.bf16 %v6195
        %v6261 = vunpack.c.h.bf16 %v6195
        %v6262 = vunpack.c.l.bf16 %v6196
        %v6263 = vunpack.c.h.bf16 %v6196
        %v6264 = vunpack.c.l.bf16 %v6197
        %v6265 = vunpack.c.h.bf16 %v6197
        %v6266 = vunpack.c.l.bf16 %v6198
        %v6267 = vunpack.c.h.bf16 %v6198
        %v6268 = vunpack.c.l.bf16 %v6199
        %v6269 = vunpack.c.h.bf16 %v6199
        %v6270 = vunpack.c.l.bf16 %v6200
        %v6271 = vunpack.c.h.bf16 %v6200
        %v6272 = vunpack.c.l.bf16 %v6201
        %v6273 = vunpack.c.h.bf16 %v6201
        %v6274 = vunpack.c.l.bf16 %v6202
        %v6275 = vunpack.c.h.bf16 %v6202
        %v6276 = vunpack.c.l.bf16 %v6203
        %v6277 = vunpack.c.h.bf16 %v6203
        %v6278 = vunpack.c.l.bf16 %v6204
        %v6279 = vunpack.c.h.bf16 %v6204
        %v6280 = vunpack.c.l.bf16 %v6205
        %v6281 = vunpack.c.h.bf16 %v6205
        %v6282 = vunpack.c.l.bf16 %v6206
        %v6283 = vunpack.c.h.bf16 %v6206
        %v6284 = vunpack.c.l.bf16 %v6207
        %v6285 = vunpack.c.h.bf16 %v6207
        %v6286 = vunpack.c.l.bf16 %v6208
        %v6287 = vunpack.c.h.bf16 %v6208
        %v6288 = vunpack.c.l.bf16 %v6209
        %v6289 = vunpack.c.h.bf16 %v6209
        %v6290 = vunpack.c.l.bf16 %v6210
        %v6291 = vunpack.c.h.bf16 %v6210
        %v6292 = vunpack.c.l.bf16 %v6211
        %v6293 = vunpack.c.h.bf16 %v6211
        %v6294 = vunpack.c.l.bf16 %v6212
        %v6295 = vunpack.c.h.bf16 %v6212
        %v6296 = vunpack.c.l.bf16 %v6213
        %v6297 = vunpack.c.h.bf16 %v6213
        %v6298 = vunpack.c.l.bf16 %v6214
        %v6299 = vunpack.c.h.bf16 %v6214
        %v6300 = vunpack.c.l.bf16 %v6215
        %v6301 = vunpack.c.h.bf16 %v6215
        %v6302 = vunpack.c.l.bf16 %v6216
        %v6303 = vunpack.c.h.bf16 %v6216
        %v6304 = vunpack.c.l.bf16 %v6217
        %v6305 = vunpack.c.h.bf16 %v6217
        %v6306 = vunpack.c.l.bf16 %v6218
        %v6307 = vunpack.c.h.bf16 %v6218
        %v6308 = vunpack.c.l.bf16 %v6219
        %v6309 = vunpack.c.h.bf16 %v6219
        %v6310 = vunpack.c.l.bf16 %v6220
        %v6311 = vunpack.c.h.bf16 %v6220
        %v6312 = vunpack.c.l.bf16 %v6221
        %v6313 = vunpack.c.h.bf16 %v6221
        %v6314 = vunpack.c.l.bf16 %v6222
        %v6315 = vunpack.c.h.bf16 %v6222
        %v6316 = vunpack.c.l.bf16 %v6223
        %v6317 = vunpack.c.h.bf16 %v6223
        %v6318 = vunpack.c.l.bf16 %v6224
        %v6319 = vunpack.c.h.bf16 %v6224
        %v6320 = vunpack.c.l.bf16 %v6225
        %v6321 = vunpack.c.h.bf16 %v6225
        %v6322 = vunpack.c.l.bf16 %v6226
        %v6323 = vunpack.c.h.bf16 %v6226
        %v6324 = vunpack.c.l.bf16 %v6227
        %v6325 = vunpack.c.h.bf16 %v6227
        %v6326 = vunpack.c.l.bf16 %v6228
        %v6327 = vunpack.c.h.bf16 %v6228
        %v6328 = vunpack.c.l.bf16 %v6229
        %v6329 = vunpack.c.h.bf16 %v6229
        %v6330 = vunpack.c.l.bf16 %v6230
        %v6331 = vunpack.c.h.bf16 %v6230
        %v6332 = vunpack.c.l.bf16 %v6231
        %v6333 = vunpack.c.h.bf16 %v6231
        %v6334 = vunpack.c.l.bf16 %v6232
        %v6335 = vunpack.c.h.bf16 %v6232
        %v6336 = vunpack.c.l.bf16 %v6233
        %v6337 = vunpack.c.h.bf16 %v6233
        %v6338 = vunpack.c.l.bf16 %v6234
        %v6339 = vunpack.c.h.bf16 %v6234
        %v6340 = vunpack.c.l.bf16 %v6235
        %v6341 = vunpack.c.h.bf16 %v6235
        %v6342 = vunpack.c.l.bf16 %v6236
        %v6343 = vunpack.c.h.bf16 %v6236
        %v6344 = vunpack.c.l.bf16 %v6237
        %v6345 = vunpack.c.h.bf16 %v6237
        %v6346 = vunpack.c.l.bf16 %v6238
        %v6347 = vunpack.c.h.bf16 %v6238
        %v6348 = vunpack.c.l.bf16 %v6239
        %v6349 = vunpack.c.h.bf16 %v6239
        %v6350 = vunpack.c.l.bf16 %v6240
        %v6351 = vunpack.c.h.bf16 %v6240
        %v6352 = vunpack.c.l.bf16 %v6241
        %v6353 = vunpack.c.h.bf16 %v6241
        %v6354 = vunpack.c.l.bf16 %v6242
        %v6355 = vunpack.c.h.bf16 %v6242
        %v6356 = vunpack.c.l.bf16 %v6243
        %v6357 = vunpack.c.h.bf16 %v6243
        %v6358 = vunpack.c.l.bf16 %v6244
        %v6359 = vunpack.c.h.bf16 %v6244
        %v6360 = vunpack.c.l.bf16 %v6245
        %v6361 = vunpack.c.h.bf16 %v6245
        %v6362 = vunpack.c.l.bf16 %v6246
        %v6363 = vunpack.c.h.bf16 %v6246
        %v6364 = vunpack.c.l.bf16 %v6247
        %v6365 = vunpack.c.h.bf16 %v6247
        %v6366 = vunpack.c.l.bf16 %v6248
        %v6367 = vunpack.c.h.bf16 %v6248
        %v6368 = vunpack.c.l.bf16 %v6249
        %v6369 = vunpack.c.h.bf16 %v6249
        %v6370 = vunpack.c.l.bf16 %v6250
        %v6371 = vunpack.c.h.bf16 %v6250
        %v6372 = vunpack.c.l.bf16 %v6251
        %v6373 = vunpack.c.h.bf16 %v6251
        %v6374 = vunpack.c.l.bf16 %v6252
        %v6375 = vunpack.c.h.bf16 %v6252
        %v6376 = vunpack.c.l.bf16 %v6253
        %v6377 = vunpack.c.h.bf16 %v6253
        %v6378 = vunpack.c.l.bf16 %v6254
        %v6379 = vunpack.c.h.bf16 %v6254
        %v6380 = vunpack.c.l.bf16 %v6255
        %v6381 = vunpack.c.h.bf16 %v6255
        %v6382 = vunpack.c.l.bf16 %v6256
        %v6383 = vunpack.c.h.bf16 %v6256
        %v6384 = vunpack.c.l.bf16 %v6257
        %v6385 = vunpack.c.h.bf16 %v6257
        %v6386 = vadd.f32 %v6066, %v6258
        %v6387 = vadd.f32 %v6067, %v6259
        %v6388 = vadd.f32 %v6068, %v6260
        %v6389 = vadd.f32 %v6069, %v6261
        %v6390 = vadd.f32 %v6070, %v6262
        %v6391 = vadd.f32 %v6071, %v6263
        %v6392 = vadd.f32 %v6072, %v6264
        %v6393 = vadd.f32 %v6073, %v6265
        %v6394 = vadd.f32 %v6074, %v6266
        %v6395 = vadd.f32 %v6075, %v6267
        %v6396 = vadd.f32 %v6076, %v6268
        %v6397 = vadd.f32 %v6077, %v6269
        %v6398 = vadd.f32 %v6078, %v6270
        %v6399 = vadd.f32 %v6079, %v6271
        %v6400 = vadd.f32 %v6080, %v6272
        %v6401 = vadd.f32 %v6081, %v6273
        %v6402 = vadd.f32 %v6082, %v6274
        %v6403 = vadd.f32 %v6083, %v6275
        %v6404 = vadd.f32 %v6084, %v6276
        %v6405 = vadd.f32 %v6085, %v6277
        %v6406 = vadd.f32 %v6086, %v6278
        %v6407 = vadd.f32 %v6087, %v6279
        %v6408 = vadd.f32 %v6088, %v6280
        %v6409 = vadd.f32 %v6089, %v6281
        %v6410 = vadd.f32 %v6090, %v6282
        %v6411 = vadd.f32 %v6091, %v6283
        %v6412 = vadd.f32 %v6092, %v6284
        %v6413 = vadd.f32 %v6093, %v6285
        %v6414 = vadd.f32 %v6094, %v6286
        %v6415 = vadd.f32 %v6095, %v6287
        %v6416 = vadd.f32 %v6096, %v6288
        %v6417 = vadd.f32 %v6097, %v6289
        %v6418 = vadd.f32 %v6098, %v6290
        %v6419 = vadd.f32 %v6099, %v6291
        %v6420 = vadd.f32 %v6100, %v6292
        %v6421 = vadd.f32 %v6101, %v6293
        %v6422 = vadd.f32 %v6102, %v6294
        %v6423 = vadd.f32 %v6103, %v6295
        %v6424 = vadd.f32 %v6104, %v6296
        %v6425 = vadd.f32 %v6105, %v6297
        %v6426 = vadd.f32 %v6106, %v6298
        %v6427 = vadd.f32 %v6107, %v6299
        %v6428 = vadd.f32 %v6108, %v6300
        %v6429 = vadd.f32 %v6109, %v6301
        %v6430 = vadd.f32 %v6110, %v6302
        %v6431 = vadd.f32 %v6111, %v6303
        %v6432 = vadd.f32 %v6112, %v6304
        %v6433 = vadd.f32 %v6113, %v6305
        %v6434 = vadd.f32 %v6114, %v6306
        %v6435 = vadd.f32 %v6115, %v6307
        %v6436 = vadd.f32 %v6116, %v6308
        %v6437 = vadd.f32 %v6117, %v6309
        %v6438 = vadd.f32 %v6118, %v6310
        %v6439 = vadd.f32 %v6119, %v6311
        %v6440 = vadd.f32 %v6120, %v6312
        %v6441 = vadd.f32 %v6121, %v6313
        %v6442 = vadd.f32 %v6122, %v6314
        %v6443 = vadd.f32 %v6123, %v6315
        %v6444 = vadd.f32 %v6124, %v6316
        %v6445 = vadd.f32 %v6125, %v6317
        %v6446 = vadd.f32 %v6126, %v6318
        %v6447 = vadd.f32 %v6127, %v6319
        %v6448 = vadd.f32 %v6128, %v6320
        %v6449 = vadd.f32 %v6129, %v6321
        %v6450 = vadd.f32 %v6130, %v6322
        %v6451 = vadd.f32 %v6131, %v6323
        %v6452 = vadd.f32 %v6132, %v6324
        %v6453 = vadd.f32 %v6133, %v6325
        %v6454 = vadd.f32 %v6134, %v6326
        %v6455 = vadd.f32 %v6135, %v6327
        %v6456 = vadd.f32 %v6136, %v6328
        %v6457 = vadd.f32 %v6137, %v6329
        %v6458 = vadd.f32 %v6138, %v6330
        %v6459 = vadd.f32 %v6139, %v6331
        %v6460 = vadd.f32 %v6140, %v6332
        %v6461 = vadd.f32 %v6141, %v6333
        %v6462 = vadd.f32 %v6142, %v6334
        %v6463 = vadd.f32 %v6143, %v6335
        %v6464 = vadd.f32 %v6144, %v6336
        %v6465 = vadd.f32 %v6145, %v6337
        %v6466 = vadd.f32 %v6146, %v6338
        %v6467 = vadd.f32 %v6147, %v6339
        %v6468 = vadd.f32 %v6148, %v6340
        %v6469 = vadd.f32 %v6149, %v6341
        %v6470 = vadd.f32 %v6150, %v6342
        %v6471 = vadd.f32 %v6151, %v6343
        %v6472 = vadd.f32 %v6152, %v6344
        %v6473 = vadd.f32 %v6153, %v6345
        %v6474 = vadd.f32 %v6154, %v6346
        %v6475 = vadd.f32 %v6155, %v6347
        %v6476 = vadd.f32 %v6156, %v6348
        %v6477 = vadd.f32 %v6157, %v6349
        %v6478 = vadd.f32 %v6158, %v6350
        %v6479 = vadd.f32 %v6159, %v6351
        %v6480 = vadd.f32 %v6160, %v6352
        %v6481 = vadd.f32 %v6161, %v6353
        %v6482 = vadd.f32 %v6162, %v6354
        %v6483 = vadd.f32 %v6163, %v6355
        %v6484 = vadd.f32 %v6164, %v6356
        %v6485 = vadd.f32 %v6165, %v6357
        %v6486 = vadd.f32 %v6166, %v6358
        %v6487 = vadd.f32 %v6167, %v6359
        %v6488 = vadd.f32 %v6168, %v6360
        %v6489 = vadd.f32 %v6169, %v6361
        %v6490 = vadd.f32 %v6170, %v6362
        %v6491 = vadd.f32 %v6171, %v6363
        %v6492 = vadd.f32 %v6172, %v6364
        %v6493 = vadd.f32 %v6173, %v6365
        %v6494 = vadd.f32 %v6174, %v6366
        %v6495 = vadd.f32 %v6175, %v6367
        %v6496 = vadd.f32 %v6176, %v6368
        %v6497 = vadd.f32 %v6177, %v6369
        %v6498 = vadd.f32 %v6178, %v6370
        %v6499 = vadd.f32 %v6179, %v6371
        %v6500 = vadd.f32 %v6180, %v6372
        %v6501 = vadd.f32 %v6181, %v6373
        %v6502 = vadd.f32 %v6182, %v6374
        %v6503 = vadd.f32 %v6183, %v6375
        %v6504 = vadd.f32 %v6184, %v6376
        %v6505 = vadd.f32 %v6185, %v6377
        %v6506 = vadd.f32 %v6186, %v6378
        %v6507 = vadd.f32 %v6187, %v6379
        %v6508 = vadd.f32 %v6188, %v6380
        %v6509 = vadd.f32 %v6189, %v6381
        %v6510 = vadd.f32 %v6190, %v6382
        %v6511 = vadd.f32 %v6191, %v6383
        %v6512 = vadd.f32 %v6192, %v6384
        %v6513 = vadd.f32 %v6193, %v6385
        %v6514 = vmax.f32 %v6386, 0.0
        %v6515 = vmax.f32 %v6387, 0.0
        %v6516 = vmax.f32 %v6388, 0.0
        %v6517 = vmax.f32 %v6389, 0.0
        %v6518 = vmax.f32 %v6390, 0.0
        %v6519 = vmax.f32 %v6391, 0.0
        %v6520 = vmax.f32 %v6392, 0.0
        %v6521 = vmax.f32 %v6393, 0.0
        %v6522 = vmax.f32 %v6394, 0.0
        %v6523 = vmax.f32 %v6395, 0.0
        %v6524 = vmax.f32 %v6396, 0.0
        %v6525 = vmax.f32 %v6397, 0.0
        %v6526 = vmax.f32 %v6398, 0.0
        %v6527 = vmax.f32 %v6399, 0.0
        %v6528 = vmax.f32 %v6400, 0.0
        %v6529 = vmax.f32 %v6401, 0.0
        %v6530 = vmax.f32 %v6402, 0.0
        %v6531 = vmax.f32 %v6403, 0.0
        %v6532 = vmax.f32 %v6404, 0.0
        %v6533 = vmax.f32 %v6405, 0.0
        %v6534 = vmax.f32 %v6406, 0.0
        %v6535 = vmax.f32 %v6407, 0.0
        %v6536 = vmax.f32 %v6408, 0.0
        %v6537 = vmax.f32 %v6409, 0.0
        %v6538 = vmax.f32 %v6410, 0.0
        %v6539 = vmax.f32 %v6411, 0.0
        %v6540 = vmax.f32 %v6412, 0.0
        %v6541 = vmax.f32 %v6413, 0.0
        %v6542 = vmax.f32 %v6414, 0.0
        %v6543 = vmax.f32 %v6415, 0.0
        %v6544 = vmax.f32 %v6416, 0.0
        %v6545 = vmax.f32 %v6417, 0.0
        %v6546 = vmax.f32 %v6418, 0.0
        %v6547 = vmax.f32 %v6419, 0.0
        %v6548 = vmax.f32 %v6420, 0.0
        %v6549 = vmax.f32 %v6421, 0.0
        %v6550 = vmax.f32 %v6422, 0.0
        %v6551 = vmax.f32 %v6423, 0.0
        %v6552 = vmax.f32 %v6424, 0.0
        %v6553 = vmax.f32 %v6425, 0.0
        %v6554 = vmax.f32 %v6426, 0.0
        %v6555 = vmax.f32 %v6427, 0.0
        %v6556 = vmax.f32 %v6428, 0.0
        %v6557 = vmax.f32 %v6429, 0.0
        %v6558 = vmax.f32 %v6430, 0.0
        %v6559 = vmax.f32 %v6431, 0.0
        %v6560 = vmax.f32 %v6432, 0.0
        %v6561 = vmax.f32 %v6433, 0.0
        %v6562 = vmax.f32 %v6434, 0.0
        %v6563 = vmax.f32 %v6435, 0.0
        %v6564 = vmax.f32 %v6436, 0.0
        %v6565 = vmax.f32 %v6437, 0.0
        %v6566 = vmax.f32 %v6438, 0.0
        %v6567 = vmax.f32 %v6439, 0.0
        %v6568 = vmax.f32 %v6440, 0.0
        %v6569 = vmax.f32 %v6441, 0.0
        %v6570 = vmax.f32 %v6442, 0.0
        %v6571 = vmax.f32 %v6443, 0.0
        %v6572 = vmax.f32 %v6444, 0.0
        %v6573 = vmax.f32 %v6445, 0.0
        %v6574 = vmax.f32 %v6446, 0.0
        %v6575 = vmax.f32 %v6447, 0.0
        %v6576 = vmax.f32 %v6448, 0.0
        %v6577 = vmax.f32 %v6449, 0.0
        %v6578 = vmax.f32 %v6450, 0.0
        %v6579 = vmax.f32 %v6451, 0.0
        %v6580 = vmax.f32 %v6452, 0.0
        %v6581 = vmax.f32 %v6453, 0.0
        %v6582 = vmax.f32 %v6454, 0.0
        %v6583 = vmax.f32 %v6455, 0.0
        %v6584 = vmax.f32 %v6456, 0.0
        %v6585 = vmax.f32 %v6457, 0.0
        %v6586 = vmax.f32 %v6458, 0.0
        %v6587 = vmax.f32 %v6459, 0.0
        %v6588 = vmax.f32 %v6460, 0.0
        %v6589 = vmax.f32 %v6461, 0.0
        %v6590 = vmax.f32 %v6462, 0.0
        %v6591 = vmax.f32 %v6463, 0.0
        %v6592 = vmax.f32 %v6464, 0.0
        %v6593 = vmax.f32 %v6465, 0.0
        %v6594 = vmax.f32 %v6466, 0.0
        %v6595 = vmax.f32 %v6467, 0.0
        %v6596 = vmax.f32 %v6468, 0.0
        %v6597 = vmax.f32 %v6469, 0.0
        %v6598 = vmax.f32 %v6470, 0.0
        %v6599 = vmax.f32 %v6471, 0.0
        %v6600 = vmax.f32 %v6472, 0.0
        %v6601 = vmax.f32 %v6473, 0.0
        %v6602 = vmax.f32 %v6474, 0.0
        %v6603 = vmax.f32 %v6475, 0.0
        %v6604 = vmax.f32 %v6476, 0.0
        %v6605 = vmax.f32 %v6477, 0.0
        %v6606 = vmax.f32 %v6478, 0.0
        %v6607 = vmax.f32 %v6479, 0.0
        %v6608 = vmax.f32 %v6480, 0.0
        %v6609 = vmax.f32 %v6481, 0.0
        %v6610 = vmax.f32 %v6482, 0.0
        %v6611 = vmax.f32 %v6483, 0.0
        %v6612 = vmax.f32 %v6484, 0.0
        %v6613 = vmax.f32 %v6485, 0.0
        %v6614 = vmax.f32 %v6486, 0.0
        %v6615 = vmax.f32 %v6487, 0.0
        %v6616 = vmax.f32 %v6488, 0.0
        %v6617 = vmax.f32 %v6489, 0.0
        %v6618 = vmax.f32 %v6490, 0.0
        %v6619 = vmax.f32 %v6491, 0.0
        %v6620 = vmax.f32 %v6492, 0.0
        %v6621 = vmax.f32 %v6493, 0.0
        %v6622 = vmax.f32 %v6494, 0.0
        %v6623 = vmax.f32 %v6495, 0.0
        %v6624 = vmax.f32 %v6496, 0.0
        %v6625 = vmax.f32 %v6497, 0.0
        %v6626 = vmax.f32 %v6498, 0.0
        %v6627 = vmax.f32 %v6499, 0.0
        %v6628 = vmax.f32 %v6500, 0.0
        %v6629 = vmax.f32 %v6501, 0.0
        %v6630 = vmax.f32 %v6502, 0.0
        %v6631 = vmax.f32 %v6503, 0.0
        %v6632 = vmax.f32 %v6504, 0.0
        %v6633 = vmax.f32 %v6505, 0.0
        %v6634 = vmax.f32 %v6506, 0.0
        %v6635 = vmax.f32 %v6507, 0.0
        %v6636 = vmax.f32 %v6508, 0.0
        %v6637 = vmax.f32 %v6509, 0.0
        %v6638 = vmax.f32 %v6510, 0.0
        %v6639 = vmax.f32 %v6511, 0.0
        %v6640 = vmax.f32 %v6512, 0.0
        %v6641 = vmax.f32 %v6513, 0.0
        %v6642 = vpack.c.bf16 %v6515, %v6514
        %v6643 = vpack.c.bf16 %v6517, %v6516
        %v6644 = vpack.c.bf16 %v6519, %v6518
        %v6645 = vpack.c.bf16 %v6521, %v6520
        %v6646 = vpack.c.bf16 %v6523, %v6522
        %v6647 = vpack.c.bf16 %v6525, %v6524
        %v6648 = vpack.c.bf16 %v6527, %v6526
        %v6649 = vpack.c.bf16 %v6529, %v6528
        %v6650 = vpack.c.bf16 %v6531, %v6530
        %v6651 = vpack.c.bf16 %v6533, %v6532
        %v6652 = vpack.c.bf16 %v6535, %v6534
        %v6653 = vpack.c.bf16 %v6537, %v6536
        %v6654 = vpack.c.bf16 %v6539, %v6538
        %v6655 = vpack.c.bf16 %v6541, %v6540
        %v6656 = vpack.c.bf16 %v6543, %v6542
        %v6657 = vpack.c.bf16 %v6545, %v6544
        %v6658 = vpack.c.bf16 %v6547, %v6546
        %v6659 = vpack.c.bf16 %v6549, %v6548
        %v6660 = vpack.c.bf16 %v6551, %v6550
        %v6661 = vpack.c.bf16 %v6553, %v6552
        %v6662 = vpack.c.bf16 %v6555, %v6554
        %v6663 = vpack.c.bf16 %v6557, %v6556
        %v6664 = vpack.c.bf16 %v6559, %v6558
        %v6665 = vpack.c.bf16 %v6561, %v6560
        %v6666 = vpack.c.bf16 %v6563, %v6562
        %v6667 = vpack.c.bf16 %v6565, %v6564
        %v6668 = vpack.c.bf16 %v6567, %v6566
        %v6669 = vpack.c.bf16 %v6569, %v6568
        %v6670 = vpack.c.bf16 %v6571, %v6570
        %v6671 = vpack.c.bf16 %v6573, %v6572
        %v6672 = vpack.c.bf16 %v6575, %v6574
        %v6673 = vpack.c.bf16 %v6577, %v6576
        %v6674 = vpack.c.bf16 %v6579, %v6578
        %v6675 = vpack.c.bf16 %v6581, %v6580
        %v6676 = vpack.c.bf16 %v6583, %v6582
        %v6677 = vpack.c.bf16 %v6585, %v6584
        %v6678 = vpack.c.bf16 %v6587, %v6586
        %v6679 = vpack.c.bf16 %v6589, %v6588
        %v6680 = vpack.c.bf16 %v6591, %v6590
        %v6681 = vpack.c.bf16 %v6593, %v6592
        %v6682 = vpack.c.bf16 %v6595, %v6594
        %v6683 = vpack.c.bf16 %v6597, %v6596
        %v6684 = vpack.c.bf16 %v6599, %v6598
        %v6685 = vpack.c.bf16 %v6601, %v6600
        %v6686 = vpack.c.bf16 %v6603, %v6602
        %v6687 = vpack.c.bf16 %v6605, %v6604
        %v6688 = vpack.c.bf16 %v6607, %v6606
        %v6689 = vpack.c.bf16 %v6609, %v6608
        %v6690 = vpack.c.bf16 %v6611, %v6610
        %v6691 = vpack.c.bf16 %v6613, %v6612
        %v6692 = vpack.c.bf16 %v6615, %v6614
        %v6693 = vpack.c.bf16 %v6617, %v6616
        %v6694 = vpack.c.bf16 %v6619, %v6618
        %v6695 = vpack.c.bf16 %v6621, %v6620
        %v6696 = vpack.c.bf16 %v6623, %v6622
        %v6697 = vpack.c.bf16 %v6625, %v6624
        %v6698 = vpack.c.bf16 %v6627, %v6626
        %v6699 = vpack.c.bf16 %v6629, %v6628
        %v6700 = vpack.c.bf16 %v6631, %v6630
        %v6701 = vpack.c.bf16 %v6633, %v6632
        %v6702 = vpack.c.bf16 %v6635, %v6634
        %v6703 = vpack.c.bf16 %v6637, %v6636
        %v6704 = vpack.c.bf16 %v6639, %v6638
        %v6705 = vpack.c.bf16 %v6641, %v6640
        %6706 = vst [vmem:[%s487] sm:$0xff] %v6642
        %6707 = vst [vmem:[%s487 + $0x8] sm:$0xff] %v6643
        %6708 = vst [vmem:[%s487 + $0x10] sm:$0xff] %v6644
        %6709 = vst [vmem:[%s487 + $0x18] sm:$0xff] %v6645
        %6710 = vst [vmem:[%s487 + $0x20] sm:$0xff] %v6646
        %6711 = vst [vmem:[%s487 + $0x28] sm:$0xff] %v6647
        %6712 = vst [vmem:[%s487 + $0x30] sm:$0xff] %v6648
        %6713 = vst [vmem:[%s487 + $0x38] sm:$0xff] %v6649
        %6714 = vst [vmem:[%s487 + $0x40] sm:$0xff] %v6650
        %6715 = vst [vmem:[%s487 + $0x48] sm:$0xff] %v6651
        %6716 = vst [vmem:[%s487 + $0x50] sm:$0xff] %v6652
        %6717 = vst [vmem:[%s487 + $0x58] sm:$0xff] %v6653
        %6718 = vst [vmem:[%s487 + $0x60] sm:$0xff] %v6654
        %6719 = vst [vmem:[%s487 + $0x68] sm:$0xff] %v6655
        %6720 = vst [vmem:[%s487 + $0x70] sm:$0xff] %v6656
        %6721 = vst [vmem:[%s487 + $0x78] sm:$0xff] %v6657
        %6722 = vst [vmem:[%s487 + $0x80] sm:$0xff] %v6658
        %6723 = vst [vmem:[%s487 + $0x88] sm:$0xff] %v6659
        %6724 = vst [vmem:[%s487 + $0x90] sm:$0xff] %v6660
        %6725 = vst [vmem:[%s487 + $0x98] sm:$0xff] %v6661
        %6726 = vst [vmem:[%s487 + $0xa0] sm:$0xff] %v6662
        %6727 = vst [vmem:[%s487 + $0xa8] sm:$0xff] %v6663
        %6728 = vst [vmem:[%s487 + $0xb0] sm:$0xff] %v6664
        %6729 = vst [vmem:[%s487 + $0xb8] sm:$0xff] %v6665
        %6730 = vst [vmem:[%s487 + $0xc0] sm:$0xff] %v6666
        %6731 = vst [vmem:[%s487 + $0xc8] sm:$0xff] %v6667
        %6732 = vst [vmem:[%s487 + $0xd0] sm:$0xff] %v6668
        %6733 = vst [vmem:[%s487 + $0xd8] sm:$0xff] %v6669
        %6734 = vst [vmem:[%s487 + $0xe0] sm:$0xff] %v6670
        %6735 = vst [vmem:[%s487 + $0xe8] sm:$0xff] %v6671
        %6736 = vst [vmem:[%s487 + $0xf0] sm:$0xff] %v6672
        %6737 = vst [vmem:[%s487 + $0xf8] sm:$0xff] %v6673
        %6738 = vst [vmem:[%s487 + $0x100] sm:$0xff] %v6674
        %6739 = vst [vmem:[%s487 + $0x108] sm:$0xff] %v6675
        %6740 = vst [vmem:[%s487 + $0x110] sm:$0xff] %v6676
        %6741 = vst [vmem:[%s487 + $0x118] sm:$0xff] %v6677
        %6742 = vst [vmem:[%s487 + $0x120] sm:$0xff] %v6678
        %6743 = vst [vmem:[%s487 + $0x128] sm:$0xff] %v6679
        %6744 = vst [vmem:[%s487 + $0x130] sm:$0xff] %v6680
        %6745 = vst [vmem:[%s487 + $0x138] sm:$0xff] %v6681
        %6746 = vst [vmem:[%s487 + $0x140] sm:$0xff] %v6682
        %6747 = vst [vmem:[%s487 + $0x148] sm:$0xff] %v6683
        %6748 = vst [vmem:[%s487 + $0x150] sm:$0xff] %v6684
        %6749 = vst [vmem:[%s487 + $0x158] sm:$0xff] %v6685
        %6750 = vst [vmem:[%s487 + $0x160] sm:$0xff] %v6686
        %6751 = vst [vmem:[%s487 + $0x168] sm:$0xff] %v6687
        %6752 = vst [vmem:[%s487 + $0x170] sm:$0xff] %v6688
        %6753 = vst [vmem:[%s487 + $0x178] sm:$0xff] %v6689
        %6754 = vst [vmem:[%s487 + $0x180] sm:$0xff] %v6690
        %6755 = vst [vmem:[%s487 + $0x188] sm:$0xff] %v6691
        %6756 = vst [vmem:[%s487 + $0x190] sm:$0xff] %v6692
        %6757 = vst [vmem:[%s487 + $0x198] sm:$0xff] %v6693
        %6758 = vst [vmem:[%s487 + $0x1a0] sm:$0xff] %v6694
        %6759 = vst [vmem:[%s487 + $0x1a8] sm:$0xff] %v6695
        %6760 = vst [vmem:[%s487 + $0x1b0] sm:$0xff] %v6696
        %6761 = vst [vmem:[%s487 + $0x1b8] sm:$0xff] %v6697
        %6762 = vst [vmem:[%s487 + $0x1c0] sm:$0xff] %v6698
        %6763 = vst [vmem:[%s487 + $0x1c8] sm:$0xff] %v6699
        %6764 = vst [vmem:[%s487 + $0x1d0] sm:$0xff] %v6700
        %6765 = vst [vmem:[%s487 + $0x1d8] sm:$0xff] %v6701
        %6766 = vst [vmem:[%s487 + $0x1e0] sm:$0xff] %v6702
        %6767 = vst [vmem:[%s487 + $0x1e8] sm:$0xff] %v6703
        %6768 = vst [vmem:[%s487 + $0x1f0] sm:$0xff] %v6704
        %6769 = vst [vmem:[%s487 + $0x1f8] sm:$0xff] %v6705
        %s6770 = sand.u32 %s254, 1
        %s6771 = scalar_lea.sflag [#allocation5], %s6770
        %s6772 = sand.u32 %s254, 1
        %s6773 = smul.addr %s6772, 512
        %s6774 = scalar_lea.vmem [#allocation17], %s6773
        // Predicated region
        $region93: #{tpu_custom_call.1} parent=59 // pred_check
          %p6775 = pneg %p264
        $region94: #{tpu_custom_call.1} parent=59 // pred_check_branch
          %6777 = sbr.rel (%p6775) target = $region96
        $region95: #{tpu_custom_call.1} parent=59 // pred_region
          %6779 = vsyncadd %s6771, 0
          %s6780 = smul.addr %s31, 128
          %s6781 = smul.addr %s6780, 4
          %s6782 = scalar_lea.hbm %s10, %s6781
          %s6783 = sshll.u32 %s6774, 4
          %s6784 = int_to_ptr.vmem [resolvable:$true] %s6783
          %s6785 = sshll.u32 %s6782, 4
          %s6786 = int_to_ptr.hbm [resolvable:$true] %s6785
          %6791 = dma.vmem_to_hbm [thread:$0]  %s6784, 8192, %s6786, %s6771, 256, 256, 16
        $region96: #{tpu_custom_call.1} parent=59 // pred_fallthru
          _
      $region60: #{tpu_custom_call.1} parent=5 // pred_fallthru
        _
      %p6792 = scmp.le.s32.totalorder 2, %s26
      // Predicated region
      $region97: #{tpu_custom_call.1} parent=5 // pred_check
        %p6793 = pneg %p6792
      $region98: #{tpu_custom_call.1} parent=5 // pred_check_branch
        %6795 = sbr.rel (%p6793) target = $region100
      $region99: #{tpu_custom_call.1} parent=5 // pred_region
        %s6796 = ssub.s32 %s26, 2
        // Predicated region
        $region101: #{tpu_custom_call.1} parent=99 // pred_check
          %p6797 = pneg %p270
        $region102: #{tpu_custom_call.1} parent=99 // pred_check_branch
          %6799 = sbr.rel (%p6797) target = $region104
        $region103: #{tpu_custom_call.1} parent=99 // pred_region
          %s6800 = sand.u32 %s255, 1
          %s6801 = scalar_lea.sflag [#allocation5], %s6800
          %s6802 = sand.u32 %s255, 1
          %s6803 = smul.addr %s6802, 512
          %s6804 = scalar_lea.vmem [#allocation17], %s6803
          %6806 = dma.done %s6801, 8192
        $region104: #{tpu_custom_call.1} parent=99 // pred_fallthru
          _
      $region100: #{tpu_custom_call.1} parent=5 // pred_fallthru
        _
    $region6: #{tpu_custom_call.1} parent=1 // loop_footer
      %s30 = sadd.s32 1, %s26
    $region7: #{tpu_custom_call.1} parent=1 // loop_footer_branch
      %25 = sbr.rel target = $region3
    $region8: #{tpu_custom_call.1} parent=1 // loop_exit
      _
    %6807 = vsyncpa [#allocation4], 1
    %s6808 = scalar_lea.sflag [#allocation4], 1
    %6809 = vsyncpa %s6808, 1
    %6810 = vsyncpa [#allocation7], 1
    %6811 = vsyncpa [#allocation10], 1
    %6812 = vsyncpa [#allocation13], 1
    %6813 = vsyncpa [#allocation16], 1
    %6814 = vsyncpa [#allocation5], 1
    %s6815 = scalar_lea.sflag [#allocation5], 1
    %6816 = vsyncpa %s6815, 1

</llo_original>
